<compile_context>
chip_gen: v7x
topology: tpu7x:2x2x1
jax: 0.10.0
libtpu: 0.0.40
codegen_flags: <defaults>
</compile_context>

<pallas_src>
import jax
import jax.numpy as jnp
from jax.experimental import pallas as pl
from jax.experimental.pallas import tpu as pltpu


DILATIONS = (1, 2, 4, 8, 16, 32)
CP = 64          # channel dim padded from 50 -> 64 (sublane aligned)
OUT_ROWS = 8     # output slab rows (0=sigma, 1=mu, 2=epsilon, 3..7 unused)

_COMPILER_PARAMS = pltpu.CompilerParams(
    dimension_semantics=("parallel",),       # B maps across TCs on v7x
    vmem_limit_bytes=32 * 1024 * 1024,
)


def _prelu(v, a):
    return jnp.where(v > 0, v, a * v)


def _dot(a, b):
    return jnp.dot(a, b, preferred_element_type=jnp.float32)


# ----------------------------------------------------------------------------
# Fused kernel: block0 -> 6 dilated blocks -> head, for one batch element.
# ----------------------------------------------------------------------------
def _fused_kernel(x_ref, w01_ref, b01_ref, w02_ref, b02_ref, w0d_ref, b0d_ref,
                  wd_ref, bd_ref, wh_ref, bh_ref, wm1_ref, bm1_ref,
                  wm2_ref, bm2_ref, p_ref, out_ref):
    T = x_ref.shape[-1]
    bf16 = jnp.bfloat16
    x = x_ref[...]                                       # (latent, T) f32

    # ---- Block 0: kernel-size-1 convs (plain channel matmuls) ----
    h1 = _prelu(_dot(w01_ref[...], x) + b01_ref[...], p_ref[0])
    h2 = _prelu(_dot(w02_ref[...], h1.astype(bf16)) + b02_ref[...], p_ref[1])
    res = _dot(w0d_ref[...], x) + b0d_ref[...]
    y = _prelu(h2 + res, p_ref[2])                       # (CP, T) f32

    # Lane-index iota (hoisted; reused by every causal mask).
    lane = jax.lax.broadcasted_iota(jnp.int32, (CP, T), 1)

    def causal_cat(v, d):
        # [shift(v, d) ; v] along channels -> single K=2*CP contraction.
        if d >= T:
            shifted = jnp.zeros_like(v)
        else:
            rolled = pltpu.roll(v, shift=d, axis=1)      # XLU rotation
            shifted = jnp.where(lane >= d, rolled, 0.0)  # zero first d lanes
        return jnp.concatenate([shifted.astype(bf16), v.astype(bf16)], axis=0)

    # ---- Dilated TemporalBlocks (chomp folded into causal taps) ----
    for i, d in enumerate(DILATIONS):
        a1 = p_ref[3 + 3 * i + 0]
        a2 = p_ref[3 + 3 * i + 1]
        ar = p_ref[3 + 3 * i + 2]
        h1 = _prelu(_dot(wd_ref[i, 0], causal_cat(y, d)) + bd_ref[i, 0], a1)
        h2 = _prelu(_dot(wd_ref[i, 1], causal_cat(h1, d)) + bd_ref[i, 1], a2)
        y = _prelu(h2 + y, ar)                           # identity residual

    # ---- Head: last_tcn (rows 0,1) + per-timestep MLP (row 2), one slab ----
    sm = _dot(wh_ref[...], y.astype(bf16)) + bh_ref[...]               # (8, T)
    hm = jnp.maximum(_dot(wm1_ref[...], x) + bm1_ref[...], 0.0)        # (32, T)
    eps = _dot(wm2_ref[...], hm.astype(bf16)) + bm2_ref[...]           # (8, T)
    out_ref[...] = (sm + eps).astype(out_ref.dtype)


# ----------------------------------------------------------------------------
# Forward wrapper
# ----------------------------------------------------------------------------
def csvnn_generator_forward(packed, x):
    """x: (B, latent_dim, total_len) -> (sigma, mu, epsilon), each (B, total_len-1)."""
    B, lat, total = x.shape
    L = total - 1
    # Keep the time axis lane-dense.  Any trailing pad / the final input lane can
    # never influence kept timesteps (causal TCN + pointwise MLP), so no masking
    # is needed; garbage lanes are sliced off below.
    if total % 128:
        Tp = ((total + 127) // 128) * 128
        x_in = jnp.pad(x, ((0, 0), (0, 0), (0, Tp - total)))
    else:
        Tp = total
        x_in = x

    mh = packed["wm1"].shape[0]

    out = pl.pallas_call(
        _fused_kernel,
        out_shape=jax.ShapeDtypeStruct((B, OUT_ROWS, Tp), jnp.float32),
        grid=(B,),
        in_specs=[
            pl.BlockSpec((None, lat, Tp), lambda b: (b, 0, 0)),
            pl.BlockSpec((CP, lat), lambda b: (0, 0)),
            pl.BlockSpec((CP, 1), lambda b: (0, 0)),
            pl.BlockSpec((CP, CP), lambda b: (0, 0)),
            pl.BlockSpec((CP, 1), lambda b: (0, 0)),
            pl.BlockSpec((CP, lat), lambda b: (0, 0)),
            pl.BlockSpec((CP, 1), lambda b: (0, 0)),
            pl.BlockSpec((len(DILATIONS), 2, CP, 2 * CP), lambda b: (0, 0, 0, 0)),
            pl.BlockSpec((len(DILATIONS), 2, CP, 1), lambda b: (0, 0, 0, 0)),
            pl.BlockSpec((OUT_ROWS, CP), lambda b: (0, 0)),
            pl.BlockSpec((OUT_ROWS, 1), lambda b: (0, 0)),
            pl.BlockSpec((mh, lat), lambda b: (0, 0)),
            pl.BlockSpec((mh, 1), lambda b: (0, 0)),
            pl.BlockSpec((OUT_ROWS, mh), lambda b: (0, 0)),
            pl.BlockSpec((OUT_ROWS, 1), lambda b: (0, 0)),
            pl.BlockSpec((3 * (1 + len(DILATIONS)),), lambda b: (0,),
                         memory_space=pltpu.MemorySpace.SMEM),
        ],
        out_specs=pl.BlockSpec((None, OUT_ROWS, Tp), lambda b: (b, 0, 0)),
        compiler_params=_COMPILER_PARAMS,
    )(x_in,
      packed["w01"], packed["b01"], packed["w02"], packed["b02"],
      packed["w0d"], packed["b0d"], packed["wd"], packed["bd"],
      packed["wh"], packed["bh"], packed["wm1"], packed["bm1"],
      packed["wm2"], packed["bm2"], packed["prelu"])

    sigma = out[:, 0, :L]
    mu = out[:, 1, :L]
    epsilon = out[:, 2, :L]
    return sigma, mu, epsilon


# ----------------------------------------------------------------------------
# Parameters (PyTorch-like layout) and kernel-operand packing.
# ----------------------------------------------------------------------------
def _uniform(key, shape, fan_in):
    bound = 1.0 / (fan_in ** 0.5)
    return jax.random.uniform(key, shape, jnp.float32, -bound, bound)


def init_params(key, latent_dim=3, hidden=50, mlp_hidden=32):
    keys = iter(jax.random.split(key, 64))
    nxt = lambda: next(keys)
    prelu_init = jnp.full((3,), 0.25, jnp.float32)       # PyTorch PReLU default

    block0 = {
        "w1": _uniform(nxt(), (hidden, latent_dim, 1), latent_dim),
        "b1": _uniform(nxt(), (hidden,), latent_dim),
        "w2": _uniform(nxt(), (hidden, hidden, 1), hidden),
        "b2": _uniform(nxt(), (hidden,), hidden),
        "wd": _uniform(nxt(), (hidden, latent_dim, 1), latent_dim),
        "bd": _uniform(nxt(), (hidden,), latent_dim),
        "prelu": prelu_init,
    }
    blocks = []
    for _ in DILATIONS:
        fan = hidden * 2
        blocks.append({
            "w1": _uniform(nxt(), (hidden, hidden, 2), fan),
            "b1": _uniform(nxt(), (hidden,), fan),
            "w2": _uniform(nxt(), (hidden, hidden, 2), fan),
            "b2": _uniform(nxt(), (hidden,), fan),
            "prelu": prelu_init,
        })
    head = {
        "wl": _uniform(nxt(), (2, hidden, 1), hidden),
        "bl": _uniform(nxt(), (2,), hidden),
        "wm1": _uniform(nxt(), (mlp_hidden, latent_dim), latent_dim),
        "bm1": _uniform(nxt(), (mlp_hidden,), latent_dim),
        "wm2": _uniform(nxt(), (1, mlp_hidden), mlp_hidden),
        "bm2": _uniform(nxt(), (1,), mlp_hidden),
    }
    return {"block0": block0, "blocks": blocks, "head": head}


def pack_params(params):
    """Pad channels to CP=64, pack the 2 conv taps into one (CP, 2*CP) matrix,
    cast matmul weights to bf16, and pre-place the head weights into the 8-row
    output slab layout."""
    bf16 = jnp.bfloat16
    b0 = params["block0"]
    hidden = b0["w1"].shape[0]
    # PReLU params are scalars (num_parameters=1 in the PyTorch module).
    assert b0["prelu"].shape == (3,)

    def pad_rows(w):
        return jnp.pad(w, ((0, CP - w.shape[0]),) + ((0, 0),) * (w.ndim - 1))

    def pad_sq(w):
        return jnp.pad(w, ((0, CP - w.shape[0]), (0, CP - w.shape[1])))

    def bias_col(b):
        return jnp.pad(b, (0, CP - b.shape[0]))[:, None].astype(jnp.float32)

    packed = {
        # Block 0 (k=1).  Latent-input matmuls stay f32 (tiny K=3).
        "w01": pad_rows(b0["w1"][:, :, 0]).astype(jnp.float32),
        "b01": bias_col(b0["b1"]),
        "w02": pad_sq(b0["w2"][:, :, 0]).astype(bf16),
        "b02": bias_col(b0["b2"]),
        "w0d": pad_rows(b0["wd"][:, :, 0]).astype(jnp.float32),
        "b0d": bias_col(b0["bd"]),
    }

    wd_list, bd_list, prelus = [b0["prelu"]], [], []
    wd_stack, bd_stack = [], []
    for blk in params["blocks"]:
        assert blk["prelu"].shape == (3,)
        wrow, brow = [], []
        for wk, bk in ((blk["w1"], blk["b1"]), (blk["w2"], blk["b2"])):
            prev = pad_sq(wk[:, :, 0])   # tap applied to x[t-d]
            cur = pad_sq(wk[:, :, 1])    # tap applied to x[t]
            wrow.append(jnp.concatenate([prev, cur], axis=1))   # (CP, 2*CP)
            brow.append(bias_col(bk))
        wd_stack.append(jnp.stack(wrow))
        bd_stack.append(jnp.stack(brow))
        wd_list.append(blk["prelu"])
    packed["wd"] = jnp.stack(wd_stack).astype(bf16)     # (6, 2, CP, 2*CP)
    packed["bd"] = jnp.stack(bd_stack)                   # (6, 2, CP, 1) f32

    hd = params["head"]
    mh = hd["wm1"].shape[0]
    packed["wh"] = (jnp.zeros((OUT_ROWS, CP), jnp.float32)
                    .at[:2, :hidden].set(hd["wl"][:, :, 0])).astype(bf16)
    packed["bh"] = jnp.zeros((OUT_ROWS, 1), jnp.float32).at[:2, 0].set(hd["bl"])
    packed["wm1"] = hd["wm1"].astype(jnp.float32)
    packed["bm1"] = hd["bm1"][:, None].astype(jnp.float32)
    packed["wm2"] = (jnp.zeros((OUT_ROWS, mh), jnp.float32)
                     .at[2, :].set(hd["wm2"][0])).astype(bf16)
    packed["bm2"] = jnp.zeros((OUT_ROWS, 1), jnp.float32).at[2, 0].set(hd["bm2"][0])
    packed["prelu"] = jnp.concatenate(wd_list).astype(jnp.float32)   # (21,)
    return packed


# ----------------------------------------------------------------------------
# Pure-JAX reference (mirrors the kernel's bf16-operand / f32-accumulate math).
# ----------------------------------------------------------------------------
def _ref_forward(params, x):
    bf16 = jnp.bfloat16
    tcn_in = x[:, :, :-1]

    def prelu(v, a):
        return jnp.where(v > 0, v, a * v)

    def fdot(w, v):
        return jnp.einsum("oi,bil->bol", w, v, preferred_element_type=jnp.float32)

    def bdot(w, v):
        return jnp.einsum("oi,bil->bol", w.astype(bf16), v.astype(bf16),
                          preferred_element_type=jnp.float32)

    b0 = params["block0"]
    p = b0["prelu"]
    h1 = prelu(fdot(b0["w1"][:, :, 0], tcn_in) + b0["b1"][None, :, None], p[0])
    h2 = prelu(bdot(b0["w2"][:, :, 0], h1) + b0["b2"][None, :, None], p[1])
    res = fdot(b0["wd"][:, :, 0], tcn_in) + b0["bd"][None, :, None]
    y = prelu(h2 + res, p[2])

    for d, blk in zip(DILATIONS, params["blocks"]):
        p = blk["prelu"]

        def causal(v, w, b, d=d):
            cur = bdot(w[:, :, 1], v)
            if d >= v.shape[-1]:
                prev = jnp.zeros_like(cur)
            else:
                vs = jnp.pad(v[:, :, :-d], ((0, 0), (0, 0), (d, 0)))
                prev = bdot(w[:, :, 0], vs)
            return cur + prev + b[None, :, None]

        h1 = prelu(causal(y, blk["w1"], blk["b1"]), p[0])
        h2 = prelu(causal(h1, blk["w2"], blk["b2"]), p[1])
        y = prelu(h2 + y, p[2])

    hd = params["head"]
    sm = bdot(hd["wl"][:, :, 0], y) + hd["bl"][None, :, None]
    hm = jnp.maximum(fdot(hd["wm1"], tcn_in) + hd["bm1"][None, :, None], 0.0)
    eps = bdot(hd["wm2"], hm) + hd["bm2"][None, :, None]
    return sm[:, 0], sm[:, 1], eps[:, 0]


if __name__ == "__main__":
    key = jax.random.PRNGKey(0)
    pkey, xkey = jax.random.split(key)

    B, latent_dim, total_len = 2, 3, 128    # seq_len = 127 outputs (module default)
    params = init_params(pkey, latent_dim=latent_dim)
    packed = pack_params(params)
    x = jax.random.normal(xkey, (B, latent_dim, total_len), dtype=jnp.float32)

    fwd = jax.jit(csvnn_generator_forward)
    sigma, mu, epsilon = jax.block_until_ready(fwd(packed, x))

    L = total_len - 1
    assert sigma.shape == (B, L)
    assert mu.shape == (B, L)
    assert epsilon.shape == (B, L)
    assert sigma.dtype == mu.dtype == epsilon.dtype == jnp.float32

    r_sigma, r_mu, r_eps = _ref_forward(params, x)
    for got, ref in ((sigma, r_sigma), (mu, r_mu), (epsilon, r_eps)):
        err = float(jnp.max(jnp.abs(got - ref)))
        assert jnp.allclose(got, ref, atol=2e-3, rtol=2e-3), err

    print("KERNEL_OK")
</pallas_src>

<mosaic_0001>
module attributes {stable_mosaic.version = 11 : i64} {
  func.func @_fused_kernel(%arg0: i32, %arg1: memref<1x3x128xf32, #tpu.memory_space<vmem>>, %arg2: memref<64x3xf32, #tpu.memory_space<vmem>>, %arg3: memref<64x1xf32, #tpu.memory_space<vmem>>, %arg4: memref<64x64xbf16, #tpu.memory_space<vmem>>, %arg5: memref<64x1xf32, #tpu.memory_space<vmem>>, %arg6: memref<64x3xf32, #tpu.memory_space<vmem>>, %arg7: memref<64x1xf32, #tpu.memory_space<vmem>>, %arg8: memref<6x2x64x128xbf16, #tpu.memory_space<vmem>>, %arg9: memref<6x2x64x1xf32, #tpu.memory_space<vmem>>, %arg10: memref<8x64xbf16, #tpu.memory_space<vmem>>, %arg11: memref<8x1xf32, #tpu.memory_space<vmem>>, %arg12: memref<32x3xf32, #tpu.memory_space<vmem>>, %arg13: memref<32x1xf32, #tpu.memory_space<vmem>>, %arg14: memref<8x32xbf16, #tpu.memory_space<vmem>>, %arg15: memref<8x1xf32, #tpu.memory_space<vmem>>, %arg16: memref<21xf32, #tpu.memory_space<smem>>, %arg17: memref<1x8x128xf32, #tpu.memory_space<vmem>>) attributes {dimension_semantics = [#tpu.dimension_semantics<parallel>], iteration_bounds = array<i64: 2>, scalar_prefetch = 0 : i64, scratch_operands = 0 : i64, tpu.core_type = #tpu.core_type<tc>, window_params = [{transform_indices = @transform_0, window_bounds = array<i64: 1, 3, 128>}, {pipeline_mode = #tpu.pipeline_mode<synchronous>, transform_indices = @transform_1, window_bounds = array<i64: 64, 3>}, {pipeline_mode = #tpu.pipeline_mode<synchronous>, transform_indices = @transform_2, window_bounds = array<i64: 64, 1>}, {pipeline_mode = #tpu.pipeline_mode<synchronous>, transform_indices = @transform_3, window_bounds = array<i64: 64, 64>}, {pipeline_mode = #tpu.pipeline_mode<synchronous>, transform_indices = @transform_4, window_bounds = array<i64: 64, 1>}, {pipeline_mode = #tpu.pipeline_mode<synchronous>, transform_indices = @transform_5, window_bounds = array<i64: 64, 3>}, {pipeline_mode = #tpu.pipeline_mode<synchronous>, transform_indices = @transform_6, window_bounds = array<i64: 64, 1>}, {pipeline_mode = #tpu.pipeline_mode<synchronous>, transform_indices = @transform_7, window_bounds = array<i64: 6, 2, 64, 128>}, {pipeline_mode = #tpu.pipeline_mode<synchronous>, transform_indices = @transform_8, window_bounds = array<i64: 6, 2, 64, 1>}, {pipeline_mode = #tpu.pipeline_mode<synchronous>, transform_indices = @transform_9, window_bounds = array<i64: 8, 64>}, {pipeline_mode = #tpu.pipeline_mode<synchronous>, transform_indices = @transform_10, window_bounds = array<i64: 8, 1>}, {pipeline_mode = #tpu.pipeline_mode<synchronous>, transform_indices = @transform_11, window_bounds = array<i64: 32, 3>}, {pipeline_mode = #tpu.pipeline_mode<synchronous>, transform_indices = @transform_12, window_bounds = array<i64: 32, 1>}, {pipeline_mode = #tpu.pipeline_mode<synchronous>, transform_indices = @transform_13, window_bounds = array<i64: 8, 32>}, {pipeline_mode = #tpu.pipeline_mode<synchronous>, transform_indices = @transform_14, window_bounds = array<i64: 8, 1>}, {transform_indices = @transform_15, window_bounds = array<i64: 21>}, {transform_indices = @transform_16, window_bounds = array<i64: 1, 8, 128>}]} {
    %c0 = arith.constant 0 : index
    %c0_0 = arith.constant 0 : index
    %c0_1 = arith.constant 0 : index
    %0 = vector.load %arg1[%c0, %c0_0, %c0_1] : memref<1x3x128xf32, #tpu.memory_space<vmem>>, vector<1x3x128xf32>
    %1 = vector.shape_cast %0 : vector<1x3x128xf32> to vector<3x128xf32>
    %c0_2 = arith.constant 0 : index
    %c0_3 = arith.constant 0 : index
    %2 = vector.load %arg2[%c0_2, %c0_3] : memref<64x3xf32, #tpu.memory_space<vmem>>, vector<64x3xf32>
    %cst = arith.constant dense<0.000000e+00> : vector<64x128xf32>
    %3 = tpu.matmul %2, %1, %cst {dimension_numbers = #tpu.dot_dimension_numbers<[1], [0], [0], [1], [0, 0, 1, 1], [], []>} : vector<64x3xf32>, vector<3x128xf32>, vector<64x128xf32> -> vector<64x128xf32>
    %c0_4 = arith.constant 0 : index
    %c0_5 = arith.constant 0 : index
    %4 = vector.load %arg3[%c0_4, %c0_5] : memref<64x1xf32, #tpu.memory_space<vmem>>, vector<64x1xf32>
    %5 = vector.broadcast %4 : vector<64x1xf32> to vector<64x128xf32>
    %6 = arith.addf %3, %5 : vector<64x128xf32>
    %c0_6 = arith.constant 0 : index
    %7 = memref.load %arg16[%c0_6] : memref<21xf32, #tpu.memory_space<smem>>
    %cst_7 = arith.constant 0.000000e+00 : f32
    %8 = vector.broadcast %cst_7 : f32 to vector<64x128xf32>
    %9 = arith.cmpf ogt, %6, %8 : vector<64x128xf32>
    %10 = vector.broadcast %7 : f32 to vector<64x128xf32>
    %11 = arith.mulf %10, %6 : vector<64x128xf32>
    %12 = arith.select %9, %6, %11 : vector<64x128xi1>, vector<64x128xf32>
    %c0_8 = arith.constant 0 : index
    %c0_9 = arith.constant 0 : index
    %13 = vector.load %arg4[%c0_8, %c0_9] : memref<64x64xbf16, #tpu.memory_space<vmem>>, vector<64x64xbf16>
    %14 = arith.truncf %12 : vector<64x128xf32> to vector<64x128xbf16>
    %cst_10 = arith.constant dense<0.000000e+00> : vector<64x128xf32>
    %15 = tpu.matmul %13, %14, %cst_10 {dimension_numbers = #tpu.dot_dimension_numbers<[1], [0], [0], [1], [0, 0, 1, 1], [], []>} : vector<64x64xbf16>, vector<64x128xbf16>, vector<64x128xf32> -> vector<64x128xf32>
    %c0_11 = arith.constant 0 : index
    %c0_12 = arith.constant 0 : index
    %16 = vector.load %arg5[%c0_11, %c0_12] : memref<64x1xf32, #tpu.memory_space<vmem>>, vector<64x1xf32>
    %17 = vector.broadcast %16 : vector<64x1xf32> to vector<64x128xf32>
    %18 = arith.addf %15, %17 : vector<64x128xf32>
    %c1 = arith.constant 1 : index
    %19 = memref.load %arg16[%c1] : memref<21xf32, #tpu.memory_space<smem>>
    %cst_13 = arith.constant 0.000000e+00 : f32
    %20 = vector.broadcast %cst_13 : f32 to vector<64x128xf32>
    %21 = arith.cmpf ogt, %18, %20 : vector<64x128xf32>
    %22 = vector.broadcast %19 : f32 to vector<64x128xf32>
    %23 = arith.mulf %22, %18 : vector<64x128xf32>
    %24 = arith.select %21, %18, %23 : vector<64x128xi1>, vector<64x128xf32>
    %c0_14 = arith.constant 0 : index
    %c0_15 = arith.constant 0 : index
    %25 = vector.load %arg6[%c0_14, %c0_15] : memref<64x3xf32, #tpu.memory_space<vmem>>, vector<64x3xf32>
    %cst_16 = arith.constant dense<0.000000e+00> : vector<64x128xf32>
    %26 = tpu.matmul %25, %1, %cst_16 {dimension_numbers = #tpu.dot_dimension_numbers<[1], [0], [0], [1], [0, 0, 1, 1], [], []>} : vector<64x3xf32>, vector<3x128xf32>, vector<64x128xf32> -> vector<64x128xf32>
    %c0_17 = arith.constant 0 : index
    %c0_18 = arith.constant 0 : index
    %27 = vector.load %arg7[%c0_17, %c0_18] : memref<64x1xf32, #tpu.memory_space<vmem>>, vector<64x1xf32>
    %28 = vector.broadcast %27 : vector<64x1xf32> to vector<64x128xf32>
    %29 = arith.addf %26, %28 : vector<64x128xf32>
    %30 = arith.addf %24, %29 : vector<64x128xf32>
    %c2 = arith.constant 2 : index
    %31 = memref.load %arg16[%c2] : memref<21xf32, #tpu.memory_space<smem>>
    %cst_19 = arith.constant 0.000000e+00 : f32
    %32 = vector.broadcast %cst_19 : f32 to vector<64x128xf32>
    %33 = arith.cmpf ogt, %30, %32 : vector<64x128xf32>
    %34 = vector.broadcast %31 : f32 to vector<64x128xf32>
    %35 = arith.mulf %34, %30 : vector<64x128xf32>
    %36 = arith.select %33, %30, %35 : vector<64x128xi1>, vector<64x128xf32>
    %37 = tpu.iota {dimensions = array<i32: 1>} : vector<64x128xi32>
    %c3 = arith.constant 3 : index
    %38 = memref.load %arg16[%c3] : memref<21xf32, #tpu.memory_space<smem>>
    %c4 = arith.constant 4 : index
    %39 = memref.load %arg16[%c4] : memref<21xf32, #tpu.memory_space<smem>>
    %c5 = arith.constant 5 : index
    %40 = memref.load %arg16[%c5] : memref<21xf32, #tpu.memory_space<smem>>
    %c0_20 = arith.constant 0 : index
    %c0_21 = arith.constant 0 : index
    %c0_22 = arith.constant 0 : index
    %c0_23 = arith.constant 0 : index
    %41 = vector.load %arg8[%c0_20, %c0_21, %c0_22, %c0_23] : memref<6x2x64x128xbf16, #tpu.memory_space<vmem>>, vector<1x1x64x128xbf16>
    %42 = vector.shape_cast %41 : vector<1x1x64x128xbf16> to vector<64x128xbf16>
    %c1_i32 = arith.constant 1 : i32
    %43 = tpu.dynamic_rotate %36 by %c1_i32 dim 1 : vector<64x128xf32>, i32 -> vector<64x128xf32>
    %c1_i32_24 = arith.constant 1 : i32
    %44 = vector.broadcast %c1_i32_24 : i32 to vector<64x128xi32>
    %45 = arith.cmpi sge, %37, %44 : vector<64x128xi32>
    %cst_25 = arith.constant 0.000000e+00 : f32
    %46 = vector.broadcast %cst_25 : f32 to vector<64x128xf32>
    %47 = arith.select %45, %43, %46 : vector<64x128xi1>, vector<64x128xf32>
    %48 = arith.truncf %47 : vector<64x128xf32> to vector<64x128xbf16>
    %49 = arith.truncf %36 : vector<64x128xf32> to vector<64x128xbf16>
    %50 = tpu.concatenate %48, %49 in 0 : vector<64x128xbf16>, vector<64x128xbf16> -> vector<128x128xbf16>
    %cst_26 = arith.constant dense<0.000000e+00> : vector<64x128xf32>
    %51 = tpu.matmul %42, %50, %cst_26 {dimension_numbers = #tpu.dot_dimension_numbers<[1], [0], [0], [1], [0, 0, 1, 1], [], []>} : vector<64x128xbf16>, vector<128x128xbf16>, vector<64x128xf32> -> vector<64x128xf32>
    %c0_27 = arith.constant 0 : index
    %c0_28 = arith.constant 0 : index
    %c0_29 = arith.constant 0 : index
    %c0_30 = arith.constant 0 : index
    %52 = vector.load %arg9[%c0_27, %c0_28, %c0_29, %c0_30] : memref<6x2x64x1xf32, #tpu.memory_space<vmem>>, vector<1x1x64x1xf32>
    %53 = vector.shape_cast %52 : vector<1x1x64x1xf32> to vector<64x1xf32>
    %54 = vector.broadcast %53 : vector<64x1xf32> to vector<64x128xf32>
    %55 = arith.addf %51, %54 : vector<64x128xf32>
    %cst_31 = arith.constant 0.000000e+00 : f32
    %56 = vector.broadcast %cst_31 : f32 to vector<64x128xf32>
    %57 = arith.cmpf ogt, %55, %56 : vector<64x128xf32>
    %58 = vector.broadcast %38 : f32 to vector<64x128xf32>
    %59 = arith.mulf %58, %55 : vector<64x128xf32>
    %60 = arith.select %57, %55, %59 : vector<64x128xi1>, vector<64x128xf32>
    %c0_32 = arith.constant 0 : index
    %c1_33 = arith.constant 1 : index
    %c0_34 = arith.constant 0 : index
    %c0_35 = arith.constant 0 : index
    %61 = vector.load %arg8[%c0_32, %c1_33, %c0_34, %c0_35] : memref<6x2x64x128xbf16, #tpu.memory_space<vmem>>, vector<1x1x64x128xbf16>
    %62 = vector.shape_cast %61 : vector<1x1x64x128xbf16> to vector<64x128xbf16>
    %c1_i32_36 = arith.constant 1 : i32
    %63 = tpu.dynamic_rotate %60 by %c1_i32_36 dim 1 : vector<64x128xf32>, i32 -> vector<64x128xf32>
    %c1_i32_37 = arith.constant 1 : i32
    %64 = vector.broadcast %c1_i32_37 : i32 to vector<64x128xi32>
    %65 = arith.cmpi sge, %37, %64 : vector<64x128xi32>
    %cst_38 = arith.constant 0.000000e+00 : f32
    %66 = vector.broadcast %cst_38 : f32 to vector<64x128xf32>
    %67 = arith.select %65, %63, %66 : vector<64x128xi1>, vector<64x128xf32>
    %68 = arith.truncf %67 : vector<64x128xf32> to vector<64x128xbf16>
    %69 = arith.truncf %60 : vector<64x128xf32> to vector<64x128xbf16>
    %70 = tpu.concatenate %68, %69 in 0 : vector<64x128xbf16>, vector<64x128xbf16> -> vector<128x128xbf16>
    %cst_39 = arith.constant dense<0.000000e+00> : vector<64x128xf32>
    %71 = tpu.matmul %62, %70, %cst_39 {dimension_numbers = #tpu.dot_dimension_numbers<[1], [0], [0], [1], [0, 0, 1, 1], [], []>} : vector<64x128xbf16>, vector<128x128xbf16>, vector<64x128xf32> -> vector<64x128xf32>
    %c0_40 = arith.constant 0 : index
    %c1_41 = arith.constant 1 : index
    %c0_42 = arith.constant 0 : index
    %c0_43 = arith.constant 0 : index
    %72 = vector.load %arg9[%c0_40, %c1_41, %c0_42, %c0_43] : memref<6x2x64x1xf32, #tpu.memory_space<vmem>>, vector<1x1x64x1xf32>
    %73 = vector.shape_cast %72 : vector<1x1x64x1xf32> to vector<64x1xf32>
    %74 = vector.broadcast %73 : vector<64x1xf32> to vector<64x128xf32>
    %75 = arith.addf %71, %74 : vector<64x128xf32>
    %cst_44 = arith.constant 0.000000e+00 : f32
    %76 = vector.broadcast %cst_44 : f32 to vector<64x128xf32>
    %77 = arith.cmpf ogt, %75, %76 : vector<64x128xf32>
    %78 = vector.broadcast %39 : f32 to vector<64x128xf32>
    %79 = arith.mulf %78, %75 : vector<64x128xf32>
    %80 = arith.select %77, %75, %79 : vector<64x128xi1>, vector<64x128xf32>
    %81 = arith.addf %80, %36 : vector<64x128xf32>
    %cst_45 = arith.constant 0.000000e+00 : f32
    %82 = vector.broadcast %cst_45 : f32 to vector<64x128xf32>
    %83 = arith.cmpf ogt, %81, %82 : vector<64x128xf32>
    %84 = vector.broadcast %40 : f32 to vector<64x128xf32>
    %85 = arith.mulf %84, %81 : vector<64x128xf32>
    %86 = arith.select %83, %81, %85 : vector<64x128xi1>, vector<64x128xf32>
    %c6 = arith.constant 6 : index
    %87 = memref.load %arg16[%c6] : memref<21xf32, #tpu.memory_space<smem>>
    %c7 = arith.constant 7 : index
    %88 = memref.load %arg16[%c7] : memref<21xf32, #tpu.memory_space<smem>>
    %c8 = arith.constant 8 : index
    %89 = memref.load %arg16[%c8] : memref<21xf32, #tpu.memory_space<smem>>
    %c1_46 = arith.constant 1 : index
    %c0_47 = arith.constant 0 : index
    %c0_48 = arith.constant 0 : index
    %c0_49 = arith.constant 0 : index
    %90 = vector.load %arg8[%c1_46, %c0_47, %c0_48, %c0_49] : memref<6x2x64x128xbf16, #tpu.memory_space<vmem>>, vector<1x1x64x128xbf16>
    %91 = vector.shape_cast %90 : vector<1x1x64x128xbf16> to vector<64x128xbf16>
    %c2_i32 = arith.constant 2 : i32
    %92 = tpu.dynamic_rotate %86 by %c2_i32 dim 1 : vector<64x128xf32>, i32 -> vector<64x128xf32>
    %c2_i32_50 = arith.constant 2 : i32
    %93 = vector.broadcast %c2_i32_50 : i32 to vector<64x128xi32>
    %94 = arith.cmpi sge, %37, %93 : vector<64x128xi32>
    %cst_51 = arith.constant 0.000000e+00 : f32
    %95 = vector.broadcast %cst_51 : f32 to vector<64x128xf32>
    %96 = arith.select %94, %92, %95 : vector<64x128xi1>, vector<64x128xf32>
    %97 = arith.truncf %96 : vector<64x128xf32> to vector<64x128xbf16>
    %98 = arith.truncf %86 : vector<64x128xf32> to vector<64x128xbf16>
    %99 = tpu.concatenate %97, %98 in 0 : vector<64x128xbf16>, vector<64x128xbf16> -> vector<128x128xbf16>
    %cst_52 = arith.constant dense<0.000000e+00> : vector<64x128xf32>
    %100 = tpu.matmul %91, %99, %cst_52 {dimension_numbers = #tpu.dot_dimension_numbers<[1], [0], [0], [1], [0, 0, 1, 1], [], []>} : vector<64x128xbf16>, vector<128x128xbf16>, vector<64x128xf32> -> vector<64x128xf32>
    %c1_53 = arith.constant 1 : index
    %c0_54 = arith.constant 0 : index
    %c0_55 = arith.constant 0 : index
    %c0_56 = arith.constant 0 : index
    %101 = vector.load %arg9[%c1_53, %c0_54, %c0_55, %c0_56] : memref<6x2x64x1xf32, #tpu.memory_space<vmem>>, vector<1x1x64x1xf32>
    %102 = vector.shape_cast %101 : vector<1x1x64x1xf32> to vector<64x1xf32>
    %103 = vector.broadcast %102 : vector<64x1xf32> to vector<64x128xf32>
    %104 = arith.addf %100, %103 : vector<64x128xf32>
    %cst_57 = arith.constant 0.000000e+00 : f32
    %105 = vector.broadcast %cst_57 : f32 to vector<64x128xf32>
    %106 = arith.cmpf ogt, %104, %105 : vector<64x128xf32>
    %107 = vector.broadcast %87 : f32 to vector<64x128xf32>
    %108 = arith.mulf %107, %104 : vector<64x128xf32>
    %109 = arith.select %106, %104, %108 : vector<64x128xi1>, vector<64x128xf32>
    %c1_58 = arith.constant 1 : index
    %c1_59 = arith.constant 1 : index
    %c0_60 = arith.constant 0 : index
    %c0_61 = arith.constant 0 : index
    %110 = vector.load %arg8[%c1_58, %c1_59, %c0_60, %c0_61] : memref<6x2x64x128xbf16, #tpu.memory_space<vmem>>, vector<1x1x64x128xbf16>
    %111 = vector.shape_cast %110 : vector<1x1x64x128xbf16> to vector<64x128xbf16>
    %c2_i32_62 = arith.constant 2 : i32
    %112 = tpu.dynamic_rotate %109 by %c2_i32_62 dim 1 : vector<64x128xf32>, i32 -> vector<64x128xf32>
    %c2_i32_63 = arith.constant 2 : i32
    %113 = vector.broadcast %c2_i32_63 : i32 to vector<64x128xi32>
    %114 = arith.cmpi sge, %37, %113 : vector<64x128xi32>
    %cst_64 = arith.constant 0.000000e+00 : f32
    %115 = vector.broadcast %cst_64 : f32 to vector<64x128xf32>
    %116 = arith.select %114, %112, %115 : vector<64x128xi1>, vector<64x128xf32>
    %117 = arith.truncf %116 : vector<64x128xf32> to vector<64x128xbf16>
    %118 = arith.truncf %109 : vector<64x128xf32> to vector<64x128xbf16>
    %119 = tpu.concatenate %117, %118 in 0 : vector<64x128xbf16>, vector<64x128xbf16> -> vector<128x128xbf16>
    %cst_65 = arith.constant dense<0.000000e+00> : vector<64x128xf32>
    %120 = tpu.matmul %111, %119, %cst_65 {dimension_numbers = #tpu.dot_dimension_numbers<[1], [0], [0], [1], [0, 0, 1, 1], [], []>} : vector<64x128xbf16>, vector<128x128xbf16>, vector<64x128xf32> -> vector<64x128xf32>
    %c1_66 = arith.constant 1 : index
    %c1_67 = arith.constant 1 : index
    %c0_68 = arith.constant 0 : index
    %c0_69 = arith.constant 0 : index
    %121 = vector.load %arg9[%c1_66, %c1_67, %c0_68, %c0_69] : memref<6x2x64x1xf32, #tpu.memory_space<vmem>>, vector<1x1x64x1xf32>
    %122 = vector.shape_cast %121 : vector<1x1x64x1xf32> to vector<64x1xf32>
    %123 = vector.broadcast %122 : vector<64x1xf32> to vector<64x128xf32>
    %124 = arith.addf %120, %123 : vector<64x128xf32>
    %cst_70 = arith.constant 0.000000e+00 : f32
    %125 = vector.broadcast %cst_70 : f32 to vector<64x128xf32>
    %126 = arith.cmpf ogt, %124, %125 : vector<64x128xf32>
    %127 = vector.broadcast %88 : f32 to vector<64x128xf32>
    %128 = arith.mulf %127, %124 : vector<64x128xf32>
    %129 = arith.select %126, %124, %128 : vector<64x128xi1>, vector<64x128xf32>
    %130 = arith.addf %129, %86 : vector<64x128xf32>
    %cst_71 = arith.constant 0.000000e+00 : f32
    %131 = vector.broadcast %cst_71 : f32 to vector<64x128xf32>
    %132 = arith.cmpf ogt, %130, %131 : vector<64x128xf32>
    %133 = vector.broadcast %89 : f32 to vector<64x128xf32>
    %134 = arith.mulf %133, %130 : vector<64x128xf32>
    %135 = arith.select %132, %130, %134 : vector<64x128xi1>, vector<64x128xf32>
    %c9 = arith.constant 9 : index
    %136 = memref.load %arg16[%c9] : memref<21xf32, #tpu.memory_space<smem>>
    %c10 = arith.constant 10 : index
    %137 = memref.load %arg16[%c10] : memref<21xf32, #tpu.memory_space<smem>>
    %c11 = arith.constant 11 : index
    %138 = memref.load %arg16[%c11] : memref<21xf32, #tpu.memory_space<smem>>
    %c2_72 = arith.constant 2 : index
    %c0_73 = arith.constant 0 : index
    %c0_74 = arith.constant 0 : index
    %c0_75 = arith.constant 0 : index
    %139 = vector.load %arg8[%c2_72, %c0_73, %c0_74, %c0_75] : memref<6x2x64x128xbf16, #tpu.memory_space<vmem>>, vector<1x1x64x128xbf16>
    %140 = vector.shape_cast %139 : vector<1x1x64x128xbf16> to vector<64x128xbf16>
    %c4_i32 = arith.constant 4 : i32
    %141 = tpu.dynamic_rotate %135 by %c4_i32 dim 1 : vector<64x128xf32>, i32 -> vector<64x128xf32>
    %c4_i32_76 = arith.constant 4 : i32
    %142 = vector.broadcast %c4_i32_76 : i32 to vector<64x128xi32>
    %143 = arith.cmpi sge, %37, %142 : vector<64x128xi32>
    %cst_77 = arith.constant 0.000000e+00 : f32
    %144 = vector.broadcast %cst_77 : f32 to vector<64x128xf32>
    %145 = arith.select %143, %141, %144 : vector<64x128xi1>, vector<64x128xf32>
    %146 = arith.truncf %145 : vector<64x128xf32> to vector<64x128xbf16>
    %147 = arith.truncf %135 : vector<64x128xf32> to vector<64x128xbf16>
    %148 = tpu.concatenate %146, %147 in 0 : vector<64x128xbf16>, vector<64x128xbf16> -> vector<128x128xbf16>
    %cst_78 = arith.constant dense<0.000000e+00> : vector<64x128xf32>
    %149 = tpu.matmul %140, %148, %cst_78 {dimension_numbers = #tpu.dot_dimension_numbers<[1], [0], [0], [1], [0, 0, 1, 1], [], []>} : vector<64x128xbf16>, vector<128x128xbf16>, vector<64x128xf32> -> vector<64x128xf32>
    %c2_79 = arith.constant 2 : index
    %c0_80 = arith.constant 0 : index
    %c0_81 = arith.constant 0 : index
    %c0_82 = arith.constant 0 : index
    %150 = vector.load %arg9[%c2_79, %c0_80, %c0_81, %c0_82] : memref<6x2x64x1xf32, #tpu.memory_space<vmem>>, vector<1x1x64x1xf32>
    %151 = vector.shape_cast %150 : vector<1x1x64x1xf32> to vector<64x1xf32>
    %152 = vector.broadcast %151 : vector<64x1xf32> to vector<64x128xf32>
    %153 = arith.addf %149, %152 : vector<64x128xf32>
    %cst_83 = arith.constant 0.000000e+00 : f32
    %154 = vector.broadcast %cst_83 : f32 to vector<64x128xf32>
    %155 = arith.cmpf ogt, %153, %154 : vector<64x128xf32>
    %156 = vector.broadcast %136 : f32 to vector<64x128xf32>
    %157 = arith.mulf %156, %153 : vector<64x128xf32>
    %158 = arith.select %155, %153, %157 : vector<64x128xi1>, vector<64x128xf32>
    %c2_84 = arith.constant 2 : index
    %c1_85 = arith.constant 1 : index
    %c0_86 = arith.constant 0 : index
    %c0_87 = arith.constant 0 : index
    %159 = vector.load %arg8[%c2_84, %c1_85, %c0_86, %c0_87] : memref<6x2x64x128xbf16, #tpu.memory_space<vmem>>, vector<1x1x64x128xbf16>
    %160 = vector.shape_cast %159 : vector<1x1x64x128xbf16> to vector<64x128xbf16>
    %c4_i32_88 = arith.constant 4 : i32
    %161 = tpu.dynamic_rotate %158 by %c4_i32_88 dim 1 : vector<64x128xf32>, i32 -> vector<64x128xf32>
    %c4_i32_89 = arith.constant 4 : i32
    %162 = vector.broadcast %c4_i32_89 : i32 to vector<64x128xi32>
    %163 = arith.cmpi sge, %37, %162 : vector<64x128xi32>
    %cst_90 = arith.constant 0.000000e+00 : f32
    %164 = vector.broadcast %cst_90 : f32 to vector<64x128xf32>
    %165 = arith.select %163, %161, %164 : vector<64x128xi1>, vector<64x128xf32>
    %166 = arith.truncf %165 : vector<64x128xf32> to vector<64x128xbf16>
    %167 = arith.truncf %158 : vector<64x128xf32> to vector<64x128xbf16>
    %168 = tpu.concatenate %166, %167 in 0 : vector<64x128xbf16>, vector<64x128xbf16> -> vector<128x128xbf16>
    %cst_91 = arith.constant dense<0.000000e+00> : vector<64x128xf32>
    %169 = tpu.matmul %160, %168, %cst_91 {dimension_numbers = #tpu.dot_dimension_numbers<[1], [0], [0], [1], [0, 0, 1, 1], [], []>} : vector<64x128xbf16>, vector<128x128xbf16>, vector<64x128xf32> -> vector<64x128xf32>
    %c2_92 = arith.constant 2 : index
    %c1_93 = arith.constant 1 : index
    %c0_94 = arith.constant 0 : index
    %c0_95 = arith.constant 0 : index
    %170 = vector.load %arg9[%c2_92, %c1_93, %c0_94, %c0_95] : memref<6x2x64x1xf32, #tpu.memory_space<vmem>>, vector<1x1x64x1xf32>
    %171 = vector.shape_cast %170 : vector<1x1x64x1xf32> to vector<64x1xf32>
    %172 = vector.broadcast %171 : vector<64x1xf32> to vector<64x128xf32>
    %173 = arith.addf %169, %172 : vector<64x128xf32>
    %cst_96 = arith.constant 0.000000e+00 : f32
    %174 = vector.broadcast %cst_96 : f32 to vector<64x128xf32>
    %175 = arith.cmpf ogt, %173, %174 : vector<64x128xf32>
    %176 = vector.broadcast %137 : f32 to vector<64x128xf32>
    %177 = arith.mulf %176, %173 : vector<64x128xf32>
    %178 = arith.select %175, %173, %177 : vector<64x128xi1>, vector<64x128xf32>
    %179 = arith.addf %178, %135 : vector<64x128xf32>
    %cst_97 = arith.constant 0.000000e+00 : f32
    %180 = vector.broadcast %cst_97 : f32 to vector<64x128xf32>
    %181 = arith.cmpf ogt, %179, %180 : vector<64x128xf32>
    %182 = vector.broadcast %138 : f32 to vector<64x128xf32>
    %183 = arith.mulf %182, %179 : vector<64x128xf32>
    %184 = arith.select %181, %179, %183 : vector<64x128xi1>, vector<64x128xf32>
    %c12 = arith.constant 12 : index
    %185 = memref.load %arg16[%c12] : memref<21xf32, #tpu.memory_space<smem>>
    %c13 = arith.constant 13 : index
    %186 = memref.load %arg16[%c13] : memref<21xf32, #tpu.memory_space<smem>>
    %c14 = arith.constant 14 : index
    %187 = memref.load %arg16[%c14] : memref<21xf32, #tpu.memory_space<smem>>
    %c3_98 = arith.constant 3 : index
    %c0_99 = arith.constant 0 : index
    %c0_100 = arith.constant 0 : index
    %c0_101 = arith.constant 0 : index
    %188 = vector.load %arg8[%c3_98, %c0_99, %c0_100, %c0_101] : memref<6x2x64x128xbf16, #tpu.memory_space<vmem>>, vector<1x1x64x128xbf16>
    %189 = vector.shape_cast %188 : vector<1x1x64x128xbf16> to vector<64x128xbf16>
    %c8_i32 = arith.constant 8 : i32
    %190 = tpu.dynamic_rotate %184 by %c8_i32 dim 1 : vector<64x128xf32>, i32 -> vector<64x128xf32>
    %c8_i32_102 = arith.constant 8 : i32
    %191 = vector.broadcast %c8_i32_102 : i32 to vector<64x128xi32>
    %192 = arith.cmpi sge, %37, %191 : vector<64x128xi32>
    %cst_103 = arith.constant 0.000000e+00 : f32
    %193 = vector.broadcast %cst_103 : f32 to vector<64x128xf32>
    %194 = arith.select %192, %190, %193 : vector<64x128xi1>, vector<64x128xf32>
    %195 = arith.truncf %194 : vector<64x128xf32> to vector<64x128xbf16>
    %196 = arith.truncf %184 : vector<64x128xf32> to vector<64x128xbf16>
    %197 = tpu.concatenate %195, %196 in 0 : vector<64x128xbf16>, vector<64x128xbf16> -> vector<128x128xbf16>
    %cst_104 = arith.constant dense<0.000000e+00> : vector<64x128xf32>
    %198 = tpu.matmul %189, %197, %cst_104 {dimension_numbers = #tpu.dot_dimension_numbers<[1], [0], [0], [1], [0, 0, 1, 1], [], []>} : vector<64x128xbf16>, vector<128x128xbf16>, vector<64x128xf32> -> vector<64x128xf32>
    %c3_105 = arith.constant 3 : index
    %c0_106 = arith.constant 0 : index
    %c0_107 = arith.constant 0 : index
    %c0_108 = arith.constant 0 : index
    %199 = vector.load %arg9[%c3_105, %c0_106, %c0_107, %c0_108] : memref<6x2x64x1xf32, #tpu.memory_space<vmem>>, vector<1x1x64x1xf32>
    %200 = vector.shape_cast %199 : vector<1x1x64x1xf32> to vector<64x1xf32>
    %201 = vector.broadcast %200 : vector<64x1xf32> to vector<64x128xf32>
    %202 = arith.addf %198, %201 : vector<64x128xf32>
    %cst_109 = arith.constant 0.000000e+00 : f32
    %203 = vector.broadcast %cst_109 : f32 to vector<64x128xf32>
    %204 = arith.cmpf ogt, %202, %203 : vector<64x128xf32>
    %205 = vector.broadcast %185 : f32 to vector<64x128xf32>
    %206 = arith.mulf %205, %202 : vector<64x128xf32>
    %207 = arith.select %204, %202, %206 : vector<64x128xi1>, vector<64x128xf32>
    %c3_110 = arith.constant 3 : index
    %c1_111 = arith.constant 1 : index
    %c0_112 = arith.constant 0 : index
    %c0_113 = arith.constant 0 : index
    %208 = vector.load %arg8[%c3_110, %c1_111, %c0_112, %c0_113] : memref<6x2x64x128xbf16, #tpu.memory_space<vmem>>, vector<1x1x64x128xbf16>
    %209 = vector.shape_cast %208 : vector<1x1x64x128xbf16> to vector<64x128xbf16>
    %c8_i32_114 = arith.constant 8 : i32
    %210 = tpu.dynamic_rotate %207 by %c8_i32_114 dim 1 : vector<64x128xf32>, i32 -> vector<64x128xf32>
    %c8_i32_115 = arith.constant 8 : i32
    %211 = vector.broadcast %c8_i32_115 : i32 to vector<64x128xi32>
    %212 = arith.cmpi sge, %37, %211 : vector<64x128xi32>
    %cst_116 = arith.constant 0.000000e+00 : f32
    %213 = vector.broadcast %cst_116 : f32 to vector<64x128xf32>
    %214 = arith.select %212, %210, %213 : vector<64x128xi1>, vector<64x128xf32>
    %215 = arith.truncf %214 : vector<64x128xf32> to vector<64x128xbf16>
    %216 = arith.truncf %207 : vector<64x128xf32> to vector<64x128xbf16>
    %217 = tpu.concatenate %215, %216 in 0 : vector<64x128xbf16>, vector<64x128xbf16> -> vector<128x128xbf16>
    %cst_117 = arith.constant dense<0.000000e+00> : vector<64x128xf32>
    %218 = tpu.matmul %209, %217, %cst_117 {dimension_numbers = #tpu.dot_dimension_numbers<[1], [0], [0], [1], [0, 0, 1, 1], [], []>} : vector<64x128xbf16>, vector<128x128xbf16>, vector<64x128xf32> -> vector<64x128xf32>
    %c3_118 = arith.constant 3 : index
    %c1_119 = arith.constant 1 : index
    %c0_120 = arith.constant 0 : index
    %c0_121 = arith.constant 0 : index
    %219 = vector.load %arg9[%c3_118, %c1_119, %c0_120, %c0_121] : memref<6x2x64x1xf32, #tpu.memory_space<vmem>>, vector<1x1x64x1xf32>
    %220 = vector.shape_cast %219 : vector<1x1x64x1xf32> to vector<64x1xf32>
    %221 = vector.broadcast %220 : vector<64x1xf32> to vector<64x128xf32>
    %222 = arith.addf %218, %221 : vector<64x128xf32>
    %cst_122 = arith.constant 0.000000e+00 : f32
    %223 = vector.broadcast %cst_122 : f32 to vector<64x128xf32>
    %224 = arith.cmpf ogt, %222, %223 : vector<64x128xf32>
    %225 = vector.broadcast %186 : f32 to vector<64x128xf32>
    %226 = arith.mulf %225, %222 : vector<64x128xf32>
    %227 = arith.select %224, %222, %226 : vector<64x128xi1>, vector<64x128xf32>
    %228 = arith.addf %227, %184 : vector<64x128xf32>
    %cst_123 = arith.constant 0.000000e+00 : f32
    %229 = vector.broadcast %cst_123 : f32 to vector<64x128xf32>
    %230 = arith.cmpf ogt, %228, %229 : vector<64x128xf32>
    %231 = vector.broadcast %187 : f32 to vector<64x128xf32>
    %232 = arith.mulf %231, %228 : vector<64x128xf32>
    %233 = arith.select %230, %228, %232 : vector<64x128xi1>, vector<64x128xf32>
    %c15 = arith.constant 15 : index
    %234 = memref.load %arg16[%c15] : memref<21xf32, #tpu.memory_space<smem>>
    %c16 = arith.constant 16 : index
    %235 = memref.load %arg16[%c16] : memref<21xf32, #tpu.memory_space<smem>>
    %c17 = arith.constant 17 : index
    %236 = memref.load %arg16[%c17] : memref<21xf32, #tpu.memory_space<smem>>
    %c4_124 = arith.constant 4 : index
    %c0_125 = arith.constant 0 : index
    %c0_126 = arith.constant 0 : index
    %c0_127 = arith.constant 0 : index
    %237 = vector.load %arg8[%c4_124, %c0_125, %c0_126, %c0_127] : memref<6x2x64x128xbf16, #tpu.memory_space<vmem>>, vector<1x1x64x128xbf16>
    %238 = vector.shape_cast %237 : vector<1x1x64x128xbf16> to vector<64x128xbf16>
    %c16_i32 = arith.constant 16 : i32
    %239 = tpu.dynamic_rotate %233 by %c16_i32 dim 1 : vector<64x128xf32>, i32 -> vector<64x128xf32>
    %c16_i32_128 = arith.constant 16 : i32
    %240 = vector.broadcast %c16_i32_128 : i32 to vector<64x128xi32>
    %241 = arith.cmpi sge, %37, %240 : vector<64x128xi32>
    %cst_129 = arith.constant 0.000000e+00 : f32
    %242 = vector.broadcast %cst_129 : f32 to vector<64x128xf32>
    %243 = arith.select %241, %239, %242 : vector<64x128xi1>, vector<64x128xf32>
    %244 = arith.truncf %243 : vector<64x128xf32> to vector<64x128xbf16>
    %245 = arith.truncf %233 : vector<64x128xf32> to vector<64x128xbf16>
    %246 = tpu.concatenate %244, %245 in 0 : vector<64x128xbf16>, vector<64x128xbf16> -> vector<128x128xbf16>
    %cst_130 = arith.constant dense<0.000000e+00> : vector<64x128xf32>
    %247 = tpu.matmul %238, %246, %cst_130 {dimension_numbers = #tpu.dot_dimension_numbers<[1], [0], [0], [1], [0, 0, 1, 1], [], []>} : vector<64x128xbf16>, vector<128x128xbf16>, vector<64x128xf32> -> vector<64x128xf32>
    %c4_131 = arith.constant 4 : index
    %c0_132 = arith.constant 0 : index
    %c0_133 = arith.constant 0 : index
    %c0_134 = arith.constant 0 : index
    %248 = vector.load %arg9[%c4_131, %c0_132, %c0_133, %c0_134] : memref<6x2x64x1xf32, #tpu.memory_space<vmem>>, vector<1x1x64x1xf32>
    %249 = vector.shape_cast %248 : vector<1x1x64x1xf32> to vector<64x1xf32>
    %250 = vector.broadcast %249 : vector<64x1xf32> to vector<64x128xf32>
    %251 = arith.addf %247, %250 : vector<64x128xf32>
    %cst_135 = arith.constant 0.000000e+00 : f32
    %252 = vector.broadcast %cst_135 : f32 to vector<64x128xf32>
    %253 = arith.cmpf ogt, %251, %252 : vector<64x128xf32>
    %254 = vector.broadcast %234 : f32 to vector<64x128xf32>
    %255 = arith.mulf %254, %251 : vector<64x128xf32>
    %256 = arith.select %253, %251, %255 : vector<64x128xi1>, vector<64x128xf32>
    %c4_136 = arith.constant 4 : index
    %c1_137 = arith.constant 1 : index
    %c0_138 = arith.constant 0 : index
    %c0_139 = arith.constant 0 : index
    %257 = vector.load %arg8[%c4_136, %c1_137, %c0_138, %c0_139] : memref<6x2x64x128xbf16, #tpu.memory_space<vmem>>, vector<1x1x64x128xbf16>
    %258 = vector.shape_cast %257 : vector<1x1x64x128xbf16> to vector<64x128xbf16>
    %c16_i32_140 = arith.constant 16 : i32
    %259 = tpu.dynamic_rotate %256 by %c16_i32_140 dim 1 : vector<64x128xf32>, i32 -> vector<64x128xf32>
    %c16_i32_141 = arith.constant 16 : i32
    %260 = vector.broadcast %c16_i32_141 : i32 to vector<64x128xi32>
    %261 = arith.cmpi sge, %37, %260 : vector<64x128xi32>
    %cst_142 = arith.constant 0.000000e+00 : f32
    %262 = vector.broadcast %cst_142 : f32 to vector<64x128xf32>
    %263 = arith.select %261, %259, %262 : vector<64x128xi1>, vector<64x128xf32>
    %264 = arith.truncf %263 : vector<64x128xf32> to vector<64x128xbf16>
    %265 = arith.truncf %256 : vector<64x128xf32> to vector<64x128xbf16>
    %266 = tpu.concatenate %264, %265 in 0 : vector<64x128xbf16>, vector<64x128xbf16> -> vector<128x128xbf16>
    %cst_143 = arith.constant dense<0.000000e+00> : vector<64x128xf32>
    %267 = tpu.matmul %258, %266, %cst_143 {dimension_numbers = #tpu.dot_dimension_numbers<[1], [0], [0], [1], [0, 0, 1, 1], [], []>} : vector<64x128xbf16>, vector<128x128xbf16>, vector<64x128xf32> -> vector<64x128xf32>
    %c4_144 = arith.constant 4 : index
    %c1_145 = arith.constant 1 : index
    %c0_146 = arith.constant 0 : index
    %c0_147 = arith.constant 0 : index
    %268 = vector.load %arg9[%c4_144, %c1_145, %c0_146, %c0_147] : memref<6x2x64x1xf32, #tpu.memory_space<vmem>>, vector<1x1x64x1xf32>
    %269 = vector.shape_cast %268 : vector<1x1x64x1xf32> to vector<64x1xf32>
    %270 = vector.broadcast %269 : vector<64x1xf32> to vector<64x128xf32>
    %271 = arith.addf %267, %270 : vector<64x128xf32>
    %cst_148 = arith.constant 0.000000e+00 : f32
    %272 = vector.broadcast %cst_148 : f32 to vector<64x128xf32>
    %273 = arith.cmpf ogt, %271, %272 : vector<64x128xf32>
    %274 = vector.broadcast %235 : f32 to vector<64x128xf32>
    %275 = arith.mulf %274, %271 : vector<64x128xf32>
    %276 = arith.select %273, %271, %275 : vector<64x128xi1>, vector<64x128xf32>
    %277 = arith.addf %276, %233 : vector<64x128xf32>
    %cst_149 = arith.constant 0.000000e+00 : f32
    %278 = vector.broadcast %cst_149 : f32 to vector<64x128xf32>
    %279 = arith.cmpf ogt, %277, %278 : vector<64x128xf32>
    %280 = vector.broadcast %236 : f32 to vector<64x128xf32>
    %281 = arith.mulf %280, %277 : vector<64x128xf32>
    %282 = arith.select %279, %277, %281 : vector<64x128xi1>, vector<64x128xf32>
    %c18 = arith.constant 18 : index
    %283 = memref.load %arg16[%c18] : memref<21xf32, #tpu.memory_space<smem>>
    %c19 = arith.constant 19 : index
    %284 = memref.load %arg16[%c19] : memref<21xf32, #tpu.memory_space<smem>>
    %c20 = arith.constant 20 : index
    %285 = memref.load %arg16[%c20] : memref<21xf32, #tpu.memory_space<smem>>
    %c5_150 = arith.constant 5 : index
    %c0_151 = arith.constant 0 : index
    %c0_152 = arith.constant 0 : index
    %c0_153 = arith.constant 0 : index
    %286 = vector.load %arg8[%c5_150, %c0_151, %c0_152, %c0_153] : memref<6x2x64x128xbf16, #tpu.memory_space<vmem>>, vector<1x1x64x128xbf16>
    %287 = vector.shape_cast %286 : vector<1x1x64x128xbf16> to vector<64x128xbf16>
    %c32_i32 = arith.constant 32 : i32
    %288 = tpu.dynamic_rotate %282 by %c32_i32 dim 1 : vector<64x128xf32>, i32 -> vector<64x128xf32>
    %c32_i32_154 = arith.constant 32 : i32
    %289 = vector.broadcast %c32_i32_154 : i32 to vector<64x128xi32>
    %290 = arith.cmpi sge, %37, %289 : vector<64x128xi32>
    %cst_155 = arith.constant 0.000000e+00 : f32
    %291 = vector.broadcast %cst_155 : f32 to vector<64x128xf32>
    %292 = arith.select %290, %288, %291 : vector<64x128xi1>, vector<64x128xf32>
    %293 = arith.truncf %292 : vector<64x128xf32> to vector<64x128xbf16>
    %294 = arith.truncf %282 : vector<64x128xf32> to vector<64x128xbf16>
    %295 = tpu.concatenate %293, %294 in 0 : vector<64x128xbf16>, vector<64x128xbf16> -> vector<128x128xbf16>
    %cst_156 = arith.constant dense<0.000000e+00> : vector<64x128xf32>
    %296 = tpu.matmul %287, %295, %cst_156 {dimension_numbers = #tpu.dot_dimension_numbers<[1], [0], [0], [1], [0, 0, 1, 1], [], []>} : vector<64x128xbf16>, vector<128x128xbf16>, vector<64x128xf32> -> vector<64x128xf32>
    %c5_157 = arith.constant 5 : index
    %c0_158 = arith.constant 0 : index
    %c0_159 = arith.constant 0 : index
    %c0_160 = arith.constant 0 : index
    %297 = vector.load %arg9[%c5_157, %c0_158, %c0_159, %c0_160] : memref<6x2x64x1xf32, #tpu.memory_space<vmem>>, vector<1x1x64x1xf32>
    %298 = vector.shape_cast %297 : vector<1x1x64x1xf32> to vector<64x1xf32>
    %299 = vector.broadcast %298 : vector<64x1xf32> to vector<64x128xf32>
    %300 = arith.addf %296, %299 : vector<64x128xf32>
    %cst_161 = arith.constant 0.000000e+00 : f32
    %301 = vector.broadcast %cst_161 : f32 to vector<64x128xf32>
    %302 = arith.cmpf ogt, %300, %301 : vector<64x128xf32>
    %303 = vector.broadcast %283 : f32 to vector<64x128xf32>
    %304 = arith.mulf %303, %300 : vector<64x128xf32>
    %305 = arith.select %302, %300, %304 : vector<64x128xi1>, vector<64x128xf32>
    %c5_162 = arith.constant 5 : index
    %c1_163 = arith.constant 1 : index
    %c0_164 = arith.constant 0 : index
    %c0_165 = arith.constant 0 : index
    %306 = vector.load %arg8[%c5_162, %c1_163, %c0_164, %c0_165] : memref<6x2x64x128xbf16, #tpu.memory_space<vmem>>, vector<1x1x64x128xbf16>
    %307 = vector.shape_cast %306 : vector<1x1x64x128xbf16> to vector<64x128xbf16>
    %c32_i32_166 = arith.constant 32 : i32
    %308 = tpu.dynamic_rotate %305 by %c32_i32_166 dim 1 : vector<64x128xf32>, i32 -> vector<64x128xf32>
    %c32_i32_167 = arith.constant 32 : i32
    %309 = vector.broadcast %c32_i32_167 : i32 to vector<64x128xi32>
    %310 = arith.cmpi sge, %37, %309 : vector<64x128xi32>
    %cst_168 = arith.constant 0.000000e+00 : f32
    %311 = vector.broadcast %cst_168 : f32 to vector<64x128xf32>
    %312 = arith.select %310, %308, %311 : vector<64x128xi1>, vector<64x128xf32>
    %313 = arith.truncf %312 : vector<64x128xf32> to vector<64x128xbf16>
    %314 = arith.truncf %305 : vector<64x128xf32> to vector<64x128xbf16>
    %315 = tpu.concatenate %313, %314 in 0 : vector<64x128xbf16>, vector<64x128xbf16> -> vector<128x128xbf16>
    %cst_169 = arith.constant dense<0.000000e+00> : vector<64x128xf32>
    %316 = tpu.matmul %307, %315, %cst_169 {dimension_numbers = #tpu.dot_dimension_numbers<[1], [0], [0], [1], [0, 0, 1, 1], [], []>} : vector<64x128xbf16>, vector<128x128xbf16>, vector<64x128xf32> -> vector<64x128xf32>
    %c5_170 = arith.constant 5 : index
    %c1_171 = arith.constant 1 : index
    %c0_172 = arith.constant 0 : index
    %c0_173 = arith.constant 0 : index
    %317 = vector.load %arg9[%c5_170, %c1_171, %c0_172, %c0_173] : memref<6x2x64x1xf32, #tpu.memory_space<vmem>>, vector<1x1x64x1xf32>
    %318 = vector.shape_cast %317 : vector<1x1x64x1xf32> to vector<64x1xf32>
    %319 = vector.broadcast %318 : vector<64x1xf32> to vector<64x128xf32>
    %320 = arith.addf %316, %319 : vector<64x128xf32>
    %cst_174 = arith.constant 0.000000e+00 : f32
    %321 = vector.broadcast %cst_174 : f32 to vector<64x128xf32>
    %322 = arith.cmpf ogt, %320, %321 : vector<64x128xf32>
    %323 = vector.broadcast %284 : f32 to vector<64x128xf32>
    %324 = arith.mulf %323, %320 : vector<64x128xf32>
    %325 = arith.select %322, %320, %324 : vector<64x128xi1>, vector<64x128xf32>
    %326 = arith.addf %325, %282 : vector<64x128xf32>
    %cst_175 = arith.constant 0.000000e+00 : f32
    %327 = vector.broadcast %cst_175 : f32 to vector<64x128xf32>
    %328 = arith.cmpf ogt, %326, %327 : vector<64x128xf32>
    %329 = vector.broadcast %285 : f32 to vector<64x128xf32>
    %330 = arith.mulf %329, %326 : vector<64x128xf32>
    %331 = arith.select %328, %326, %330 : vector<64x128xi1>, vector<64x128xf32>
    %c0_176 = arith.constant 0 : index
    %c0_177 = arith.constant 0 : index
    %332 = vector.load %arg10[%c0_176, %c0_177] : memref<8x64xbf16, #tpu.memory_space<vmem>>, vector<8x64xbf16>
    %333 = arith.truncf %331 : vector<64x128xf32> to vector<64x128xbf16>
    %cst_178 = arith.constant dense<0.000000e+00> : vector<8x128xf32>
    %334 = tpu.matmul %332, %333, %cst_178 {dimension_numbers = #tpu.dot_dimension_numbers<[1], [0], [0], [1], [0, 0, 1, 1], [], []>} : vector<8x64xbf16>, vector<64x128xbf16>, vector<8x128xf32> -> vector<8x128xf32>
    %c0_179 = arith.constant 0 : index
    %c0_180 = arith.constant 0 : index
    %335 = vector.load %arg11[%c0_179, %c0_180] : memref<8x1xf32, #tpu.memory_space<vmem>>, vector<8x1xf32>
    %336 = vector.broadcast %335 : vector<8x1xf32> to vector<8x128xf32>
    %337 = arith.addf %334, %336 : vector<8x128xf32>
    %c0_181 = arith.constant 0 : index
    %c0_182 = arith.constant 0 : index
    %338 = vector.load %arg12[%c0_181, %c0_182] : memref<32x3xf32, #tpu.memory_space<vmem>>, vector<32x3xf32>
    %cst_183 = arith.constant dense<0.000000e+00> : vector<32x128xf32>
    %339 = tpu.matmul %338, %1, %cst_183 {dimension_numbers = #tpu.dot_dimension_numbers<[1], [0], [0], [1], [0, 0, 1, 1], [], []>} : vector<32x3xf32>, vector<3x128xf32>, vector<32x128xf32> -> vector<32x128xf32>
    %c0_184 = arith.constant 0 : index
    %c0_185 = arith.constant 0 : index
    %340 = vector.load %arg13[%c0_184, %c0_185] : memref<32x1xf32, #tpu.memory_space<vmem>>, vector<32x1xf32>
    %341 = vector.broadcast %340 : vector<32x1xf32> to vector<32x128xf32>
    %342 = arith.addf %339, %341 : vector<32x128xf32>
    %cst_186 = arith.constant 0.000000e+00 : f32
    %343 = vector.broadcast %cst_186 : f32 to vector<32x128xf32>
    %344 = arith.maximumf %342, %343 : vector<32x128xf32>
    %c0_187 = arith.constant 0 : index
    %c0_188 = arith.constant 0 : index
    %345 = vector.load %arg14[%c0_187, %c0_188] : memref<8x32xbf16, #tpu.memory_space<vmem>>, vector<8x32xbf16>
    %346 = arith.truncf %344 : vector<32x128xf32> to vector<32x128xbf16>
    %cst_189 = arith.constant dense<0.000000e+00> : vector<8x128xf32>
    %347 = tpu.matmul %345, %346, %cst_189 {dimension_numbers = #tpu.dot_dimension_numbers<[1], [0], [0], [1], [0, 0, 1, 1], [], []>} : vector<8x32xbf16>, vector<32x128xbf16>, vector<8x128xf32> -> vector<8x128xf32>
    %c0_190 = arith.constant 0 : index
    %c0_191 = arith.constant 0 : index
    %348 = vector.load %arg15[%c0_190, %c0_191] : memref<8x1xf32, #tpu.memory_space<vmem>>, vector<8x1xf32>
    %349 = vector.broadcast %348 : vector<8x1xf32> to vector<8x128xf32>
    %350 = arith.addf %347, %349 : vector<8x128xf32>
    %351 = arith.addf %337, %350 : vector<8x128xf32>
    %c0_192 = arith.constant 0 : index
    %c0_193 = arith.constant 0 : index
    %c0_194 = arith.constant 0 : index
    %352 = vector.load %arg17[%c0_192, %c0_193, %c0_194] : memref<1x8x128xf32, #tpu.memory_space<vmem>>, vector<1x8x128xf32>
    %353 = vector.shape_cast %352 : vector<1x8x128xf32> to vector<8x128xf32>
    %354 = vector.shape_cast %351 : vector<8x128xf32> to vector<1x8x128xf32>
    tpu.vector_store %arg17[%c0_192, %c0_193, %c0_194], %354 {strides = array<i32>} : memref<1x8x128xf32, #tpu.memory_space<vmem>>, vector<1x8x128xf32>,
    return
  }
  func.func @transform_0(%arg0: i32) -> (i32, i32, i32) {
    %c0_i32 = arith.constant 0 : i32
    %c0_i32_0 = arith.constant 0 : i32
    %c0_i32_1 = arith.constant 0 : i32
    return %arg0, %c0_i32, %c0_i32_0 : i32, i32, i32
  }
  func.func @transform_1(%arg0: i32) -> (i32, i32) {
    %c0_i32 = arith.constant 0 : i32
    %c0_i32_0 = arith.constant 0 : i32
    %c0_i32_1 = arith.constant 0 : i32
    return %c0_i32, %c0_i32_0 : i32, i32
  }
  func.func @transform_2(%arg0: i32) -> (i32, i32) {
    %c0_i32 = arith.constant 0 : i32
    %c0_i32_0 = arith.constant 0 : i32
    %c0_i32_1 = arith.constant 0 : i32
    return %c0_i32, %c0_i32_0 : i32, i32
  }
  func.func @transform_3(%arg0: i32) -> (i32, i32) {
    %c0_i32 = arith.constant 0 : i32
    %c0_i32_0 = arith.constant 0 : i32
    %c0_i32_1 = arith.constant 0 : i32
    return %c0_i32, %c0_i32_0 : i32, i32
  }
  func.func @transform_4(%arg0: i32) -> (i32, i32) {
    %c0_i32 = arith.constant 0 : i32
    %c0_i32_0 = arith.constant 0 : i32
    %c0_i32_1 = arith.constant 0 : i32
    return %c0_i32, %c0_i32_0 : i32, i32
  }
  func.func @transform_5(%arg0: i32) -> (i32, i32) {
    %c0_i32 = arith.constant 0 : i32
    %c0_i32_0 = arith.constant 0 : i32
    %c0_i32_1 = arith.constant 0 : i32
    return %c0_i32, %c0_i32_0 : i32, i32
  }
  func.func @transform_6(%arg0: i32) -> (i32, i32) {
    %c0_i32 = arith.constant 0 : i32
    %c0_i32_0 = arith.constant 0 : i32
    %c0_i32_1 = arith.constant 0 : i32
    return %c0_i32, %c0_i32_0 : i32, i32
  }
  func.func @transform_7(%arg0: i32) -> (i32, i32, i32, i32) {
    %c0_i32 = arith.constant 0 : i32
    %c0_i32_0 = arith.constant 0 : i32
    %c0_i32_1 = arith.constant 0 : i32
    %c0_i32_2 = arith.constant 0 : i32
    %c0_i32_3 = arith.constant 0 : i32
    return %c0_i32, %c0_i32_0, %c0_i32_1, %c0_i32_2 : i32, i32, i32, i32
  }
  func.func @transform_8(%arg0: i32) -> (i32, i32, i32, i32) {
    %c0_i32 = arith.constant 0 : i32
    %c0_i32_0 = arith.constant 0 : i32
    %c0_i32_1 = arith.constant 0 : i32
    %c0_i32_2 = arith.constant 0 : i32
    %c0_i32_3 = arith.constant 0 : i32
    return %c0_i32, %c0_i32_0, %c0_i32_1, %c0_i32_2 : i32, i32, i32, i32
  }
  func.func @transform_9(%arg0: i32) -> (i32, i32) {
    %c0_i32 = arith.constant 0 : i32
    %c0_i32_0 = arith.constant 0 : i32
    %c0_i32_1 = arith.constant 0 : i32
    return %c0_i32, %c0_i32_0 : i32, i32
  }
  func.func @transform_10(%arg0: i32) -> (i32, i32) {
    %c0_i32 = arith.constant 0 : i32
    %c0_i32_0 = arith.constant 0 : i32
    %c0_i32_1 = arith.constant 0 : i32
    return %c0_i32, %c0_i32_0 : i32, i32
  }
  func.func @transform_11(%arg0: i32) -> (i32, i32) {
    %c0_i32 = arith.constant 0 : i32
    %c0_i32_0 = arith.constant 0 : i32
    %c0_i32_1 = arith.constant 0 : i32
    return %c0_i32, %c0_i32_0 : i32, i32
  }
  func.func @transform_12(%arg0: i32) -> (i32, i32) {
    %c0_i32 = arith.constant 0 : i32
    %c0_i32_0 = arith.constant 0 : i32
    %c0_i32_1 = arith.constant 0 : i32
    return %c0_i32, %c0_i32_0 : i32, i32
  }
  func.func @transform_13(%arg0: i32) -> (i32, i32) {
    %c0_i32 = arith.constant 0 : i32
    %c0_i32_0 = arith.constant 0 : i32
    %c0_i32_1 = arith.constant 0 : i32
    return %c0_i32, %c0_i32_0 : i32, i32
  }
  func.func @transform_14(%arg0: i32) -> (i32, i32) {
    %c0_i32 = arith.constant 0 : i32
    %c0_i32_0 = arith.constant 0 : i32
    %c0_i32_1 = arith.constant 0 : i32
    return %c0_i32, %c0_i32_0 : i32, i32
  }
  func.func @transform_15(%arg0: i32) -> i32 {
    %c0_i32 = arith.constant 0 : i32
    %c0_i32_0 = arith.constant 0 : i32
    return %c0_i32 : i32
  }
  func.func @transform_16(%arg0: i32) -> (i32, i32, i32) {
    %c0_i32 = arith.constant 0 : i32
    %c0_i32_0 = arith.constant 0 : i32
    %c0_i32_1 = arith.constant 0 : i32
    return %arg0, %c0_i32, %c0_i32_0 : i32, i32, i32
  }
}

</mosaic_0001>

<llo_original>
// kernel: csvnn_generator_forward.1
$region0: #{csvnn_generator_forward.1}
  #allocation0 [shape = 'u32[]', space=smem, size = 0x4, offset = 0x4, fixed_abs, tag = 'smem constant byte address 0x4 - core index']
  #allocation1 [shape = 'u32[144,128]{1,0:T(1,128)}', space=vmem, size = 0x12000, scoped, tag = 'internal scratch']
  %s0 = inlined_call_operand.vmem [shape: f32[2,3,128], index: 0, kind: input, shape index: {}]
  %s1 = inlined_call_operand.vmem [shape: f32[64,3], index: 1, kind: input, shape index: {}]
  %s2 = inlined_call_operand.vmem [shape: f32[64,1], index: 2, kind: input, shape index: {}]
  %s3 = inlined_call_operand.vmem [shape: bf16[64,64], index: 3, kind: input, shape index: {}]
  %s4 = inlined_call_operand.vmem [shape: f32[64,1], index: 4, kind: input, shape index: {}]
  %s5 = inlined_call_operand.vmem [shape: f32[64,3], index: 5, kind: input, shape index: {}]
  %s6 = inlined_call_operand.vmem [shape: f32[64,1], index: 6, kind: input, shape index: {}]
  %s7 = inlined_call_operand.vmem [shape: bf16[6,2,64,128], index: 7, kind: input, shape index: {}]
  %s8 = inlined_call_operand.vmem [shape: f32[6,2,64,1], index: 8, kind: input, shape index: {}]
  %s9 = inlined_call_operand.vmem [shape: bf16[8,64], index: 9, kind: input, shape index: {}]
  %s10 = inlined_call_operand.vmem [shape: f32[8,1], index: 10, kind: input, shape index: {}]
  %s11 = inlined_call_operand.vmem [shape: f32[32,3], index: 11, kind: input, shape index: {}]
  %s12 = inlined_call_operand.vmem [shape: f32[32,1], index: 12, kind: input, shape index: {}]
  %s13 = inlined_call_operand.vmem [shape: bf16[8,32], index: 13, kind: input, shape index: {}]
  %s14 = inlined_call_operand.vmem [shape: f32[8,1], index: 14, kind: input, shape index: {}]
  %s15 = inlined_call_operand.vmem [shape: f32[21], index: 15, kind: input, shape index: {}]
  %s16 = inlined_call_operand.vmem [shape: f32[2,8,128], index: 16, kind: output, shape index: {}]
  %s17 = sld [smem:[#allocation0]]
  $region101: #{csvnn_generator_forward.1} parent=0
    _
  %s19 = ssub.s32 1, %s17
  %s20 = scalar_select 0, %s19, %s17
  $region1: #{csvnn_generator_forward.1} parent=0
    #allocation2 [shape = 'u8[512]{0}', space=smem, size = 0x200, scoped, tag = 'input window, operand 15, single buffered']
    #allocation3 [shape = 's32[2]{0}', space=sflag, size = 0x8, scoped, tag = 'scoped memory for csvnn_generator_forward.1']
    %21 = vsyncpa [#allocation3], 0
    loop: start=0, step=1, limit=4
    $region2: #{csvnn_generator_forward.1} parent=1 // loop_pre_header
      _
    $region3: #{csvnn_generator_forward.1} parent=1 // loop_header
      %s23 = sphi 0, %s27
      %p24 = scmp.ge.s32.totalorder %s23, 4
      %s33 = sphi 0, %s35
      %s36 = sphi 0, %s33
      %s37 = sphi 0, %s36
      %s53 = sphi 0, %s37
      %s57 = sphi 0, %s57
      %s59 = sphi 0, %s57
      %s60 = sphi 0, %s59
      %s74 = sphi 0, %s60
      %s78 = sphi 0, %s78
      %s80 = sphi 0, %s78
      %s81 = sphi 0, %s80
      %s95 = sphi 0, %s81
      %s99 = sphi 0, %s99
      %s101 = sphi 0, %s99
      %s102 = sphi 0, %s101
      %s116 = sphi 0, %s102
      %s120 = sphi 0, %s120
      %s122 = sphi 0, %s120
      %s123 = sphi 0, %s122
      %s137 = sphi 0, %s123
      %s141 = sphi 0, %s141
      %s143 = sphi 0, %s141
      %s144 = sphi 0, %s143
      %s158 = sphi 0, %s144
      %s162 = sphi 0, %s162
      %s164 = sphi 0, %s162
      %s165 = sphi 0, %s164
      %s179 = sphi 0, %s165
      %s183 = sphi 0, %s183
      %s185 = sphi 0, %s183
      %s186 = sphi 0, %s185
      %s200 = sphi 0, %s186
      %s204 = sphi 0, %s204
      %s206 = sphi 0, %s204
      %s207 = sphi 0, %s206
      %s221 = sphi 0, %s207
      %s225 = sphi 0, %s225
      %s227 = sphi 0, %s225
      %s228 = sphi 0, %s227
      %s242 = sphi 0, %s228
      %s246 = sphi 0, %s246
      %s248 = sphi 0, %s246
      %s249 = sphi 0, %s248
      %s263 = sphi 0, %s249
      %s267 = sphi 0, %s267
      %s269 = sphi 0, %s267
      %s270 = sphi 0, %s269
      %s284 = sphi 0, %s270
      %s288 = sphi 0, %s288
      %s290 = sphi 0, %s288
      %s291 = sphi 0, %s290
      %s305 = sphi 0, %s291
      %s309 = sphi 0, %s309
      %s311 = sphi 0, %s309
      %s312 = sphi 0, %s311
      %s326 = sphi 0, %s312
      %s330 = sphi 0, %s330
      %s332 = sphi 0, %s330
      %s333 = sphi 0, %s332
      %s347 = sphi 0, %s333
      %s351 = sphi 0, %s351
      %s353 = sphi 0, %s351
      %s354 = sphi 0, %s353
      %s368 = sphi 0, %s354
      %s374 = sphi 0, %s376
      %s377 = sphi 0, %s374
      %s378 = sphi 0, %s377
      %s394 = sphi 0, %s378
    $region4: #{csvnn_generator_forward.1} parent=1 // loop_header_branch
      %26 = sbr.rel (%p24) target = $region8
    $region5: #{csvnn_generator_forward.1} parent=1 // loop_body
      %s28 = ssub.s32 %s23, 1
      %s29 = ssub.s32 %s23, 2
      %s30 = sadd.s32 %s23, 1
      %s31 = ssub.s32 %s23, %s30
      %p32 = scmp.eq.s32.totalorder %s31, 0
      %s34 = sadd.s32 %s33, 1
      %s35 = scalar_select %p32, %s33, %s34
      %p38 = pneg %p32
      %p39 = scmp.eq.s32.totalorder %s23, 1
      %p40 = por %p38, %p39
      %p41 = scmp.ne.s32.totalorder %s33, %s36
      %p42 = scmp.eq.s32.totalorder %s23, 0
      %p43 = por %p41, %p42
      %p44 = scmp.ne.s32.totalorder %s33, %s36
      %p45 = scmp.eq.s32.totalorder %s28, 1
      %p46 = por %p44, %p45
      %p47 = scmp.ne.s32.totalorder %s36, %s37
      %p48 = scmp.eq.s32.totalorder %s28, 0
      %p49 = por %p47, %p48
      %p50 = scmp.ne.s32.totalorder %s36, %s37
      %p51 = scmp.eq.s32.totalorder %s29, 1
      %p52 = por %p50, %p51
      %p54 = scmp.ne.s32.totalorder %s37, %s53
      %p55 = scmp.eq.s32.totalorder %s29, 0
      %p56 = por %p54, %p55
      %s58 = sadd.s32 %s57, 1
      %p61 = scmp.eq.s32.totalorder %s23, 1
      %p62 = scmp.ne.s32.totalorder %s57, %s59
      %p63 = scmp.eq.s32.totalorder %s23, 0
      %p64 = por %p62, %p63
      %p65 = scmp.ne.s32.totalorder %s57, %s59
      %p66 = scmp.eq.s32.totalorder %s28, 1
      %p67 = por %p65, %p66
      %p68 = scmp.ne.s32.totalorder %s59, %s60
      %p69 = scmp.eq.s32.totalorder %s28, 0
      %p70 = por %p68, %p69
      %p71 = scmp.ne.s32.totalorder %s59, %s60
      %p72 = scmp.eq.s32.totalorder %s29, 1
      %p73 = por %p71, %p72
      %p75 = scmp.ne.s32.totalorder %s60, %s74
      %p76 = scmp.eq.s32.totalorder %s29, 0
      %p77 = por %p75, %p76
      %s79 = sadd.s32 %s78, 1
      %p82 = scmp.eq.s32.totalorder %s23, 1
      %p83 = scmp.ne.s32.totalorder %s78, %s80
      %p84 = scmp.eq.s32.totalorder %s23, 0
      %p85 = por %p83, %p84
      %p86 = scmp.ne.s32.totalorder %s78, %s80
      %p87 = scmp.eq.s32.totalorder %s28, 1
      %p88 = por %p86, %p87
      %p89 = scmp.ne.s32.totalorder %s80, %s81
      %p90 = scmp.eq.s32.totalorder %s28, 0
      %p91 = por %p89, %p90
      %p92 = scmp.ne.s32.totalorder %s80, %s81
      %p93 = scmp.eq.s32.totalorder %s29, 1
      %p94 = por %p92, %p93
      %p96 = scmp.ne.s32.totalorder %s81, %s95
      %p97 = scmp.eq.s32.totalorder %s29, 0
      %p98 = por %p96, %p97
      %s100 = sadd.s32 %s99, 1
      %p103 = scmp.eq.s32.totalorder %s23, 1
      %p104 = scmp.ne.s32.totalorder %s99, %s101
      %p105 = scmp.eq.s32.totalorder %s23, 0
      %p106 = por %p104, %p105
      %p107 = scmp.ne.s32.totalorder %s99, %s101
      %p108 = scmp.eq.s32.totalorder %s28, 1
      %p109 = por %p107, %p108
      %p110 = scmp.ne.s32.totalorder %s101, %s102
      %p111 = scmp.eq.s32.totalorder %s28, 0
      %p112 = por %p110, %p111
      %p113 = scmp.ne.s32.totalorder %s101, %s102
      %p114 = scmp.eq.s32.totalorder %s29, 1
      %p115 = por %p113, %p114
      %p117 = scmp.ne.s32.totalorder %s102, %s116
      %p118 = scmp.eq.s32.totalorder %s29, 0
      %p119 = por %p117, %p118
      %s121 = sadd.s32 %s120, 1
      %p124 = scmp.eq.s32.totalorder %s23, 1
      %p125 = scmp.ne.s32.totalorder %s120, %s122
      %p126 = scmp.eq.s32.totalorder %s23, 0
      %p127 = por %p125, %p126
      %p128 = scmp.ne.s32.totalorder %s120, %s122
      %p129 = scmp.eq.s32.totalorder %s28, 1
      %p130 = por %p128, %p129
      %p131 = scmp.ne.s32.totalorder %s122, %s123
      %p132 = scmp.eq.s32.totalorder %s28, 0
      %p133 = por %p131, %p132
      %p134 = scmp.ne.s32.totalorder %s122, %s123
      %p135 = scmp.eq.s32.totalorder %s29, 1
      %p136 = por %p134, %p135
      %p138 = scmp.ne.s32.totalorder %s123, %s137
      %p139 = scmp.eq.s32.totalorder %s29, 0
      %p140 = por %p138, %p139
      %s142 = sadd.s32 %s141, 1
      %p145 = scmp.eq.s32.totalorder %s23, 1
      %p146 = scmp.ne.s32.totalorder %s141, %s143
      %p147 = scmp.eq.s32.totalorder %s23, 0
      %p148 = por %p146, %p147
      %p149 = scmp.ne.s32.totalorder %s141, %s143
      %p150 = scmp.eq.s32.totalorder %s28, 1
      %p151 = por %p149, %p150
      %p152 = scmp.ne.s32.totalorder %s143, %s144
      %p153 = scmp.eq.s32.totalorder %s28, 0
      %p154 = por %p152, %p153
      %p155 = scmp.ne.s32.totalorder %s143, %s144
      %p156 = scmp.eq.s32.totalorder %s29, 1
      %p157 = por %p155, %p156
      %p159 = scmp.ne.s32.totalorder %s144, %s158
      %p160 = scmp.eq.s32.totalorder %s29, 0
      %p161 = por %p159, %p160
      %s163 = sadd.s32 %s162, 1
      %p166 = scmp.eq.s32.totalorder %s23, 1
      %p167 = scmp.ne.s32.totalorder %s162, %s164
      %p168 = scmp.eq.s32.totalorder %s23, 0
      %p169 = por %p167, %p168
      %p170 = scmp.ne.s32.totalorder %s162, %s164
      %p171 = scmp.eq.s32.totalorder %s28, 1
      %p172 = por %p170, %p171
      %p173 = scmp.ne.s32.totalorder %s164, %s165
      %p174 = scmp.eq.s32.totalorder %s28, 0
      %p175 = por %p173, %p174
      %p176 = scmp.ne.s32.totalorder %s164, %s165
      %p177 = scmp.eq.s32.totalorder %s29, 1
      %p178 = por %p176, %p177
      %p180 = scmp.ne.s32.totalorder %s165, %s179
      %p181 = scmp.eq.s32.totalorder %s29, 0
      %p182 = por %p180, %p181
      %s184 = sadd.s32 %s183, 1
      %p187 = scmp.eq.s32.totalorder %s23, 1
      %p188 = scmp.ne.s32.totalorder %s183, %s185
      %p189 = scmp.eq.s32.totalorder %s23, 0
      %p190 = por %p188, %p189
      %p191 = scmp.ne.s32.totalorder %s183, %s185
      %p192 = scmp.eq.s32.totalorder %s28, 1
      %p193 = por %p191, %p192
      %p194 = scmp.ne.s32.totalorder %s185, %s186
      %p195 = scmp.eq.s32.totalorder %s28, 0
      %p196 = por %p194, %p195
      %p197 = scmp.ne.s32.totalorder %s185, %s186
      %p198 = scmp.eq.s32.totalorder %s29, 1
      %p199 = por %p197, %p198
      %p201 = scmp.ne.s32.totalorder %s186, %s200
      %p202 = scmp.eq.s32.totalorder %s29, 0
      %p203 = por %p201, %p202
      %s205 = sadd.s32 %s204, 1
      %p208 = scmp.eq.s32.totalorder %s23, 1
      %p209 = scmp.ne.s32.totalorder %s204, %s206
      %p210 = scmp.eq.s32.totalorder %s23, 0
      %p211 = por %p209, %p210
      %p212 = scmp.ne.s32.totalorder %s204, %s206
      %p213 = scmp.eq.s32.totalorder %s28, 1
      %p214 = por %p212, %p213
      %p215 = scmp.ne.s32.totalorder %s206, %s207
      %p216 = scmp.eq.s32.totalorder %s28, 0
      %p217 = por %p215, %p216
      %p218 = scmp.ne.s32.totalorder %s206, %s207
      %p219 = scmp.eq.s32.totalorder %s29, 1
      %p220 = por %p218, %p219
      %p222 = scmp.ne.s32.totalorder %s207, %s221
      %p223 = scmp.eq.s32.totalorder %s29, 0
      %p224 = por %p222, %p223
      %s226 = sadd.s32 %s225, 1
      %p229 = scmp.eq.s32.totalorder %s23, 1
      %p230 = scmp.ne.s32.totalorder %s225, %s227
      %p231 = scmp.eq.s32.totalorder %s23, 0
      %p232 = por %p230, %p231
      %p233 = scmp.ne.s32.totalorder %s225, %s227
      %p234 = scmp.eq.s32.totalorder %s28, 1
      %p235 = por %p233, %p234
      %p236 = scmp.ne.s32.totalorder %s227, %s228
      %p237 = scmp.eq.s32.totalorder %s28, 0
      %p238 = por %p236, %p237
      %p239 = scmp.ne.s32.totalorder %s227, %s228
      %p240 = scmp.eq.s32.totalorder %s29, 1
      %p241 = por %p239, %p240
      %p243 = scmp.ne.s32.totalorder %s228, %s242
      %p244 = scmp.eq.s32.totalorder %s29, 0
      %p245 = por %p243, %p244
      %s247 = sadd.s32 %s246, 1
      %p250 = scmp.eq.s32.totalorder %s23, 1
      %p251 = scmp.ne.s32.totalorder %s246, %s248
      %p252 = scmp.eq.s32.totalorder %s23, 0
      %p253 = por %p251, %p252
      %p254 = scmp.ne.s32.totalorder %s246, %s248
      %p255 = scmp.eq.s32.totalorder %s28, 1
      %p256 = por %p254, %p255
      %p257 = scmp.ne.s32.totalorder %s248, %s249
      %p258 = scmp.eq.s32.totalorder %s28, 0
      %p259 = por %p257, %p258
      %p260 = scmp.ne.s32.totalorder %s248, %s249
      %p261 = scmp.eq.s32.totalorder %s29, 1
      %p262 = por %p260, %p261
      %p264 = scmp.ne.s32.totalorder %s249, %s263
      %p265 = scmp.eq.s32.totalorder %s29, 0
      %p266 = por %p264, %p265
      %s268 = sadd.s32 %s267, 1
      %p271 = scmp.eq.s32.totalorder %s23, 1
      %p272 = scmp.ne.s32.totalorder %s267, %s269
      %p273 = scmp.eq.s32.totalorder %s23, 0
      %p274 = por %p272, %p273
      %p275 = scmp.ne.s32.totalorder %s267, %s269
      %p276 = scmp.eq.s32.totalorder %s28, 1
      %p277 = por %p275, %p276
      %p278 = scmp.ne.s32.totalorder %s269, %s270
      %p279 = scmp.eq.s32.totalorder %s28, 0
      %p280 = por %p278, %p279
      %p281 = scmp.ne.s32.totalorder %s269, %s270
      %p282 = scmp.eq.s32.totalorder %s29, 1
      %p283 = por %p281, %p282
      %p285 = scmp.ne.s32.totalorder %s270, %s284
      %p286 = scmp.eq.s32.totalorder %s29, 0
      %p287 = por %p285, %p286
      %s289 = sadd.s32 %s288, 1
      %p292 = scmp.eq.s32.totalorder %s23, 1
      %p293 = scmp.ne.s32.totalorder %s288, %s290
      %p294 = scmp.eq.s32.totalorder %s23, 0
      %p295 = por %p293, %p294
      %p296 = scmp.ne.s32.totalorder %s288, %s290
      %p297 = scmp.eq.s32.totalorder %s28, 1
      %p298 = por %p296, %p297
      %p299 = scmp.ne.s32.totalorder %s290, %s291
      %p300 = scmp.eq.s32.totalorder %s28, 0
      %p301 = por %p299, %p300
      %p302 = scmp.ne.s32.totalorder %s290, %s291
      %p303 = scmp.eq.s32.totalorder %s29, 1
      %p304 = por %p302, %p303
      %p306 = scmp.ne.s32.totalorder %s291, %s305
      %p307 = scmp.eq.s32.totalorder %s29, 0
      %p308 = por %p306, %p307
      %s310 = sadd.s32 %s309, 1
      %p313 = scmp.eq.s32.totalorder %s23, 1
      %p314 = scmp.ne.s32.totalorder %s309, %s311
      %p315 = scmp.eq.s32.totalorder %s23, 0
      %p316 = por %p314, %p315
      %p317 = scmp.ne.s32.totalorder %s309, %s311
      %p318 = scmp.eq.s32.totalorder %s28, 1
      %p319 = por %p317, %p318
      %p320 = scmp.ne.s32.totalorder %s311, %s312
      %p321 = scmp.eq.s32.totalorder %s28, 0
      %p322 = por %p320, %p321
      %p323 = scmp.ne.s32.totalorder %s311, %s312
      %p324 = scmp.eq.s32.totalorder %s29, 1
      %p325 = por %p323, %p324
      %p327 = scmp.ne.s32.totalorder %s312, %s326
      %p328 = scmp.eq.s32.totalorder %s29, 0
      %p329 = por %p327, %p328
      %s331 = sadd.s32 %s330, 1
      %p334 = scmp.eq.s32.totalorder %s23, 1
      %p335 = scmp.ne.s32.totalorder %s330, %s332
      %p336 = scmp.eq.s32.totalorder %s23, 0
      %p337 = por %p335, %p336
      %p338 = scmp.ne.s32.totalorder %s330, %s332
      %p339 = scmp.eq.s32.totalorder %s28, 1
      %p340 = por %p338, %p339
      %p341 = scmp.ne.s32.totalorder %s332, %s333
      %p342 = scmp.eq.s32.totalorder %s28, 0
      %p343 = por %p341, %p342
      %p344 = scmp.ne.s32.totalorder %s332, %s333
      %p345 = scmp.eq.s32.totalorder %s29, 1
      %p346 = por %p344, %p345
      %p348 = scmp.ne.s32.totalorder %s333, %s347
      %p349 = scmp.eq.s32.totalorder %s29, 0
      %p350 = por %p348, %p349
      %s352 = sadd.s32 %s351, 1
      %p355 = scmp.eq.s32.totalorder %s23, 1
      %p356 = scmp.ne.s32.totalorder %s351, %s353
      %p357 = scmp.eq.s32.totalorder %s23, 0
      %p358 = por %p356, %p357
      %p359 = scmp.ne.s32.totalorder %s351, %s353
      %p360 = scmp.eq.s32.totalorder %s28, 1
      %p361 = por %p359, %p360
      %p362 = scmp.ne.s32.totalorder %s353, %s354
      %p363 = scmp.eq.s32.totalorder %s28, 0
      %p364 = por %p362, %p363
      %p365 = scmp.ne.s32.totalorder %s353, %s354
      %p366 = scmp.eq.s32.totalorder %s29, 1
      %p367 = por %p365, %p366
      %p369 = scmp.ne.s32.totalorder %s354, %s368
      %p370 = scmp.eq.s32.totalorder %s29, 0
      %p371 = por %p369, %p370
      %s372 = ssub.s32 %s23, %s30
      %p373 = scmp.eq.s32.totalorder %s372, 0
      %s375 = sadd.s32 %s374, 1
      %s376 = scalar_select %p373, %s374, %s375
      %p379 = pneg %p373
      %p380 = scmp.eq.s32.totalorder %s23, 1
      %p381 = por %p379, %p380
      %p382 = scmp.ne.s32.totalorder %s374, %s377
      %p383 = scmp.eq.s32.totalorder %s23, 0
      %p384 = por %p382, %p383
      %p385 = scmp.ne.s32.totalorder %s374, %s377
      %p386 = scmp.eq.s32.totalorder %s28, 1
      %p387 = por %p385, %p386
      %p388 = scmp.ne.s32.totalorder %s377, %s378
      %p389 = scmp.eq.s32.totalorder %s28, 0
      %p390 = por %p388, %p389
      %p391 = scmp.ne.s32.totalorder %s377, %s378
      %p392 = scmp.eq.s32.totalorder %s29, 1
      %p393 = por %p391, %p392
      %p395 = scmp.ne.s32.totalorder %s378, %s394
      %p396 = scmp.eq.s32.totalorder %s29, 0
      %p397 = por %p395, %p396
      %p398 = scmp.le.s32.totalorder 1, %s23
      %p399 = scmp.lt.s32.totalorder %s23, 3
      %p400 = pnand %p398, %p399
      %p401 = pneg %p400
      // Predicated region
      $region9: #{csvnn_generator_forward.1} parent=5 // pred_check
        _
      $region10: #{csvnn_generator_forward.1} parent=5 // pred_check_branch
        %403 = sbr.rel (%p400) target = $region12
      $region11: #{csvnn_generator_forward.1} parent=5 // pred_region
        %s404 = ssub.s32 %s23, 1
        // Predicated region
        $region13: #{csvnn_generator_forward.1} parent=11 // pred_check
          %p405 = pneg %p70
        $region14: #{csvnn_generator_forward.1} parent=11 // pred_check_branch
          %407 = sbr.rel (%p405) target = $region16
        $region15: #{csvnn_generator_forward.1} parent=11 // pred_region
          _
        $region16: #{csvnn_generator_forward.1} parent=11 // pred_fallthru
          _
        // Predicated region
        $region17: #{csvnn_generator_forward.1} parent=11 // pred_check
          %p408 = pneg %p91
        $region18: #{csvnn_generator_forward.1} parent=11 // pred_check_branch
          %410 = sbr.rel (%p408) target = $region20
        $region19: #{csvnn_generator_forward.1} parent=11 // pred_region
          _
        $region20: #{csvnn_generator_forward.1} parent=11 // pred_fallthru
          _
        // Predicated region
        $region21: #{csvnn_generator_forward.1} parent=11 // pred_check
          %p411 = pneg %p112
        $region22: #{csvnn_generator_forward.1} parent=11 // pred_check_branch
          %413 = sbr.rel (%p411) target = $region24
        $region23: #{csvnn_generator_forward.1} parent=11 // pred_region
          _
        $region24: #{csvnn_generator_forward.1} parent=11 // pred_fallthru
          _
        // Predicated region
        $region25: #{csvnn_generator_forward.1} parent=11 // pred_check
          %p414 = pneg %p133
        $region26: #{csvnn_generator_forward.1} parent=11 // pred_check_branch
          %416 = sbr.rel (%p414) target = $region28
        $region27: #{csvnn_generator_forward.1} parent=11 // pred_region
          _
        $region28: #{csvnn_generator_forward.1} parent=11 // pred_fallthru
          _
        // Predicated region
        $region29: #{csvnn_generator_forward.1} parent=11 // pred_check
          %p417 = pneg %p154
        $region30: #{csvnn_generator_forward.1} parent=11 // pred_check_branch
          %419 = sbr.rel (%p417) target = $region32
        $region31: #{csvnn_generator_forward.1} parent=11 // pred_region
          _
        $region32: #{csvnn_generator_forward.1} parent=11 // pred_fallthru
          _
        // Predicated region
        $region33: #{csvnn_generator_forward.1} parent=11 // pred_check
          %p420 = pneg %p175
        $region34: #{csvnn_generator_forward.1} parent=11 // pred_check_branch
          %422 = sbr.rel (%p420) target = $region36
        $region35: #{csvnn_generator_forward.1} parent=11 // pred_region
          _
        $region36: #{csvnn_generator_forward.1} parent=11 // pred_fallthru
          _
        // Predicated region
        $region37: #{csvnn_generator_forward.1} parent=11 // pred_check
          %p423 = pneg %p196
        $region38: #{csvnn_generator_forward.1} parent=11 // pred_check_branch
          %425 = sbr.rel (%p423) target = $region40
        $region39: #{csvnn_generator_forward.1} parent=11 // pred_region
          _
        $region40: #{csvnn_generator_forward.1} parent=11 // pred_fallthru
          _
        // Predicated region
        $region41: #{csvnn_generator_forward.1} parent=11 // pred_check
          %p426 = pneg %p217
        $region42: #{csvnn_generator_forward.1} parent=11 // pred_check_branch
          %428 = sbr.rel (%p426) target = $region44
        $region43: #{csvnn_generator_forward.1} parent=11 // pred_region
          _
        $region44: #{csvnn_generator_forward.1} parent=11 // pred_fallthru
          _
        // Predicated region
        $region45: #{csvnn_generator_forward.1} parent=11 // pred_check
          %p429 = pneg %p238
        $region46: #{csvnn_generator_forward.1} parent=11 // pred_check_branch
          %431 = sbr.rel (%p429) target = $region48
        $region47: #{csvnn_generator_forward.1} parent=11 // pred_region
          _
        $region48: #{csvnn_generator_forward.1} parent=11 // pred_fallthru
          _
        // Predicated region
        $region49: #{csvnn_generator_forward.1} parent=11 // pred_check
          %p432 = pneg %p259
        $region50: #{csvnn_generator_forward.1} parent=11 // pred_check_branch
          %434 = sbr.rel (%p432) target = $region52
        $region51: #{csvnn_generator_forward.1} parent=11 // pred_region
          _
        $region52: #{csvnn_generator_forward.1} parent=11 // pred_fallthru
          _
        // Predicated region
        $region53: #{csvnn_generator_forward.1} parent=11 // pred_check
          %p435 = pneg %p280
        $region54: #{csvnn_generator_forward.1} parent=11 // pred_check_branch
          %437 = sbr.rel (%p435) target = $region56
        $region55: #{csvnn_generator_forward.1} parent=11 // pred_region
          _
        $region56: #{csvnn_generator_forward.1} parent=11 // pred_fallthru
          _
        // Predicated region
        $region57: #{csvnn_generator_forward.1} parent=11 // pred_check
          %p438 = pneg %p301
        $region58: #{csvnn_generator_forward.1} parent=11 // pred_check_branch
          %440 = sbr.rel (%p438) target = $region60
        $region59: #{csvnn_generator_forward.1} parent=11 // pred_region
          _
        $region60: #{csvnn_generator_forward.1} parent=11 // pred_fallthru
          _
        // Predicated region
        $region61: #{csvnn_generator_forward.1} parent=11 // pred_check
          %p441 = pneg %p322
        $region62: #{csvnn_generator_forward.1} parent=11 // pred_check_branch
          %443 = sbr.rel (%p441) target = $region64
        $region63: #{csvnn_generator_forward.1} parent=11 // pred_region
          _
        $region64: #{csvnn_generator_forward.1} parent=11 // pred_fallthru
          _
        // Predicated region
        $region65: #{csvnn_generator_forward.1} parent=11 // pred_check
          %p444 = pneg %p343
        $region66: #{csvnn_generator_forward.1} parent=11 // pred_check_branch
          %446 = sbr.rel (%p444) target = $region68
        $region67: #{csvnn_generator_forward.1} parent=11 // pred_region
          _
        $region68: #{csvnn_generator_forward.1} parent=11 // pred_fallthru
          _
        // Predicated region
        $region69: #{csvnn_generator_forward.1} parent=11 // pred_check
          %p447 = pneg %p364
        $region70: #{csvnn_generator_forward.1} parent=11 // pred_check_branch
          %449 = sbr.rel (%p447) target = $region72
        $region71: #{csvnn_generator_forward.1} parent=11 // pred_region
          %s451 = ssub.s32 16, 16
          %452 = vsyncadd [#allocation3], %s451
          %s454 = sshll.u32 %s15, 4
          %s455 = int_to_ptr.vmem [resolvable:$true] %s454
          %457 = dma.vmem_to_smem %s455, 16, [#allocation2], [#allocation3]
        $region72: #{csvnn_generator_forward.1} parent=11 // pred_fallthru
          _
      $region12: #{csvnn_generator_forward.1} parent=5 // pred_fallthru
        _
      %p458 = scmp.lt.s32.totalorder %s23, 2
      // Predicated region
      $region73: #{csvnn_generator_forward.1} parent=5 // pred_check
        %p459 = pneg %p458
      $region74: #{csvnn_generator_forward.1} parent=5 // pred_check_branch
        %461 = sbr.rel (%p459) target = $region76
      $region75: #{csvnn_generator_forward.1} parent=5 // pred_region
        // Predicated region
        $region77: #{csvnn_generator_forward.1} parent=75 // pred_check
          %p462 = pneg %p43
        $region78: #{csvnn_generator_forward.1} parent=75 // pred_check_branch
          %464 = sbr.rel (%p462) target = $region80
        $region79: #{csvnn_generator_forward.1} parent=75 // pred_region
          %p465 = scmp.lt.s32.totalorder %s23, 1
          %s466 = scalar_select %p465, %s23, 1
          %s467 = smul.addr %s466, 4
          %s468 = scalar_lea.vmem %s0, %s467
        $region80: #{csvnn_generator_forward.1} parent=75 // pred_fallthru
          _
      $region76: #{csvnn_generator_forward.1} parent=5 // pred_fallthru
        _
      %p469 = scmp.le.s32.totalorder 1, %s23
      %p470 = scmp.lt.s32.totalorder %s23, 3
      %p471 = pnand %p469, %p470
      %p472 = pneg %p471
      // Predicated region
      $region81: #{csvnn_generator_forward.1} parent=5 // pred_check
        _
      $region82: #{csvnn_generator_forward.1} parent=5 // pred_check_branch
        %474 = sbr.rel (%p471) target = $region84
      $region83: #{csvnn_generator_forward.1} parent=5 // pred_region
        %s475 = ssub.s32 %s23, 1
        // Predicated region
        $region85: #{csvnn_generator_forward.1} parent=83 // pred_check
          %p476 = pneg %p364
        $region86: #{csvnn_generator_forward.1} parent=83 // pred_check_branch
          %478 = sbr.rel (%p476) target = $region88
        $region87: #{csvnn_generator_forward.1} parent=83 // pred_region
          %479 = dma.done [#allocation3], 16
        $region88: #{csvnn_generator_forward.1} parent=83 // pred_fallthru
          _
        %480 = sfence
        %p481 = scmp.lt.s32.totalorder %s28, 1
        %s482 = scalar_select %p481, %s28, 1
        %s483 = smul.addr %s482, 4
        %s484 = scalar_lea.vmem %s0, %s483
        %p485 = pneg %p49
        %p486 = pneg %p46
        %p487 = pneg %p70
        %p488 = pneg %p67
        %p489 = pneg %p91
        %p490 = pneg %p88
        %p491 = pneg %p112
        %p492 = pneg %p109
        %p493 = pneg %p133
        %p494 = pneg %p130
        %p495 = pneg %p154
        %p496 = pneg %p151
        %p497 = pneg %p175
        %p498 = pneg %p172
        %p499 = pneg %p196
        %p500 = pneg %p193
        %p501 = pneg %p217
        %p502 = pneg %p214
        %p503 = pneg %p238
        %p504 = pneg %p235
        %p505 = pneg %p259
        %p506 = pneg %p256
        %p507 = pneg %p280
        %p508 = pneg %p277
        %p509 = pneg %p301
        %p510 = pneg %p298
        %p511 = pneg %p322
        %p512 = pneg %p319
        %p513 = pneg %p343
        %p514 = pneg %p340
        %p515 = pneg %p364
        %p516 = pneg %p361
        %p517 = pneg %p390
        %p518 = pneg %p387
        %p519 = scmp.lt.s32.totalorder %s28, 1
        %s520 = scalar_select %p519, %s28, 1
        %s521 = smul.addr %s520, 8
        %s522 = scalar_lea.vmem %s16, %s521
        %p523 = scmp.lt.s32.totalorder %s28, 1
        %s524 = scalar_select %p523, %s28, 1
        %s525 = smul.addr %s524, 4
        %s526 = scalar_lea.vmem %s0, %s525
        %p527 = scmp.lt.s32.totalorder %s28, 1
        %s528 = scalar_select %p527, %s28, 1
        %s529 = smul.addr %s528, 8
        %s530 = scalar_lea.vmem %s16, %s529
        %v532 = vld [vmem:[%s526] sm:$0x7]
        %v533 = vld [vmem:[%s1] sm:$0xff]
        %v534 = vld [vmem:[%s1 + $0x8] sm:$0xff]
        %v535 = vld [vmem:[%s1 + $0x10] sm:$0xff]
        %v536 = vld [vmem:[%s1 + $0x18] sm:$0xff]
        %v537 = vld [vmem:[%s1 + $0x20] sm:$0xff]
        %v538 = vld [vmem:[%s1 + $0x28] sm:$0xff]
        %v539 = vld [vmem:[%s1 + $0x30] sm:$0xff]
        %v540 = vld [vmem:[%s1 + $0x38] sm:$0xff]
        %v541 = vld [vmem:[%s2] sm:$0xff]
        %v542 = vld [vmem:[%s2 + $0x8] sm:$0xff]
        %v543 = vld [vmem:[%s2 + $0x10] sm:$0xff]
        %v544 = vld [vmem:[%s2 + $0x18] sm:$0xff]
        %v545 = vld [vmem:[%s2 + $0x20] sm:$0xff]
        %v546 = vld [vmem:[%s2 + $0x28] sm:$0xff]
        %v547 = vld [vmem:[%s2 + $0x30] sm:$0xff]
        %v548 = vld [vmem:[%s2 + $0x38] sm:$0xff]
        %550 = vset.pattern.permute.xlu0 0
        %551 = vperm.xlu0 %550, %v541
        %v552 = vpop.permute.xlu0 %551
        %555 = vset.pattern.permute.xlu0 0
        %556 = vperm.xlu0 %555, %v542
        %v557 = vpop.permute.xlu0 %556
        %560 = vset.pattern.permute.xlu0 0
        %561 = vperm.xlu0 %560, %v543
        %v562 = vpop.permute.xlu0 %561
        %565 = vset.pattern.permute.xlu0 0
        %566 = vperm.xlu0 %565, %v544
        %v567 = vpop.permute.xlu0 %566
        %570 = vset.pattern.permute.xlu0 0
        %571 = vperm.xlu0 %570, %v545
        %v572 = vpop.permute.xlu0 %571
        %575 = vset.pattern.permute.xlu0 0
        %576 = vperm.xlu0 %575, %v546
        %v577 = vpop.permute.xlu0 %576
        %580 = vset.pattern.permute.xlu0 0
        %581 = vperm.xlu0 %580, %v547
        %v582 = vpop.permute.xlu0 %581
        %585 = vset.pattern.permute.xlu0 0
        %586 = vperm.xlu0 %585, %v548
        %v587 = vpop.permute.xlu0 %586
        %vm589 = vcmask 23552
        %v591 = vsel %vm589, %v533, 0
        %v594 = vsel %vm589, %v534, 0
        %v597 = vsel %vm589, %v535, 0
        %v600 = vsel %vm589, %v536, 0
        %v603 = vsel %vm589, %v537, 0
        %v606 = vsel %vm589, %v538, 0
        %v609 = vsel %vm589, %v539, 0
        %v612 = vsel %vm589, %v540, 0
        %vm614 = vcmask 1042432
        %v616 = vsel %vm614, %v532, 0
        %618 = vmatprep.subr.mxu0 0.0
        %619 = vmatpush1.msra.mxu0 %v616
        %620 = vmatprep.subr.mxu0 0.0
        %621 = vmatpush1.msra.mxu0 0.0
        %622 = vmatprep.subr.mxu0 0.0
        %623 = vmatpush1.msra.mxu0 0.0
        %624 = vmatprep.subr.mxu0 0.0
        %625 = vmatpush1.msra.mxu0 0.0
        %626 = vmatprep.subr.mxu0 0.0
        %627 = vmatpush1.msra.mxu0 0.0
        %628 = vmatprep.subr.mxu0 0.0
        %629 = vmatpush1.msra.mxu0 0.0
        %630 = vmatprep.subr.mxu0 0.0
        %631 = vmatpush1.msra.mxu0 0.0
        %632 = vmatprep.subr.mxu0 0.0
        %633 = vmatpush1.msra.mxu0 0.0
        %634 = vmatprep.subr.mxu0 0.0
        %635 = vmatpush1.msra.mxu0 0.0
        %636 = vmatprep.subr.mxu0 0.0
        %637 = vmatpush1.msra.mxu0 0.0
        %638 = vmatprep.subr.mxu0 0.0
        %639 = vmatpush1.msra.mxu0 0.0
        %640 = vmatprep.subr.mxu0 0.0
        %641 = vmatpush1.msra.mxu0 0.0
        %642 = vmatprep.subr.mxu0 0.0
        %643 = vmatpush1.msra.mxu0 0.0
        %644 = vmatprep.subr.mxu0 0.0
        %645 = vmatpush1.msra.mxu0 0.0
        %646 = vmatprep.subr.mxu0 0.0
        %647 = vmatpush1.msra.mxu0 0.0
        %648 = vmatprep.subr.mxu0 0.0
        %649 = vmatpush1.msra.mxu0 0.0
        %650 = vmatprep.subr.mxu0 0.0
        %651 = vmatpush1.msra.mxu0 0.0
        %652 = vmatprep.subr.mxu0 0.0
        %653 = vmatpush1.msra.mxu0 0.0
        %654 = vmatprep.subr.mxu0 0.0
        %655 = vmatpush1.msra.mxu0 0.0
        %656 = vmatprep.subr.mxu0 0.0
        %657 = vmatpush1.msra.mxu0 0.0
        %658 = vmatprep.subr.mxu0 0.0
        %659 = vmatpush1.msra.mxu0 0.0
        %660 = vmatprep.subr.mxu0 0.0
        %661 = vmatpush1.msra.mxu0 0.0
        %662 = vmatprep.subr.mxu0 0.0
        %663 = vmatpush1.msra.mxu0 0.0
        %664 = vmatprep.subr.mxu0 0.0
        %665 = vmatpush1.msra.mxu0 0.0
        %666 = vmatprep.subr.mxu0 0.0
        %667 = vmatpush1.msra.mxu0 0.0
        %668 = vmatprep.subr.mxu0 0.0
        %669 = vmatpush1.msra.mxu0 0.0
        %670 = vmatprep.subr.mxu0 0.0
        %671 = vmatpush1.msra.mxu0 0.0
        %672 = vmatprep.subr.mxu0 0.0
        %673 = vmatpush1.msra.mxu0 0.0
        %674 = vmatprep.subr.mxu0 0.0
        %675 = vmatpush1.msra.mxu0 0.0
        %676 = vmatprep.subr.mxu0 0.0
        %677 = vmatpush1.msra.mxu0 0.0
        %678 = vmatprep.subr.mxu0 0.0
        %679 = vmatpush1.msra.mxu0 0.0
        %680 = vmatprep.subr.mxu0 0.0
        %681 = vmatpush1.msra.mxu0 0.0
        %682 = vmatprep.mubr.f32.mxu0 0.0
        %683 = vmatmul.mubr.f32.gmra.mrb[0].mxu0 %v591
        %v684 = vpop.f32.mrb[0].mxu0
        %v685 = vadd.f32 %v552, %v684
        %v686 = vpop.f32.mrb[0].mxu0
        %687 = vmatprep.mubr.f32.mxu0 0.0
        %688 = vmatmul.mubr.f32.gmra.mrb[0].mxu0 %v594
        %v689 = vpop.f32.mrb[0].mxu0
        %v690 = vadd.f32 %v557, %v689
        %v691 = vpop.f32.mrb[0].mxu0
        %692 = vmatprep.mubr.f32.mxu0 0.0
        %693 = vmatmul.mubr.f32.gmra.mrb[0].mxu0 %v597
        %v694 = vpop.f32.mrb[0].mxu0
        %v695 = vadd.f32 %v562, %v694
        %v696 = vpop.f32.mrb[0].mxu0
        %697 = vmatprep.mubr.f32.mxu0 0.0
        %698 = vmatmul.mubr.f32.gmra.mrb[0].mxu0 %v600
        %v699 = vpop.f32.mrb[0].mxu0
        %v700 = vadd.f32 %v567, %v699
        %v701 = vpop.f32.mrb[0].mxu0
        %702 = vmatprep.mubr.f32.mxu0 0.0
        %703 = vmatmul.mubr.f32.gmra.mrb[0].mxu0 %v603
        %v704 = vpop.f32.mrb[0].mxu0
        %v705 = vadd.f32 %v572, %v704
        %v706 = vpop.f32.mrb[0].mxu0
        %707 = vmatprep.mubr.f32.mxu0 0.0
        %708 = vmatmul.mubr.f32.gmra.mrb[0].mxu0 %v606
        %v709 = vpop.f32.mrb[0].mxu0
        %v710 = vadd.f32 %v577, %v709
        %v711 = vpop.f32.mrb[0].mxu0
        %712 = vmatprep.mubr.f32.mxu0 0.0
        %713 = vmatmul.mubr.f32.gmra.mrb[0].mxu0 %v609
        %v714 = vpop.f32.mrb[0].mxu0
        %v715 = vadd.f32 %v582, %v714
        %v716 = vpop.f32.mrb[0].mxu0
        %717 = vmatprep.mubr.f32.mxu0 0.0
        %718 = vmatmul.mubr.f32.gmra.mrb[0].mxu0 %v612
        %v719 = vpop.f32.mrb[0].mxu0
        %v720 = vadd.f32 %v587, %v719
        %v721 = vpop.f32.mrb[0].mxu0
        %722 = vdwg.mxu0
        %s723 = sld [smem:[#allocation2]]
        %vm724 = vcmp.gt.f32.partialorder %v685, 0.0
        %vm725 = vcmp.gt.f32.partialorder %v690, 0.0
        %vm726 = vcmp.gt.f32.partialorder %v695, 0.0
        %vm727 = vcmp.gt.f32.partialorder %v700, 0.0
        %vm728 = vcmp.gt.f32.partialorder %v705, 0.0
        %vm729 = vcmp.gt.f32.partialorder %v710, 0.0
        %vm730 = vcmp.gt.f32.partialorder %v715, 0.0
        %vm731 = vcmp.gt.f32.partialorder %v720, 0.0
        %v732 = vstv %s723
        %v733 = vmul.f32 %v732, %v685
        %v734 = vmul.f32 %v732, %v690
        %v735 = vmul.f32 %v732, %v695
        %v736 = vmul.f32 %v732, %v700
        %v737 = vmul.f32 %v732, %v705
        %v738 = vmul.f32 %v732, %v710
        %v739 = vmul.f32 %v732, %v715
        %v740 = vmul.f32 %v732, %v720
        %v741 = vsel %vm724, %v685, %v733
        %v742 = vsel %vm725, %v690, %v734
        %v743 = vsel %vm726, %v695, %v735
        %v744 = vsel %vm727, %v700, %v736
        %v745 = vsel %vm728, %v705, %v737
        %v746 = vsel %vm729, %v710, %v738
        %v747 = vsel %vm730, %v715, %v739
        %v748 = vsel %vm731, %v720, %v740
        %v749 = vld [vmem:[%s3] sm:$0xf]
        %v750 = vld [vmem:[%s3 + $0x4] sm:$0xf]
        %v751 = vld [vmem:[%s3 + $0x8] sm:$0xf]
        %v752 = vld [vmem:[%s3 + $0xc] sm:$0xf]
        %v753 = vld [vmem:[%s3 + $0x10] sm:$0xf]
        %v754 = vld [vmem:[%s3 + $0x14] sm:$0xf]
        %v755 = vld [vmem:[%s3 + $0x18] sm:$0xf]
        %v756 = vld [vmem:[%s3 + $0x1c] sm:$0xf]
        %v757 = vpack.c.bf16 %v742, %v741
        %v758 = vpack.c.bf16 %v744, %v743
        %v759 = vpack.c.bf16 %v746, %v745
        %v760 = vpack.c.bf16 %v748, %v747
        %v761 = vld [vmem:[%s4] sm:$0xff]
        %v762 = vld [vmem:[%s4 + $0x8] sm:$0xff]
        %v763 = vld [vmem:[%s4 + $0x10] sm:$0xff]
        %v764 = vld [vmem:[%s4 + $0x18] sm:$0xff]
        %v765 = vld [vmem:[%s4 + $0x20] sm:$0xff]
        %v766 = vld [vmem:[%s4 + $0x28] sm:$0xff]
        %v767 = vld [vmem:[%s4 + $0x30] sm:$0xff]
        %v768 = vld [vmem:[%s4 + $0x38] sm:$0xff]
        %770 = vset.pattern.permute.xlu0 0
        %771 = vperm.xlu0 %770, %v761
        %v772 = vpop.permute.xlu0 %771
        %775 = vset.pattern.permute.xlu0 0
        %776 = vperm.xlu0 %775, %v762
        %v777 = vpop.permute.xlu0 %776
        %780 = vset.pattern.permute.xlu0 0
        %781 = vperm.xlu0 %780, %v763
        %v782 = vpop.permute.xlu0 %781
        %785 = vset.pattern.permute.xlu0 0
        %786 = vperm.xlu0 %785, %v764
        %v787 = vpop.permute.xlu0 %786
        %790 = vset.pattern.permute.xlu0 0
        %791 = vperm.xlu0 %790, %v765
        %v792 = vpop.permute.xlu0 %791
        %795 = vset.pattern.permute.xlu0 0
        %796 = vperm.xlu0 %795, %v766
        %v797 = vpop.permute.xlu0 %796
        %800 = vset.pattern.permute.xlu0 0
        %801 = vperm.xlu0 %800, %v767
        %v802 = vpop.permute.xlu0 %801
        %805 = vset.pattern.permute.xlu0 0
        %806 = vperm.xlu0 %805, %v768
        %v807 = vpop.permute.xlu0 %806
        %v817 = vunpack.c.l.b16 %v749
        %v818 = vunpack.c.l.b16 %v750
        %v819 = vunpack.c.l.b16 %v751
        %v820 = vunpack.c.l.b16 %v752
        %v821 = vunpack.c.l.b16 %v753
        %v822 = vunpack.c.l.b16 %v754
        %v823 = vunpack.c.l.b16 %v755
        %v824 = vunpack.c.l.b16 %v756
        %v825 = vpack.c.b16 %v818, %v817
        %v826 = vpack.c.b16 %v820, %v819
        %v827 = vpack.c.b16 %v822, %v821
        %v828 = vpack.c.b16 %v824, %v823
        %vm829 = vcmask 523264
        %v831 = vsel %vm829, %v825, 0
        %v834 = vsel %vm829, %v826, 0
        %v837 = vsel %vm829, %v827, 0
        %v840 = vsel %vm829, %v828, 0
        %842 = vmatprep.subr.bf16.mxu0 0
        %843 = vmatpush1.bf16.msra.mxu0 %v757
        %844 = vmatprep.subr.bf16.mxu0 0
        %845 = vmatpush1.bf16.msra.mxu0 %v758
        %846 = vmatprep.subr.bf16.mxu0 0
        %847 = vmatpush1.bf16.msra.mxu0 %v759
        %848 = vmatprep.subr.bf16.mxu0 0
        %849 = vmatpush1.bf16.msra.mxu0 %v760
        %850 = vmatprep.subr.bf16.mxu0 0
        %851 = vmatpush1.bf16.msra.mxu0 0
        %852 = vmatprep.subr.bf16.mxu0 0
        %853 = vmatpush1.bf16.msra.mxu0 0
        %854 = vmatprep.subr.bf16.mxu0 0
        %855 = vmatpush1.bf16.msra.mxu0 0
        %856 = vmatprep.subr.bf16.mxu0 0
        %857 = vmatpush1.bf16.msra.mxu0 0
        %858 = vmatprep.subr.bf16.mxu0 0
        %859 = vmatpush1.bf16.msra.mxu0 0
        %860 = vmatprep.subr.bf16.mxu0 0
        %861 = vmatpush1.bf16.msra.mxu0 0
        %862 = vmatprep.subr.bf16.mxu0 0
        %863 = vmatpush1.bf16.msra.mxu0 0
        %864 = vmatprep.subr.bf16.mxu0 0
        %865 = vmatpush1.bf16.msra.mxu0 0
        %866 = vmatprep.subr.bf16.mxu0 0
        %867 = vmatpush1.bf16.msra.mxu0 0
        %868 = vmatprep.subr.bf16.mxu0 0
        %869 = vmatpush1.bf16.msra.mxu0 0
        %870 = vmatprep.subr.bf16.mxu0 0
        %871 = vmatpush1.bf16.msra.mxu0 0
        %872 = vmatprep.subr.bf16.mxu0 0
        %873 = vmatpush1.bf16.msra.mxu0 0
        %874 = vmatprep.mubr.bf16.mxu0 0
        %875 = vmatmul.mubr.bf16.gmra.mrb[0].mxu0 %v831
        %v876 = vpop.f32.mrb[0].mxu0
        %v877 = vadd.f32 %v772, %v876
        %v878 = vpop.f32.mrb[0].mxu0
        %v879 = vpop.f32.mrb[0].mxu0
        %v880 = vadd.f32 %v777, %v879
        %v881 = vpop.f32.mrb[0].mxu0
        %882 = vmatprep.mubr.bf16.mxu0 0
        %883 = vmatmul.mubr.bf16.gmra.mrb[0].mxu0 %v834
        %v884 = vpop.f32.mrb[0].mxu0
        %v885 = vadd.f32 %v782, %v884
        %v886 = vpop.f32.mrb[0].mxu0
        %v887 = vpop.f32.mrb[0].mxu0
        %v888 = vadd.f32 %v787, %v887
        %v889 = vpop.f32.mrb[0].mxu0
        %890 = vmatprep.mubr.bf16.mxu0 0
        %891 = vmatmul.mubr.bf16.gmra.mrb[0].mxu0 %v837
        %v892 = vpop.f32.mrb[0].mxu0
        %v893 = vadd.f32 %v792, %v892
        %v894 = vpop.f32.mrb[0].mxu0
        %v895 = vpop.f32.mrb[0].mxu0
        %v896 = vadd.f32 %v797, %v895
        %v897 = vpop.f32.mrb[0].mxu0
        %898 = vmatprep.mubr.bf16.mxu0 0
        %899 = vmatmul.mubr.bf16.gmra.mrb[0].mxu0 %v840
        %v900 = vpop.f32.mrb[0].mxu0
        %v901 = vadd.f32 %v802, %v900
        %v902 = vpop.f32.mrb[0].mxu0
        %v903 = vpop.f32.mrb[0].mxu0
        %v904 = vadd.f32 %v807, %v903
        %v905 = vpop.f32.mrb[0].mxu0
        %906 = vdwg.mxu0
        %s907 = sld [smem:[#allocation2 + $0x1]]
        %vm908 = vcmp.gt.f32.partialorder %v877, 0.0
        %vm909 = vcmp.gt.f32.partialorder %v880, 0.0
        %vm910 = vcmp.gt.f32.partialorder %v885, 0.0
        %vm911 = vcmp.gt.f32.partialorder %v888, 0.0
        %vm912 = vcmp.gt.f32.partialorder %v893, 0.0
        %vm913 = vcmp.gt.f32.partialorder %v896, 0.0
        %vm914 = vcmp.gt.f32.partialorder %v901, 0.0
        %vm915 = vcmp.gt.f32.partialorder %v904, 0.0
        %v916 = vstv %s907
        %v917 = vmul.f32 %v916, %v877
        %v918 = vmul.f32 %v916, %v880
        %v919 = vmul.f32 %v916, %v885
        %v920 = vmul.f32 %v916, %v888
        %v921 = vmul.f32 %v916, %v893
        %v922 = vmul.f32 %v916, %v896
        %v923 = vmul.f32 %v916, %v901
        %v924 = vmul.f32 %v916, %v904
        %v925 = vsel %vm908, %v877, %v917
        %v926 = vsel %vm909, %v880, %v918
        %v927 = vsel %vm910, %v885, %v919
        %v928 = vsel %vm911, %v888, %v920
        %v929 = vsel %vm912, %v893, %v921
        %v930 = vsel %vm913, %v896, %v922
        %v931 = vsel %vm914, %v901, %v923
        %v932 = vsel %vm915, %v904, %v924
        %v933 = vld [vmem:[%s5] sm:$0xff]
        %v934 = vld [vmem:[%s5 + $0x8] sm:$0xff]
        %v935 = vld [vmem:[%s5 + $0x10] sm:$0xff]
        %v936 = vld [vmem:[%s5 + $0x18] sm:$0xff]
        %v937 = vld [vmem:[%s5 + $0x20] sm:$0xff]
        %v938 = vld [vmem:[%s5 + $0x28] sm:$0xff]
        %v939 = vld [vmem:[%s5 + $0x30] sm:$0xff]
        %v940 = vld [vmem:[%s5 + $0x38] sm:$0xff]
        %v941 = vld [vmem:[%s6] sm:$0xff]
        %v942 = vld [vmem:[%s6 + $0x8] sm:$0xff]
        %v943 = vld [vmem:[%s6 + $0x10] sm:$0xff]
        %v944 = vld [vmem:[%s6 + $0x18] sm:$0xff]
        %v945 = vld [vmem:[%s6 + $0x20] sm:$0xff]
        %v946 = vld [vmem:[%s6 + $0x28] sm:$0xff]
        %v947 = vld [vmem:[%s6 + $0x30] sm:$0xff]
        %v948 = vld [vmem:[%s6 + $0x38] sm:$0xff]
        %950 = vset.pattern.permute.xlu0 0
        %951 = vperm.xlu0 %950, %v941
        %v952 = vpop.permute.xlu0 %951
        %955 = vset.pattern.permute.xlu0 0
        %956 = vperm.xlu0 %955, %v942
        %v957 = vpop.permute.xlu0 %956
        %960 = vset.pattern.permute.xlu0 0
        %961 = vperm.xlu0 %960, %v943
        %v962 = vpop.permute.xlu0 %961
        %965 = vset.pattern.permute.xlu0 0
        %966 = vperm.xlu0 %965, %v944
        %v967 = vpop.permute.xlu0 %966
        %970 = vset.pattern.permute.xlu0 0
        %971 = vperm.xlu0 %970, %v945
        %v972 = vpop.permute.xlu0 %971
        %975 = vset.pattern.permute.xlu0 0
        %976 = vperm.xlu0 %975, %v946
        %v977 = vpop.permute.xlu0 %976
        %980 = vset.pattern.permute.xlu0 0
        %981 = vperm.xlu0 %980, %v947
        %v982 = vpop.permute.xlu0 %981
        %985 = vset.pattern.permute.xlu0 0
        %986 = vperm.xlu0 %985, %v948
        %v987 = vpop.permute.xlu0 %986
        %v990 = vsel %vm589, %v933, 0
        %v993 = vsel %vm589, %v934, 0
        %v996 = vsel %vm589, %v935, 0
        %v999 = vsel %vm589, %v936, 0
        %v1002 = vsel %vm589, %v937, 0
        %v1005 = vsel %vm589, %v938, 0
        %v1008 = vsel %vm589, %v939, 0
        %v1011 = vsel %vm589, %v940, 0
        %1013 = vmatprep.subr.mxu0 0.0
        %1014 = vmatpush1.msra.mxu0 %v616
        %1015 = vmatprep.subr.mxu0 0.0
        %1016 = vmatpush1.msra.mxu0 0.0
        %1017 = vmatprep.subr.mxu0 0.0
        %1018 = vmatpush1.msra.mxu0 0.0
        %1019 = vmatprep.subr.mxu0 0.0
        %1020 = vmatpush1.msra.mxu0 0.0
        %1021 = vmatprep.subr.mxu0 0.0
        %1022 = vmatpush1.msra.mxu0 0.0
        %1023 = vmatprep.subr.mxu0 0.0
        %1024 = vmatpush1.msra.mxu0 0.0
        %1025 = vmatprep.subr.mxu0 0.0
        %1026 = vmatpush1.msra.mxu0 0.0
        %1027 = vmatprep.subr.mxu0 0.0
        %1028 = vmatpush1.msra.mxu0 0.0
        %1029 = vmatprep.subr.mxu0 0.0
        %1030 = vmatpush1.msra.mxu0 0.0
        %1031 = vmatprep.subr.mxu0 0.0
        %1032 = vmatpush1.msra.mxu0 0.0
        %1033 = vmatprep.subr.mxu0 0.0
        %1034 = vmatpush1.msra.mxu0 0.0
        %1035 = vmatprep.subr.mxu0 0.0
        %1036 = vmatpush1.msra.mxu0 0.0
        %1037 = vmatprep.subr.mxu0 0.0
        %1038 = vmatpush1.msra.mxu0 0.0
        %1039 = vmatprep.subr.mxu0 0.0
        %1040 = vmatpush1.msra.mxu0 0.0
        %1041 = vmatprep.subr.mxu0 0.0
        %1042 = vmatpush1.msra.mxu0 0.0
        %1043 = vmatprep.subr.mxu0 0.0
        %1044 = vmatpush1.msra.mxu0 0.0
        %1045 = vmatprep.subr.mxu0 0.0
        %1046 = vmatpush1.msra.mxu0 0.0
        %1047 = vmatprep.subr.mxu0 0.0
        %1048 = vmatpush1.msra.mxu0 0.0
        %1049 = vmatprep.subr.mxu0 0.0
        %1050 = vmatpush1.msra.mxu0 0.0
        %1051 = vmatprep.subr.mxu0 0.0
        %1052 = vmatpush1.msra.mxu0 0.0
        %1053 = vmatprep.subr.mxu0 0.0
        %1054 = vmatpush1.msra.mxu0 0.0
        %1055 = vmatprep.subr.mxu0 0.0
        %1056 = vmatpush1.msra.mxu0 0.0
        %1057 = vmatprep.subr.mxu0 0.0
        %1058 = vmatpush1.msra.mxu0 0.0
        %1059 = vmatprep.subr.mxu0 0.0
        %1060 = vmatpush1.msra.mxu0 0.0
        %1061 = vmatprep.subr.mxu0 0.0
        %1062 = vmatpush1.msra.mxu0 0.0
        %1063 = vmatprep.subr.mxu0 0.0
        %1064 = vmatpush1.msra.mxu0 0.0
        %1065 = vmatprep.subr.mxu0 0.0
        %1066 = vmatpush1.msra.mxu0 0.0
        %1067 = vmatprep.subr.mxu0 0.0
        %1068 = vmatpush1.msra.mxu0 0.0
        %1069 = vmatprep.subr.mxu0 0.0
        %1070 = vmatpush1.msra.mxu0 0.0
        %1071 = vmatprep.subr.mxu0 0.0
        %1072 = vmatpush1.msra.mxu0 0.0
        %1073 = vmatprep.subr.mxu0 0.0
        %1074 = vmatpush1.msra.mxu0 0.0
        %1075 = vmatprep.subr.mxu0 0.0
        %1076 = vmatpush1.msra.mxu0 0.0
        %1077 = vmatprep.mubr.f32.mxu0 0.0
        %1078 = vmatmul.mubr.f32.gmra.mrb[0].mxu0 %v990
        %v1079 = vpop.f32.mrb[0].mxu0
        %v1080 = vadd.f32 %v952, %v1079
        %v1081 = vpop.f32.mrb[0].mxu0
        %1082 = vmatprep.mubr.f32.mxu0 0.0
        %1083 = vmatmul.mubr.f32.gmra.mrb[0].mxu0 %v993
        %v1084 = vpop.f32.mrb[0].mxu0
        %v1085 = vadd.f32 %v957, %v1084
        %v1086 = vpop.f32.mrb[0].mxu0
        %1087 = vmatprep.mubr.f32.mxu0 0.0
        %1088 = vmatmul.mubr.f32.gmra.mrb[0].mxu0 %v996
        %v1089 = vpop.f32.mrb[0].mxu0
        %v1090 = vadd.f32 %v962, %v1089
        %v1091 = vpop.f32.mrb[0].mxu0
        %1092 = vmatprep.mubr.f32.mxu0 0.0
        %1093 = vmatmul.mubr.f32.gmra.mrb[0].mxu0 %v999
        %v1094 = vpop.f32.mrb[0].mxu0
        %v1095 = vadd.f32 %v967, %v1094
        %v1096 = vpop.f32.mrb[0].mxu0
        %1097 = vmatprep.mubr.f32.mxu0 0.0
        %1098 = vmatmul.mubr.f32.gmra.mrb[0].mxu0 %v1002
        %v1099 = vpop.f32.mrb[0].mxu0
        %v1100 = vadd.f32 %v972, %v1099
        %v1101 = vpop.f32.mrb[0].mxu0
        %1102 = vmatprep.mubr.f32.mxu0 0.0
        %1103 = vmatmul.mubr.f32.gmra.mrb[0].mxu0 %v1005
        %v1104 = vpop.f32.mrb[0].mxu0
        %v1105 = vadd.f32 %v977, %v1104
        %v1106 = vpop.f32.mrb[0].mxu0
        %1107 = vmatprep.mubr.f32.mxu0 0.0
        %1108 = vmatmul.mubr.f32.gmra.mrb[0].mxu0 %v1008
        %v1109 = vpop.f32.mrb[0].mxu0
        %v1110 = vadd.f32 %v982, %v1109
        %v1111 = vpop.f32.mrb[0].mxu0
        %1112 = vmatprep.mubr.f32.mxu0 0.0
        %1113 = vmatmul.mubr.f32.gmra.mrb[0].mxu0 %v1011
        %v1114 = vpop.f32.mrb[0].mxu0
        %v1115 = vadd.f32 %v987, %v1114
        %v1116 = vpop.f32.mrb[0].mxu0
        %1117 = vdwg.mxu0
        %v1118 = vadd.f32 %v925, %v1080
        %v1119 = vadd.f32 %v926, %v1085
        %v1120 = vadd.f32 %v927, %v1090
        %v1121 = vadd.f32 %v928, %v1095
        %v1122 = vadd.f32 %v929, %v1100
        %v1123 = vadd.f32 %v930, %v1105
        %v1124 = vadd.f32 %v931, %v1110
        %v1125 = vadd.f32 %v932, %v1115
        %s1126 = sld [smem:[#allocation2 + $0x2]]
        %vm1127 = vcmp.gt.f32.partialorder %v1118, 0.0
        %vm1128 = vcmp.gt.f32.partialorder %v1119, 0.0
        %vm1129 = vcmp.gt.f32.partialorder %v1120, 0.0
        %vm1130 = vcmp.gt.f32.partialorder %v1121, 0.0
        %vm1131 = vcmp.gt.f32.partialorder %v1122, 0.0
        %vm1132 = vcmp.gt.f32.partialorder %v1123, 0.0
        %vm1133 = vcmp.gt.f32.partialorder %v1124, 0.0
        %vm1134 = vcmp.gt.f32.partialorder %v1125, 0.0
        %v1135 = vstv %s1126
        %v1136 = vmul.f32 %v1135, %v1118
        %v1137 = vmul.f32 %v1135, %v1119
        %v1138 = vmul.f32 %v1135, %v1120
        %v1139 = vmul.f32 %v1135, %v1121
        %v1140 = vmul.f32 %v1135, %v1122
        %v1141 = vmul.f32 %v1135, %v1123
        %v1142 = vmul.f32 %v1135, %v1124
        %v1143 = vmul.f32 %v1135, %v1125
        %v1144 = vsel %vm1127, %v1118, %v1136
        %v1145 = vsel %vm1128, %v1119, %v1137
        %v1146 = vsel %vm1129, %v1120, %v1138
        %v1147 = vsel %vm1130, %v1121, %v1139
        %v1148 = vsel %vm1131, %v1122, %v1140
        %v1149 = vsel %vm1132, %v1123, %v1141
        %v1150 = vsel %vm1133, %v1124, %v1142
        %v1151 = vsel %vm1134, %v1125, %v1143
        %v1152 = vlaneseq
        %v1153 = vand.u32 %v1152, 127
        %s1154 = sld [smem:[#allocation2 + $0x3]]
        %s1155 = sld [smem:[#allocation2 + $0x4]]
        %s1156 = sld [smem:[#allocation2 + $0x5]]
        %v1157 = vld [vmem:[%s7] sm:$0xf]
        %v1158 = vld [vmem:[%s7 + $0x4] sm:$0xf]
        %v1159 = vld [vmem:[%s7 + $0x8] sm:$0xf]
        %v1160 = vld [vmem:[%s7 + $0xc] sm:$0xf]
        %v1161 = vld [vmem:[%s7 + $0x10] sm:$0xf]
        %v1162 = vld [vmem:[%s7 + $0x14] sm:$0xf]
        %v1163 = vld [vmem:[%s7 + $0x18] sm:$0xf]
        %v1164 = vld [vmem:[%s7 + $0x1c] sm:$0xf]
        %1165 = vrot.lane.b32.xlu0 %v1144, 1
        %v1166 = vpop.permute.xlu0 %1165
        %1167 = vrot.lane.b32.xlu0 %v1145, 1
        %v1168 = vpop.permute.xlu0 %1167
        %1169 = vrot.lane.b32.xlu0 %v1146, 1
        %v1170 = vpop.permute.xlu0 %1169
        %1171 = vrot.lane.b32.xlu0 %v1147, 1
        %v1172 = vpop.permute.xlu0 %1171
        %1173 = vrot.lane.b32.xlu0 %v1148, 1
        %v1174 = vpop.permute.xlu0 %1173
        %1175 = vrot.lane.b32.xlu0 %v1149, 1
        %v1176 = vpop.permute.xlu0 %1175
        %1177 = vrot.lane.b32.xlu0 %v1150, 1
        %v1178 = vpop.permute.xlu0 %1177
        %1179 = vrot.lane.b32.xlu0 %v1151, 1
        %v1180 = vpop.permute.xlu0 %1179
        %vm1181 = vcmp.ge.s32.totalorder %v1153, 1
        %v1182 = vsel %vm1181, %v1166, 0.0
        %v1183 = vsel %vm1181, %v1168, 0.0
        %v1184 = vsel %vm1181, %v1170, 0.0
        %v1185 = vsel %vm1181, %v1172, 0.0
        %v1186 = vsel %vm1181, %v1174, 0.0
        %v1187 = vsel %vm1181, %v1176, 0.0
        %v1188 = vsel %vm1181, %v1178, 0.0
        %v1189 = vsel %vm1181, %v1180, 0.0
        %v1190 = vpack.c.bf16 %v1183, %v1182
        %v1191 = vpack.c.bf16 %v1185, %v1184
        %v1192 = vpack.c.bf16 %v1187, %v1186
        %v1193 = vpack.c.bf16 %v1189, %v1188
        %v1194 = vpack.c.bf16 %v1145, %v1144
        %v1195 = vpack.c.bf16 %v1147, %v1146
        %v1196 = vpack.c.bf16 %v1149, %v1148
        %v1197 = vpack.c.bf16 %v1151, %v1150
        %v1198 = vld [vmem:[%s8] sm:$0xff]
        %v1199 = vld [vmem:[%s8 + $0x8] sm:$0xff]
        %v1200 = vld [vmem:[%s8 + $0x10] sm:$0xff]
        %v1201 = vld [vmem:[%s8 + $0x18] sm:$0xff]
        %v1202 = vld [vmem:[%s8 + $0x20] sm:$0xff]
        %v1203 = vld [vmem:[%s8 + $0x28] sm:$0xff]
        %v1204 = vld [vmem:[%s8 + $0x30] sm:$0xff]
        %v1205 = vld [vmem:[%s8 + $0x38] sm:$0xff]
        %1207 = vset.pattern.permute.xlu0 0
        %1208 = vperm.xlu0 %1207, %v1198
        %v1209 = vpop.permute.xlu0 %1208
        %1212 = vset.pattern.permute.xlu0 0
        %1213 = vperm.xlu0 %1212, %v1199
        %v1214 = vpop.permute.xlu0 %1213
        %1217 = vset.pattern.permute.xlu0 0
        %1218 = vperm.xlu0 %1217, %v1200
        %v1219 = vpop.permute.xlu0 %1218
        %1222 = vset.pattern.permute.xlu0 0
        %1223 = vperm.xlu0 %1222, %v1201
        %v1224 = vpop.permute.xlu0 %1223
        %1227 = vset.pattern.permute.xlu0 0
        %1228 = vperm.xlu0 %1227, %v1202
        %v1229 = vpop.permute.xlu0 %1228
        %1232 = vset.pattern.permute.xlu0 0
        %1233 = vperm.xlu0 %1232, %v1203
        %v1234 = vpop.permute.xlu0 %1233
        %1237 = vset.pattern.permute.xlu0 0
        %1238 = vperm.xlu0 %1237, %v1204
        %v1239 = vpop.permute.xlu0 %1238
        %1242 = vset.pattern.permute.xlu0 0
        %1243 = vperm.xlu0 %1242, %v1205
        %v1244 = vpop.permute.xlu0 %1243
        %v1254 = vunpack.c.l.b16 %v1157
        %v1255 = vunpack.c.l.b16 %v1158
        %v1256 = vunpack.c.l.b16 %v1159
        %v1257 = vunpack.c.l.b16 %v1160
        %v1258 = vunpack.c.l.b16 %v1161
        %v1259 = vunpack.c.l.b16 %v1162
        %v1260 = vunpack.c.l.b16 %v1163
        %v1261 = vunpack.c.l.b16 %v1164
        %v1262 = vpack.c.b16 %v1255, %v1254
        %v1263 = vpack.c.b16 %v1257, %v1256
        %v1264 = vpack.c.b16 %v1259, %v1258
        %v1265 = vpack.c.b16 %v1261, %v1260
        %1270 = vmatprep.subr.bf16.mxu0 0
        %1271 = vmatpush1.bf16.msra.mxu0 %v1190
        %1272 = vmatprep.subr.bf16.mxu0 0
        %1273 = vmatpush1.bf16.msra.mxu0 %v1191
        %1274 = vmatprep.subr.bf16.mxu0 0
        %1275 = vmatpush1.bf16.msra.mxu0 %v1192
        %1276 = vmatprep.subr.bf16.mxu0 0
        %1277 = vmatpush1.bf16.msra.mxu0 %v1193
        %1278 = vmatprep.subr.bf16.mxu0 0
        %1279 = vmatpush1.bf16.msra.mxu0 %v1194
        %1280 = vmatprep.subr.bf16.mxu0 0
        %1281 = vmatpush1.bf16.msra.mxu0 %v1195
        %1282 = vmatprep.subr.bf16.mxu0 0
        %1283 = vmatpush1.bf16.msra.mxu0 %v1196
        %1284 = vmatprep.subr.bf16.mxu0 0
        %1285 = vmatpush1.bf16.msra.mxu0 %v1197
        %1286 = vmatprep.subr.bf16.mxu0 0
        %1287 = vmatpush1.bf16.msra.mxu0 0
        %1288 = vmatprep.subr.bf16.mxu0 0
        %1289 = vmatpush1.bf16.msra.mxu0 0
        %1290 = vmatprep.subr.bf16.mxu0 0
        %1291 = vmatpush1.bf16.msra.mxu0 0
        %1292 = vmatprep.subr.bf16.mxu0 0
        %1293 = vmatpush1.bf16.msra.mxu0 0
        %1294 = vmatprep.subr.bf16.mxu0 0
        %1295 = vmatpush1.bf16.msra.mxu0 0
        %1296 = vmatprep.subr.bf16.mxu0 0
        %1297 = vmatpush1.bf16.msra.mxu0 0
        %1298 = vmatprep.subr.bf16.mxu0 0
        %1299 = vmatpush1.bf16.msra.mxu0 0
        %1300 = vmatprep.subr.bf16.mxu0 0
        %1301 = vmatpush1.bf16.msra.mxu0 0
        %1302 = vmatprep.mubr.bf16.mxu0 0
        %1303 = vmatmul.mubr.bf16.gmra.mrb[0].mxu0 %v1262
        %v1304 = vpop.f32.mrb[0].mxu0
        %v1305 = vadd.f32 %v1209, %v1304
        %v1306 = vpop.f32.mrb[0].mxu0
        %v1307 = vpop.f32.mrb[0].mxu0
        %v1308 = vadd.f32 %v1214, %v1307
        %v1309 = vpop.f32.mrb[0].mxu0
        %1310 = vmatprep.mubr.bf16.mxu0 0
        %1311 = vmatmul.mubr.bf16.gmra.mrb[0].mxu0 %v1263
        %v1312 = vpop.f32.mrb[0].mxu0
        %v1313 = vadd.f32 %v1219, %v1312
        %v1314 = vpop.f32.mrb[0].mxu0
        %v1315 = vpop.f32.mrb[0].mxu0
        %v1316 = vadd.f32 %v1224, %v1315
        %v1317 = vpop.f32.mrb[0].mxu0
        %1318 = vmatprep.mubr.bf16.mxu0 0
        %1319 = vmatmul.mubr.bf16.gmra.mrb[0].mxu0 %v1264
        %v1320 = vpop.f32.mrb[0].mxu0
        %v1321 = vadd.f32 %v1229, %v1320
        %v1322 = vpop.f32.mrb[0].mxu0
        %v1323 = vpop.f32.mrb[0].mxu0
        %v1324 = vadd.f32 %v1234, %v1323
        %v1325 = vpop.f32.mrb[0].mxu0
        %1326 = vmatprep.mubr.bf16.mxu0 0
        %1327 = vmatmul.mubr.bf16.gmra.mrb[0].mxu0 %v1265
        %v1328 = vpop.f32.mrb[0].mxu0
        %v1329 = vadd.f32 %v1239, %v1328
        %v1330 = vpop.f32.mrb[0].mxu0
        %v1331 = vpop.f32.mrb[0].mxu0
        %v1332 = vadd.f32 %v1244, %v1331
        %v1333 = vpop.f32.mrb[0].mxu0
        %1334 = vdwg.mxu0
        %vm1335 = vcmp.gt.f32.partialorder %v1305, 0.0
        %vm1336 = vcmp.gt.f32.partialorder %v1308, 0.0
        %vm1337 = vcmp.gt.f32.partialorder %v1313, 0.0
        %vm1338 = vcmp.gt.f32.partialorder %v1316, 0.0
        %vm1339 = vcmp.gt.f32.partialorder %v1321, 0.0
        %vm1340 = vcmp.gt.f32.partialorder %v1324, 0.0
        %vm1341 = vcmp.gt.f32.partialorder %v1329, 0.0
        %vm1342 = vcmp.gt.f32.partialorder %v1332, 0.0
        %v1343 = vstv %s1154
        %v1344 = vmul.f32 %v1343, %v1305
        %v1345 = vmul.f32 %v1343, %v1308
        %v1346 = vmul.f32 %v1343, %v1313
        %v1347 = vmul.f32 %v1343, %v1316
        %v1348 = vmul.f32 %v1343, %v1321
        %v1349 = vmul.f32 %v1343, %v1324
        %v1350 = vmul.f32 %v1343, %v1329
        %v1351 = vmul.f32 %v1343, %v1332
        %v1352 = vsel %vm1335, %v1305, %v1344
        %v1353 = vsel %vm1336, %v1308, %v1345
        %v1354 = vsel %vm1337, %v1313, %v1346
        %v1355 = vsel %vm1338, %v1316, %v1347
        %v1356 = vsel %vm1339, %v1321, %v1348
        %v1357 = vsel %vm1340, %v1324, %v1349
        %v1358 = vsel %vm1341, %v1329, %v1350
        %v1359 = vsel %vm1342, %v1332, %v1351
        %s1360 = scalar_lea.vmem %s7, 32
        %v1361 = vld [vmem:[%s1360] sm:$0xf]
        %v1362 = vld [vmem:[%s1360 + $0x4] sm:$0xf]
        %v1363 = vld [vmem:[%s1360 + $0x8] sm:$0xf]
        %v1364 = vld [vmem:[%s1360 + $0xc] sm:$0xf]
        %v1365 = vld [vmem:[%s1360 + $0x10] sm:$0xf]
        %v1366 = vld [vmem:[%s1360 + $0x14] sm:$0xf]
        %v1367 = vld [vmem:[%s1360 + $0x18] sm:$0xf]
        %v1368 = vld [vmem:[%s1360 + $0x1c] sm:$0xf]
        %1369 = vrot.lane.b32.xlu0 %v1352, 1
        %v1370 = vpop.permute.xlu0 %1369
        %1371 = vrot.lane.b32.xlu0 %v1353, 1
        %v1372 = vpop.permute.xlu0 %1371
        %1373 = vrot.lane.b32.xlu0 %v1354, 1
        %v1374 = vpop.permute.xlu0 %1373
        %1375 = vrot.lane.b32.xlu0 %v1355, 1
        %v1376 = vpop.permute.xlu0 %1375
        %1377 = vrot.lane.b32.xlu0 %v1356, 1
        %v1378 = vpop.permute.xlu0 %1377
        %1379 = vrot.lane.b32.xlu0 %v1357, 1
        %v1380 = vpop.permute.xlu0 %1379
        %1381 = vrot.lane.b32.xlu0 %v1358, 1
        %v1382 = vpop.permute.xlu0 %1381
        %1383 = vrot.lane.b32.xlu0 %v1359, 1
        %v1384 = vpop.permute.xlu0 %1383
        %v1385 = vsel %vm1181, %v1370, 0.0
        %v1386 = vsel %vm1181, %v1372, 0.0
        %v1387 = vsel %vm1181, %v1374, 0.0
        %v1388 = vsel %vm1181, %v1376, 0.0
        %v1389 = vsel %vm1181, %v1378, 0.0
        %v1390 = vsel %vm1181, %v1380, 0.0
        %v1391 = vsel %vm1181, %v1382, 0.0
        %v1392 = vsel %vm1181, %v1384, 0.0
        %v1393 = vpack.c.bf16 %v1386, %v1385
        %v1394 = vpack.c.bf16 %v1388, %v1387
        %v1395 = vpack.c.bf16 %v1390, %v1389
        %v1396 = vpack.c.bf16 %v1392, %v1391
        %v1397 = vpack.c.bf16 %v1353, %v1352
        %v1398 = vpack.c.bf16 %v1355, %v1354
        %v1399 = vpack.c.bf16 %v1357, %v1356
        %v1400 = vpack.c.bf16 %v1359, %v1358
        %s1401 = scalar_lea.vmem %s8, 64
        %v1402 = vld [vmem:[%s1401] sm:$0xff]
        %v1403 = vld [vmem:[%s1401 + $0x8] sm:$0xff]
        %v1404 = vld [vmem:[%s1401 + $0x10] sm:$0xff]
        %v1405 = vld [vmem:[%s1401 + $0x18] sm:$0xff]
        %v1406 = vld [vmem:[%s1401 + $0x20] sm:$0xff]
        %v1407 = vld [vmem:[%s1401 + $0x28] sm:$0xff]
        %v1408 = vld [vmem:[%s1401 + $0x30] sm:$0xff]
        %v1409 = vld [vmem:[%s1401 + $0x38] sm:$0xff]
        %1411 = vset.pattern.permute.xlu0 0
        %1412 = vperm.xlu0 %1411, %v1402
        %v1413 = vpop.permute.xlu0 %1412
        %1416 = vset.pattern.permute.xlu0 0
        %1417 = vperm.xlu0 %1416, %v1403
        %v1418 = vpop.permute.xlu0 %1417
        %1421 = vset.pattern.permute.xlu0 0
        %1422 = vperm.xlu0 %1421, %v1404
        %v1423 = vpop.permute.xlu0 %1422
        %1426 = vset.pattern.permute.xlu0 0
        %1427 = vperm.xlu0 %1426, %v1405
        %v1428 = vpop.permute.xlu0 %1427
        %1431 = vset.pattern.permute.xlu0 0
        %1432 = vperm.xlu0 %1431, %v1406
        %v1433 = vpop.permute.xlu0 %1432
        %1436 = vset.pattern.permute.xlu0 0
        %1437 = vperm.xlu0 %1436, %v1407
        %v1438 = vpop.permute.xlu0 %1437
        %1441 = vset.pattern.permute.xlu0 0
        %1442 = vperm.xlu0 %1441, %v1408
        %v1443 = vpop.permute.xlu0 %1442
        %1446 = vset.pattern.permute.xlu0 0
        %1447 = vperm.xlu0 %1446, %v1409
        %v1448 = vpop.permute.xlu0 %1447
        %v1458 = vunpack.c.l.b16 %v1361
        %v1459 = vunpack.c.l.b16 %v1362
        %v1460 = vunpack.c.l.b16 %v1363
        %v1461 = vunpack.c.l.b16 %v1364
        %v1462 = vunpack.c.l.b16 %v1365
        %v1463 = vunpack.c.l.b16 %v1366
        %v1464 = vunpack.c.l.b16 %v1367
        %v1465 = vunpack.c.l.b16 %v1368
        %v1466 = vpack.c.b16 %v1459, %v1458
        %v1467 = vpack.c.b16 %v1461, %v1460
        %v1468 = vpack.c.b16 %v1463, %v1462
        %v1469 = vpack.c.b16 %v1465, %v1464
        %1474 = vmatprep.subr.bf16.mxu0 0
        %1475 = vmatpush1.bf16.msra.mxu0 %v1393
        %1476 = vmatprep.subr.bf16.mxu0 0
        %1477 = vmatpush1.bf16.msra.mxu0 %v1394
        %1478 = vmatprep.subr.bf16.mxu0 0
        %1479 = vmatpush1.bf16.msra.mxu0 %v1395
        %1480 = vmatprep.subr.bf16.mxu0 0
        %1481 = vmatpush1.bf16.msra.mxu0 %v1396
        %1482 = vmatprep.subr.bf16.mxu0 0
        %1483 = vmatpush1.bf16.msra.mxu0 %v1397
        %1484 = vmatprep.subr.bf16.mxu0 0
        %1485 = vmatpush1.bf16.msra.mxu0 %v1398
        %1486 = vmatprep.subr.bf16.mxu0 0
        %1487 = vmatpush1.bf16.msra.mxu0 %v1399
        %1488 = vmatprep.subr.bf16.mxu0 0
        %1489 = vmatpush1.bf16.msra.mxu0 %v1400
        %1490 = vmatprep.subr.bf16.mxu0 0
        %1491 = vmatpush1.bf16.msra.mxu0 0
        %1492 = vmatprep.subr.bf16.mxu0 0
        %1493 = vmatpush1.bf16.msra.mxu0 0
        %1494 = vmatprep.subr.bf16.mxu0 0
        %1495 = vmatpush1.bf16.msra.mxu0 0
        %1496 = vmatprep.subr.bf16.mxu0 0
        %1497 = vmatpush1.bf16.msra.mxu0 0
        %1498 = vmatprep.subr.bf16.mxu0 0
        %1499 = vmatpush1.bf16.msra.mxu0 0
        %1500 = vmatprep.subr.bf16.mxu0 0
        %1501 = vmatpush1.bf16.msra.mxu0 0
        %1502 = vmatprep.subr.bf16.mxu0 0
        %1503 = vmatpush1.bf16.msra.mxu0 0
        %1504 = vmatprep.subr.bf16.mxu0 0
        %1505 = vmatpush1.bf16.msra.mxu0 0
        %1506 = vmatprep.mubr.bf16.mxu0 0
        %1507 = vmatmul.mubr.bf16.gmra.mrb[0].mxu0 %v1466
        %v1508 = vpop.f32.mrb[0].mxu0
        %v1509 = vadd.f32 %v1413, %v1508
        %v1510 = vpop.f32.mrb[0].mxu0
        %v1511 = vpop.f32.mrb[0].mxu0
        %v1512 = vadd.f32 %v1418, %v1511
        %v1513 = vpop.f32.mrb[0].mxu0
        %1514 = vmatprep.mubr.bf16.mxu0 0
        %1515 = vmatmul.mubr.bf16.gmra.mrb[0].mxu0 %v1467
        %v1516 = vpop.f32.mrb[0].mxu0
        %v1517 = vadd.f32 %v1423, %v1516
        %v1518 = vpop.f32.mrb[0].mxu0
        %v1519 = vpop.f32.mrb[0].mxu0
        %v1520 = vadd.f32 %v1428, %v1519
        %v1521 = vpop.f32.mrb[0].mxu0
        %1522 = vmatprep.mubr.bf16.mxu0 0
        %1523 = vmatmul.mubr.bf16.gmra.mrb[0].mxu0 %v1468
        %v1524 = vpop.f32.mrb[0].mxu0
        %v1525 = vadd.f32 %v1433, %v1524
        %v1526 = vpop.f32.mrb[0].mxu0
        %v1527 = vpop.f32.mrb[0].mxu0
        %v1528 = vadd.f32 %v1438, %v1527
        %v1529 = vpop.f32.mrb[0].mxu0
        %1530 = vmatprep.mubr.bf16.mxu0 0
        %1531 = vmatmul.mubr.bf16.gmra.mrb[0].mxu0 %v1469
        %v1532 = vpop.f32.mrb[0].mxu0
        %v1533 = vadd.f32 %v1443, %v1532
        %v1534 = vpop.f32.mrb[0].mxu0
        %v1535 = vpop.f32.mrb[0].mxu0
        %v1536 = vadd.f32 %v1448, %v1535
        %v1537 = vpop.f32.mrb[0].mxu0
        %1538 = vdwg.mxu0
        %vm1539 = vcmp.gt.f32.partialorder %v1509, 0.0
        %vm1540 = vcmp.gt.f32.partialorder %v1512, 0.0
        %vm1541 = vcmp.gt.f32.partialorder %v1517, 0.0
        %vm1542 = vcmp.gt.f32.partialorder %v1520, 0.0
        %vm1543 = vcmp.gt.f32.partialorder %v1525, 0.0
        %vm1544 = vcmp.gt.f32.partialorder %v1528, 0.0
        %vm1545 = vcmp.gt.f32.partialorder %v1533, 0.0
        %vm1546 = vcmp.gt.f32.partialorder %v1536, 0.0
        %v1547 = vstv %s1155
        %v1548 = vmul.f32 %v1547, %v1509
        %v1549 = vmul.f32 %v1547, %v1512
        %v1550 = vmul.f32 %v1547, %v1517
        %v1551 = vmul.f32 %v1547, %v1520
        %v1552 = vmul.f32 %v1547, %v1525
        %v1553 = vmul.f32 %v1547, %v1528
        %v1554 = vmul.f32 %v1547, %v1533
        %v1555 = vmul.f32 %v1547, %v1536
        %v1556 = vsel %vm1539, %v1509, %v1548
        %v1557 = vsel %vm1540, %v1512, %v1549
        %v1558 = vsel %vm1541, %v1517, %v1550
        %v1559 = vsel %vm1542, %v1520, %v1551
        %v1560 = vsel %vm1543, %v1525, %v1552
        %v1561 = vsel %vm1544, %v1528, %v1553
        %v1562 = vsel %vm1545, %v1533, %v1554
        %v1563 = vsel %vm1546, %v1536, %v1555
        %v1564 = vadd.f32 %v1556, %v1144
        %v1565 = vadd.f32 %v1557, %v1145
        %v1566 = vadd.f32 %v1558, %v1146
        %v1567 = vadd.f32 %v1559, %v1147
        %v1568 = vadd.f32 %v1560, %v1148
        %v1569 = vadd.f32 %v1561, %v1149
        %v1570 = vadd.f32 %v1562, %v1150
        %v1571 = vadd.f32 %v1563, %v1151
        %vm1572 = vcmp.gt.f32.partialorder %v1564, 0.0
        %vm1573 = vcmp.gt.f32.partialorder %v1565, 0.0
        %vm1574 = vcmp.gt.f32.partialorder %v1566, 0.0
        %vm1575 = vcmp.gt.f32.partialorder %v1567, 0.0
        %vm1576 = vcmp.gt.f32.partialorder %v1568, 0.0
        %vm1577 = vcmp.gt.f32.partialorder %v1569, 0.0
        %vm1578 = vcmp.gt.f32.partialorder %v1570, 0.0
        %vm1579 = vcmp.gt.f32.partialorder %v1571, 0.0
        %v1580 = vstv %s1156
        %v1581 = vmul.f32 %v1580, %v1564
        %v1582 = vmul.f32 %v1580, %v1565
        %v1583 = vmul.f32 %v1580, %v1566
        %v1584 = vmul.f32 %v1580, %v1567
        %v1585 = vmul.f32 %v1580, %v1568
        %v1586 = vmul.f32 %v1580, %v1569
        %v1587 = vmul.f32 %v1580, %v1570
        %v1588 = vmul.f32 %v1580, %v1571
        %v1589 = vsel %vm1572, %v1564, %v1581
        %v1590 = vsel %vm1573, %v1565, %v1582
        %v1591 = vsel %vm1574, %v1566, %v1583
        %v1592 = vsel %vm1575, %v1567, %v1584
        %v1593 = vsel %vm1576, %v1568, %v1585
        %v1594 = vsel %vm1577, %v1569, %v1586
        %v1595 = vsel %vm1578, %v1570, %v1587
        %v1596 = vsel %vm1579, %v1571, %v1588
        %s1597 = sld [smem:[#allocation2 + $0x6]]
        %s1598 = sld [smem:[#allocation2 + $0x7]]
        %s1599 = sld [smem:[#allocation2 + $0x8]]
        %s1600 = scalar_lea.vmem %s7, 64
        %v1601 = vld [vmem:[%s1600] sm:$0xf]
        %v1602 = vld [vmem:[%s1600 + $0x4] sm:$0xf]
        %v1603 = vld [vmem:[%s1600 + $0x8] sm:$0xf]
        %v1604 = vld [vmem:[%s1600 + $0xc] sm:$0xf]
        %v1605 = vld [vmem:[%s1600 + $0x10] sm:$0xf]
        %v1606 = vld [vmem:[%s1600 + $0x14] sm:$0xf]
        %v1607 = vld [vmem:[%s1600 + $0x18] sm:$0xf]
        %v1608 = vld [vmem:[%s1600 + $0x1c] sm:$0xf]
        %1609 = vrot.lane.b32.xlu0 %v1589, 2
        %v1610 = vpop.permute.xlu0 %1609
        %1611 = vrot.lane.b32.xlu0 %v1590, 2
        %v1612 = vpop.permute.xlu0 %1611
        %1613 = vrot.lane.b32.xlu0 %v1591, 2
        %v1614 = vpop.permute.xlu0 %1613
        %1615 = vrot.lane.b32.xlu0 %v1592, 2
        %v1616 = vpop.permute.xlu0 %1615
        %1617 = vrot.lane.b32.xlu0 %v1593, 2
        %v1618 = vpop.permute.xlu0 %1617
        %1619 = vrot.lane.b32.xlu0 %v1594, 2
        %v1620 = vpop.permute.xlu0 %1619
        %1621 = vrot.lane.b32.xlu0 %v1595, 2
        %v1622 = vpop.permute.xlu0 %1621
        %1623 = vrot.lane.b32.xlu0 %v1596, 2
        %v1624 = vpop.permute.xlu0 %1623
        %vm1625 = vcmp.ge.s32.totalorder %v1153, 2
        %v1626 = vsel %vm1625, %v1610, 0.0
        %v1627 = vsel %vm1625, %v1612, 0.0
        %v1628 = vsel %vm1625, %v1614, 0.0
        %v1629 = vsel %vm1625, %v1616, 0.0
        %v1630 = vsel %vm1625, %v1618, 0.0
        %v1631 = vsel %vm1625, %v1620, 0.0
        %v1632 = vsel %vm1625, %v1622, 0.0
        %v1633 = vsel %vm1625, %v1624, 0.0
        %v1634 = vpack.c.bf16 %v1627, %v1626
        %v1635 = vpack.c.bf16 %v1629, %v1628
        %v1636 = vpack.c.bf16 %v1631, %v1630
        %v1637 = vpack.c.bf16 %v1633, %v1632
        %v1638 = vpack.c.bf16 %v1590, %v1589
        %v1639 = vpack.c.bf16 %v1592, %v1591
        %v1640 = vpack.c.bf16 %v1594, %v1593
        %v1641 = vpack.c.bf16 %v1596, %v1595
        %s1642 = scalar_lea.vmem %s8, 128
        %v1643 = vld [vmem:[%s1642] sm:$0xff]
        %v1644 = vld [vmem:[%s1642 + $0x8] sm:$0xff]
        %v1645 = vld [vmem:[%s1642 + $0x10] sm:$0xff]
        %v1646 = vld [vmem:[%s1642 + $0x18] sm:$0xff]
        %v1647 = vld [vmem:[%s1642 + $0x20] sm:$0xff]
        %v1648 = vld [vmem:[%s1642 + $0x28] sm:$0xff]
        %v1649 = vld [vmem:[%s1642 + $0x30] sm:$0xff]
        %v1650 = vld [vmem:[%s1642 + $0x38] sm:$0xff]
        %1652 = vset.pattern.permute.xlu0 0
        %1653 = vperm.xlu0 %1652, %v1643
        %v1654 = vpop.permute.xlu0 %1653
        %1657 = vset.pattern.permute.xlu0 0
        %1658 = vperm.xlu0 %1657, %v1644
        %v1659 = vpop.permute.xlu0 %1658
        %1662 = vset.pattern.permute.xlu0 0
        %1663 = vperm.xlu0 %1662, %v1645
        %v1664 = vpop.permute.xlu0 %1663
        %1667 = vset.pattern.permute.xlu0 0
        %1668 = vperm.xlu0 %1667, %v1646
        %v1669 = vpop.permute.xlu0 %1668
        %1672 = vset.pattern.permute.xlu0 0
        %1673 = vperm.xlu0 %1672, %v1647
        %v1674 = vpop.permute.xlu0 %1673
        %1677 = vset.pattern.permute.xlu0 0
        %1678 = vperm.xlu0 %1677, %v1648
        %v1679 = vpop.permute.xlu0 %1678
        %1682 = vset.pattern.permute.xlu0 0
        %1683 = vperm.xlu0 %1682, %v1649
        %v1684 = vpop.permute.xlu0 %1683
        %1687 = vset.pattern.permute.xlu0 0
        %1688 = vperm.xlu0 %1687, %v1650
        %v1689 = vpop.permute.xlu0 %1688
        %v1699 = vunpack.c.l.b16 %v1601
        %v1700 = vunpack.c.l.b16 %v1602
        %v1701 = vunpack.c.l.b16 %v1603
        %v1702 = vunpack.c.l.b16 %v1604
        %v1703 = vunpack.c.l.b16 %v1605
        %v1704 = vunpack.c.l.b16 %v1606
        %v1705 = vunpack.c.l.b16 %v1607
        %v1706 = vunpack.c.l.b16 %v1608
        %v1707 = vpack.c.b16 %v1700, %v1699
        %v1708 = vpack.c.b16 %v1702, %v1701
        %v1709 = vpack.c.b16 %v1704, %v1703
        %v1710 = vpack.c.b16 %v1706, %v1705
        %1715 = vmatprep.subr.bf16.mxu0 0
        %1716 = vmatpush1.bf16.msra.mxu0 %v1634
        %1717 = vmatprep.subr.bf16.mxu0 0
        %1718 = vmatpush1.bf16.msra.mxu0 %v1635
        %1719 = vmatprep.subr.bf16.mxu0 0
        %1720 = vmatpush1.bf16.msra.mxu0 %v1636
        %1721 = vmatprep.subr.bf16.mxu0 0
        %1722 = vmatpush1.bf16.msra.mxu0 %v1637
        %1723 = vmatprep.subr.bf16.mxu0 0
        %1724 = vmatpush1.bf16.msra.mxu0 %v1638
        %1725 = vmatprep.subr.bf16.mxu0 0
        %1726 = vmatpush1.bf16.msra.mxu0 %v1639
        %1727 = vmatprep.subr.bf16.mxu0 0
        %1728 = vmatpush1.bf16.msra.mxu0 %v1640
        %1729 = vmatprep.subr.bf16.mxu0 0
        %1730 = vmatpush1.bf16.msra.mxu0 %v1641
        %1731 = vmatprep.subr.bf16.mxu0 0
        %1732 = vmatpush1.bf16.msra.mxu0 0
        %1733 = vmatprep.subr.bf16.mxu0 0
        %1734 = vmatpush1.bf16.msra.mxu0 0
        %1735 = vmatprep.subr.bf16.mxu0 0
        %1736 = vmatpush1.bf16.msra.mxu0 0
        %1737 = vmatprep.subr.bf16.mxu0 0
        %1738 = vmatpush1.bf16.msra.mxu0 0
        %1739 = vmatprep.subr.bf16.mxu0 0
        %1740 = vmatpush1.bf16.msra.mxu0 0
        %1741 = vmatprep.subr.bf16.mxu0 0
        %1742 = vmatpush1.bf16.msra.mxu0 0
        %1743 = vmatprep.subr.bf16.mxu0 0
        %1744 = vmatpush1.bf16.msra.mxu0 0
        %1745 = vmatprep.subr.bf16.mxu0 0
        %1746 = vmatpush1.bf16.msra.mxu0 0
        %1747 = vmatprep.mubr.bf16.mxu0 0
        %1748 = vmatmul.mubr.bf16.gmra.mrb[0].mxu0 %v1707
        %v1749 = vpop.f32.mrb[0].mxu0
        %v1750 = vadd.f32 %v1654, %v1749
        %v1751 = vpop.f32.mrb[0].mxu0
        %v1752 = vpop.f32.mrb[0].mxu0
        %v1753 = vadd.f32 %v1659, %v1752
        %v1754 = vpop.f32.mrb[0].mxu0
        %1755 = vmatprep.mubr.bf16.mxu0 0
        %1756 = vmatmul.mubr.bf16.gmra.mrb[0].mxu0 %v1708
        %v1757 = vpop.f32.mrb[0].mxu0
        %v1758 = vadd.f32 %v1664, %v1757
        %v1759 = vpop.f32.mrb[0].mxu0
        %v1760 = vpop.f32.mrb[0].mxu0
        %v1761 = vadd.f32 %v1669, %v1760
        %v1762 = vpop.f32.mrb[0].mxu0
        %1763 = vmatprep.mubr.bf16.mxu0 0
        %1764 = vmatmul.mubr.bf16.gmra.mrb[0].mxu0 %v1709
        %v1765 = vpop.f32.mrb[0].mxu0
        %v1766 = vadd.f32 %v1674, %v1765
        %v1767 = vpop.f32.mrb[0].mxu0
        %v1768 = vpop.f32.mrb[0].mxu0
        %v1769 = vadd.f32 %v1679, %v1768
        %v1770 = vpop.f32.mrb[0].mxu0
        %1771 = vmatprep.mubr.bf16.mxu0 0
        %1772 = vmatmul.mubr.bf16.gmra.mrb[0].mxu0 %v1710
        %v1773 = vpop.f32.mrb[0].mxu0
        %v1774 = vadd.f32 %v1684, %v1773
        %v1775 = vpop.f32.mrb[0].mxu0
        %v1776 = vpop.f32.mrb[0].mxu0
        %v1777 = vadd.f32 %v1689, %v1776
        %v1778 = vpop.f32.mrb[0].mxu0
        %1779 = vdwg.mxu0
        %vm1780 = vcmp.gt.f32.partialorder %v1750, 0.0
        %vm1781 = vcmp.gt.f32.partialorder %v1753, 0.0
        %vm1782 = vcmp.gt.f32.partialorder %v1758, 0.0
        %vm1783 = vcmp.gt.f32.partialorder %v1761, 0.0
        %vm1784 = vcmp.gt.f32.partialorder %v1766, 0.0
        %vm1785 = vcmp.gt.f32.partialorder %v1769, 0.0
        %vm1786 = vcmp.gt.f32.partialorder %v1774, 0.0
        %vm1787 = vcmp.gt.f32.partialorder %v1777, 0.0
        %v1788 = vstv %s1597
        %v1789 = vmul.f32 %v1788, %v1750
        %v1790 = vmul.f32 %v1788, %v1753
        %v1791 = vmul.f32 %v1788, %v1758
        %v1792 = vmul.f32 %v1788, %v1761
        %v1793 = vmul.f32 %v1788, %v1766
        %v1794 = vmul.f32 %v1788, %v1769
        %v1795 = vmul.f32 %v1788, %v1774
        %v1796 = vmul.f32 %v1788, %v1777
        %v1797 = vsel %vm1780, %v1750, %v1789
        %v1798 = vsel %vm1781, %v1753, %v1790
        %v1799 = vsel %vm1782, %v1758, %v1791
        %v1800 = vsel %vm1783, %v1761, %v1792
        %v1801 = vsel %vm1784, %v1766, %v1793
        %v1802 = vsel %vm1785, %v1769, %v1794
        %v1803 = vsel %vm1786, %v1774, %v1795
        %v1804 = vsel %vm1787, %v1777, %v1796
        %s1805 = scalar_lea.vmem %s7, 96
        %v1806 = vld [vmem:[%s1805] sm:$0xf]
        %v1807 = vld [vmem:[%s1805 + $0x4] sm:$0xf]
        %v1808 = vld [vmem:[%s1805 + $0x8] sm:$0xf]
        %v1809 = vld [vmem:[%s1805 + $0xc] sm:$0xf]
        %v1810 = vld [vmem:[%s1805 + $0x10] sm:$0xf]
        %v1811 = vld [vmem:[%s1805 + $0x14] sm:$0xf]
        %v1812 = vld [vmem:[%s1805 + $0x18] sm:$0xf]
        %v1813 = vld [vmem:[%s1805 + $0x1c] sm:$0xf]
        %1814 = vrot.lane.b32.xlu0 %v1797, 2
        %v1815 = vpop.permute.xlu0 %1814
        %1816 = vrot.lane.b32.xlu0 %v1798, 2
        %v1817 = vpop.permute.xlu0 %1816
        %1818 = vrot.lane.b32.xlu0 %v1799, 2
        %v1819 = vpop.permute.xlu0 %1818
        %1820 = vrot.lane.b32.xlu0 %v1800, 2
        %v1821 = vpop.permute.xlu0 %1820
        %1822 = vrot.lane.b32.xlu0 %v1801, 2
        %v1823 = vpop.permute.xlu0 %1822
        %1824 = vrot.lane.b32.xlu0 %v1802, 2
        %v1825 = vpop.permute.xlu0 %1824
        %1826 = vrot.lane.b32.xlu0 %v1803, 2
        %v1827 = vpop.permute.xlu0 %1826
        %1828 = vrot.lane.b32.xlu0 %v1804, 2
        %v1829 = vpop.permute.xlu0 %1828
        %v1830 = vsel %vm1625, %v1815, 0.0
        %v1831 = vsel %vm1625, %v1817, 0.0
        %v1832 = vsel %vm1625, %v1819, 0.0
        %v1833 = vsel %vm1625, %v1821, 0.0
        %v1834 = vsel %vm1625, %v1823, 0.0
        %v1835 = vsel %vm1625, %v1825, 0.0
        %v1836 = vsel %vm1625, %v1827, 0.0
        %v1837 = vsel %vm1625, %v1829, 0.0
        %v1838 = vpack.c.bf16 %v1831, %v1830
        %v1839 = vpack.c.bf16 %v1833, %v1832
        %v1840 = vpack.c.bf16 %v1835, %v1834
        %v1841 = vpack.c.bf16 %v1837, %v1836
        %v1842 = vpack.c.bf16 %v1798, %v1797
        %v1843 = vpack.c.bf16 %v1800, %v1799
        %v1844 = vpack.c.bf16 %v1802, %v1801
        %v1845 = vpack.c.bf16 %v1804, %v1803
        %s1846 = scalar_lea.vmem %s8, 192
        %v1847 = vld [vmem:[%s1846] sm:$0xff]
        %v1848 = vld [vmem:[%s1846 + $0x8] sm:$0xff]
        %v1849 = vld [vmem:[%s1846 + $0x10] sm:$0xff]
        %v1850 = vld [vmem:[%s1846 + $0x18] sm:$0xff]
        %v1851 = vld [vmem:[%s1846 + $0x20] sm:$0xff]
        %v1852 = vld [vmem:[%s1846 + $0x28] sm:$0xff]
        %v1853 = vld [vmem:[%s1846 + $0x30] sm:$0xff]
        %v1854 = vld [vmem:[%s1846 + $0x38] sm:$0xff]
        %1856 = vset.pattern.permute.xlu0 0
        %1857 = vperm.xlu0 %1856, %v1847
        %v1858 = vpop.permute.xlu0 %1857
        %1861 = vset.pattern.permute.xlu0 0
        %1862 = vperm.xlu0 %1861, %v1848
        %v1863 = vpop.permute.xlu0 %1862
        %1866 = vset.pattern.permute.xlu0 0
        %1867 = vperm.xlu0 %1866, %v1849
        %v1868 = vpop.permute.xlu0 %1867
        %1871 = vset.pattern.permute.xlu0 0
        %1872 = vperm.xlu0 %1871, %v1850
        %v1873 = vpop.permute.xlu0 %1872
        %1876 = vset.pattern.permute.xlu0 0
        %1877 = vperm.xlu0 %1876, %v1851
        %v1878 = vpop.permute.xlu0 %1877
        %1881 = vset.pattern.permute.xlu0 0
        %1882 = vperm.xlu0 %1881, %v1852
        %v1883 = vpop.permute.xlu0 %1882
        %1886 = vset.pattern.permute.xlu0 0
        %1887 = vperm.xlu0 %1886, %v1853
        %v1888 = vpop.permute.xlu0 %1887
        %1891 = vset.pattern.permute.xlu0 0
        %1892 = vperm.xlu0 %1891, %v1854
        %v1893 = vpop.permute.xlu0 %1892
        %v1903 = vunpack.c.l.b16 %v1806
        %v1904 = vunpack.c.l.b16 %v1807
        %v1905 = vunpack.c.l.b16 %v1808
        %v1906 = vunpack.c.l.b16 %v1809
        %v1907 = vunpack.c.l.b16 %v1810
        %v1908 = vunpack.c.l.b16 %v1811
        %v1909 = vunpack.c.l.b16 %v1812
        %v1910 = vunpack.c.l.b16 %v1813
        %v1911 = vpack.c.b16 %v1904, %v1903
        %v1912 = vpack.c.b16 %v1906, %v1905
        %v1913 = vpack.c.b16 %v1908, %v1907
        %v1914 = vpack.c.b16 %v1910, %v1909
        %1919 = vmatprep.subr.bf16.mxu0 0
        %1920 = vmatpush1.bf16.msra.mxu0 %v1838
        %1921 = vmatprep.subr.bf16.mxu0 0
        %1922 = vmatpush1.bf16.msra.mxu0 %v1839
        %1923 = vmatprep.subr.bf16.mxu0 0
        %1924 = vmatpush1.bf16.msra.mxu0 %v1840
        %1925 = vmatprep.subr.bf16.mxu0 0
        %1926 = vmatpush1.bf16.msra.mxu0 %v1841
        %1927 = vmatprep.subr.bf16.mxu0 0
        %1928 = vmatpush1.bf16.msra.mxu0 %v1842
        %1929 = vmatprep.subr.bf16.mxu0 0
        %1930 = vmatpush1.bf16.msra.mxu0 %v1843
        %1931 = vmatprep.subr.bf16.mxu0 0
        %1932 = vmatpush1.bf16.msra.mxu0 %v1844
        %1933 = vmatprep.subr.bf16.mxu0 0
        %1934 = vmatpush1.bf16.msra.mxu0 %v1845
        %1935 = vmatprep.subr.bf16.mxu0 0
        %1936 = vmatpush1.bf16.msra.mxu0 0
        %1937 = vmatprep.subr.bf16.mxu0 0
        %1938 = vmatpush1.bf16.msra.mxu0 0
        %1939 = vmatprep.subr.bf16.mxu0 0
        %1940 = vmatpush1.bf16.msra.mxu0 0
        %1941 = vmatprep.subr.bf16.mxu0 0
        %1942 = vmatpush1.bf16.msra.mxu0 0
        %1943 = vmatprep.subr.bf16.mxu0 0
        %1944 = vmatpush1.bf16.msra.mxu0 0
        %1945 = vmatprep.subr.bf16.mxu0 0
        %1946 = vmatpush1.bf16.msra.mxu0 0
        %1947 = vmatprep.subr.bf16.mxu0 0
        %1948 = vmatpush1.bf16.msra.mxu0 0
        %1949 = vmatprep.subr.bf16.mxu0 0
        %1950 = vmatpush1.bf16.msra.mxu0 0
        %1951 = vmatprep.mubr.bf16.mxu0 0
        %1952 = vmatmul.mubr.bf16.gmra.mrb[0].mxu0 %v1911
        %v1953 = vpop.f32.mrb[0].mxu0
        %v1954 = vadd.f32 %v1858, %v1953
        %v1955 = vpop.f32.mrb[0].mxu0
        %v1956 = vpop.f32.mrb[0].mxu0
        %v1957 = vadd.f32 %v1863, %v1956
        %v1958 = vpop.f32.mrb[0].mxu0
        %1959 = vmatprep.mubr.bf16.mxu0 0
        %1960 = vmatmul.mubr.bf16.gmra.mrb[0].mxu0 %v1912
        %v1961 = vpop.f32.mrb[0].mxu0
        %v1962 = vadd.f32 %v1868, %v1961
        %v1963 = vpop.f32.mrb[0].mxu0
        %v1964 = vpop.f32.mrb[0].mxu0
        %v1965 = vadd.f32 %v1873, %v1964
        %v1966 = vpop.f32.mrb[0].mxu0
        %1967 = vmatprep.mubr.bf16.mxu0 0
        %1968 = vmatmul.mubr.bf16.gmra.mrb[0].mxu0 %v1913
        %v1969 = vpop.f32.mrb[0].mxu0
        %v1970 = vadd.f32 %v1878, %v1969
        %v1971 = vpop.f32.mrb[0].mxu0
        %v1972 = vpop.f32.mrb[0].mxu0
        %v1973 = vadd.f32 %v1883, %v1972
        %v1974 = vpop.f32.mrb[0].mxu0
        %1975 = vmatprep.mubr.bf16.mxu0 0
        %1976 = vmatmul.mubr.bf16.gmra.mrb[0].mxu0 %v1914
        %v1977 = vpop.f32.mrb[0].mxu0
        %v1978 = vadd.f32 %v1888, %v1977
        %v1979 = vpop.f32.mrb[0].mxu0
        %v1980 = vpop.f32.mrb[0].mxu0
        %v1981 = vadd.f32 %v1893, %v1980
        %v1982 = vpop.f32.mrb[0].mxu0
        %1983 = vdwg.mxu0
        %vm1984 = vcmp.gt.f32.partialorder %v1954, 0.0
        %vm1985 = vcmp.gt.f32.partialorder %v1957, 0.0
        %vm1986 = vcmp.gt.f32.partialorder %v1962, 0.0
        %vm1987 = vcmp.gt.f32.partialorder %v1965, 0.0
        %vm1988 = vcmp.gt.f32.partialorder %v1970, 0.0
        %vm1989 = vcmp.gt.f32.partialorder %v1973, 0.0
        %vm1990 = vcmp.gt.f32.partialorder %v1978, 0.0
        %vm1991 = vcmp.gt.f32.partialorder %v1981, 0.0
        %v1992 = vstv %s1598
        %v1993 = vmul.f32 %v1992, %v1954
        %v1994 = vmul.f32 %v1992, %v1957
        %v1995 = vmul.f32 %v1992, %v1962
        %v1996 = vmul.f32 %v1992, %v1965
        %v1997 = vmul.f32 %v1992, %v1970
        %v1998 = vmul.f32 %v1992, %v1973
        %v1999 = vmul.f32 %v1992, %v1978
        %v2000 = vmul.f32 %v1992, %v1981
        %v2001 = vsel %vm1984, %v1954, %v1993
        %v2002 = vsel %vm1985, %v1957, %v1994
        %v2003 = vsel %vm1986, %v1962, %v1995
        %v2004 = vsel %vm1987, %v1965, %v1996
        %v2005 = vsel %vm1988, %v1970, %v1997
        %v2006 = vsel %vm1989, %v1973, %v1998
        %v2007 = vsel %vm1990, %v1978, %v1999
        %v2008 = vsel %vm1991, %v1981, %v2000
        %v2009 = vadd.f32 %v2001, %v1589
        %v2010 = vadd.f32 %v2002, %v1590
        %v2011 = vadd.f32 %v2003, %v1591
        %v2012 = vadd.f32 %v2004, %v1592
        %v2013 = vadd.f32 %v2005, %v1593
        %v2014 = vadd.f32 %v2006, %v1594
        %v2015 = vadd.f32 %v2007, %v1595
        %v2016 = vadd.f32 %v2008, %v1596
        %vm2017 = vcmp.gt.f32.partialorder %v2009, 0.0
        %vm2018 = vcmp.gt.f32.partialorder %v2010, 0.0
        %vm2019 = vcmp.gt.f32.partialorder %v2011, 0.0
        %vm2020 = vcmp.gt.f32.partialorder %v2012, 0.0
        %vm2021 = vcmp.gt.f32.partialorder %v2013, 0.0
        %vm2022 = vcmp.gt.f32.partialorder %v2014, 0.0
        %vm2023 = vcmp.gt.f32.partialorder %v2015, 0.0
        %vm2024 = vcmp.gt.f32.partialorder %v2016, 0.0
        %v2025 = vstv %s1599
        %v2026 = vmul.f32 %v2025, %v2009
        %v2027 = vmul.f32 %v2025, %v2010
        %v2028 = vmul.f32 %v2025, %v2011
        %v2029 = vmul.f32 %v2025, %v2012
        %v2030 = vmul.f32 %v2025, %v2013
        %v2031 = vmul.f32 %v2025, %v2014
        %v2032 = vmul.f32 %v2025, %v2015
        %v2033 = vmul.f32 %v2025, %v2016
        %v2034 = vsel %vm2017, %v2009, %v2026
        %v2035 = vsel %vm2018, %v2010, %v2027
        %v2036 = vsel %vm2019, %v2011, %v2028
        %v2037 = vsel %vm2020, %v2012, %v2029
        %v2038 = vsel %vm2021, %v2013, %v2030
        %v2039 = vsel %vm2022, %v2014, %v2031
        %v2040 = vsel %vm2023, %v2015, %v2032
        %v2041 = vsel %vm2024, %v2016, %v2033
        %s2042 = sld [smem:[#allocation2 + $0x9]]
        %s2043 = sld [smem:[#allocation2 + $0xa]]
        %s2044 = sld [smem:[#allocation2 + $0xb]]
        %s2045 = scalar_lea.vmem %s7, 128
        %v2046 = vld [vmem:[%s2045] sm:$0xf]
        %v2047 = vld [vmem:[%s2045 + $0x4] sm:$0xf]
        %v2048 = vld [vmem:[%s2045 + $0x8] sm:$0xf]
        %v2049 = vld [vmem:[%s2045 + $0xc] sm:$0xf]
        %v2050 = vld [vmem:[%s2045 + $0x10] sm:$0xf]
        %v2051 = vld [vmem:[%s2045 + $0x14] sm:$0xf]
        %v2052 = vld [vmem:[%s2045 + $0x18] sm:$0xf]
        %v2053 = vld [vmem:[%s2045 + $0x1c] sm:$0xf]
        %2054 = vrot.lane.b32.xlu0 %v2034, 4
        %v2055 = vpop.permute.xlu0 %2054
        %2056 = vrot.lane.b32.xlu0 %v2035, 4
        %v2057 = vpop.permute.xlu0 %2056
        %2058 = vrot.lane.b32.xlu0 %v2036, 4
        %v2059 = vpop.permute.xlu0 %2058
        %2060 = vrot.lane.b32.xlu0 %v2037, 4
        %v2061 = vpop.permute.xlu0 %2060
        %2062 = vrot.lane.b32.xlu0 %v2038, 4
        %v2063 = vpop.permute.xlu0 %2062
        %2064 = vrot.lane.b32.xlu0 %v2039, 4
        %v2065 = vpop.permute.xlu0 %2064
        %2066 = vrot.lane.b32.xlu0 %v2040, 4
        %v2067 = vpop.permute.xlu0 %2066
        %2068 = vrot.lane.b32.xlu0 %v2041, 4
        %v2069 = vpop.permute.xlu0 %2068
        %vm2070 = vcmp.ge.s32.totalorder %v1153, 4
        %v2071 = vsel %vm2070, %v2055, 0.0
        %v2072 = vsel %vm2070, %v2057, 0.0
        %v2073 = vsel %vm2070, %v2059, 0.0
        %v2074 = vsel %vm2070, %v2061, 0.0
        %v2075 = vsel %vm2070, %v2063, 0.0
        %v2076 = vsel %vm2070, %v2065, 0.0
        %v2077 = vsel %vm2070, %v2067, 0.0
        %v2078 = vsel %vm2070, %v2069, 0.0
        %v2079 = vpack.c.bf16 %v2072, %v2071
        %v2080 = vpack.c.bf16 %v2074, %v2073
        %v2081 = vpack.c.bf16 %v2076, %v2075
        %v2082 = vpack.c.bf16 %v2078, %v2077
        %v2083 = vpack.c.bf16 %v2035, %v2034
        %v2084 = vpack.c.bf16 %v2037, %v2036
        %v2085 = vpack.c.bf16 %v2039, %v2038
        %v2086 = vpack.c.bf16 %v2041, %v2040
        %s2087 = scalar_lea.vmem %s8, 256
        %v2088 = vld [vmem:[%s2087] sm:$0xff]
        %v2089 = vld [vmem:[%s2087 + $0x8] sm:$0xff]
        %v2090 = vld [vmem:[%s2087 + $0x10] sm:$0xff]
        %v2091 = vld [vmem:[%s2087 + $0x18] sm:$0xff]
        %v2092 = vld [vmem:[%s2087 + $0x20] sm:$0xff]
        %v2093 = vld [vmem:[%s2087 + $0x28] sm:$0xff]
        %v2094 = vld [vmem:[%s2087 + $0x30] sm:$0xff]
        %v2095 = vld [vmem:[%s2087 + $0x38] sm:$0xff]
        %2097 = vset.pattern.permute.xlu0 0
        %2098 = vperm.xlu0 %2097, %v2088
        %v2099 = vpop.permute.xlu0 %2098
        %2102 = vset.pattern.permute.xlu0 0
        %2103 = vperm.xlu0 %2102, %v2089
        %v2104 = vpop.permute.xlu0 %2103
        %2107 = vset.pattern.permute.xlu0 0
        %2108 = vperm.xlu0 %2107, %v2090
        %v2109 = vpop.permute.xlu0 %2108
        %2112 = vset.pattern.permute.xlu0 0
        %2113 = vperm.xlu0 %2112, %v2091
        %v2114 = vpop.permute.xlu0 %2113
        %2117 = vset.pattern.permute.xlu0 0
        %2118 = vperm.xlu0 %2117, %v2092
        %v2119 = vpop.permute.xlu0 %2118
        %2122 = vset.pattern.permute.xlu0 0
        %2123 = vperm.xlu0 %2122, %v2093
        %v2124 = vpop.permute.xlu0 %2123
        %2127 = vset.pattern.permute.xlu0 0
        %2128 = vperm.xlu0 %2127, %v2094
        %v2129 = vpop.permute.xlu0 %2128
        %2132 = vset.pattern.permute.xlu0 0
        %2133 = vperm.xlu0 %2132, %v2095
        %v2134 = vpop.permute.xlu0 %2133
        %v2144 = vunpack.c.l.b16 %v2046
        %v2145 = vunpack.c.l.b16 %v2047
        %v2146 = vunpack.c.l.b16 %v2048
        %v2147 = vunpack.c.l.b16 %v2049
        %v2148 = vunpack.c.l.b16 %v2050
        %v2149 = vunpack.c.l.b16 %v2051
        %v2150 = vunpack.c.l.b16 %v2052
        %v2151 = vunpack.c.l.b16 %v2053
        %v2152 = vpack.c.b16 %v2145, %v2144
        %v2153 = vpack.c.b16 %v2147, %v2146
        %v2154 = vpack.c.b16 %v2149, %v2148
        %v2155 = vpack.c.b16 %v2151, %v2150
        %2160 = vmatprep.subr.bf16.mxu0 0
        %2161 = vmatpush1.bf16.msra.mxu0 %v2079
        %2162 = vmatprep.subr.bf16.mxu0 0
        %2163 = vmatpush1.bf16.msra.mxu0 %v2080
        %2164 = vmatprep.subr.bf16.mxu0 0
        %2165 = vmatpush1.bf16.msra.mxu0 %v2081
        %2166 = vmatprep.subr.bf16.mxu0 0
        %2167 = vmatpush1.bf16.msra.mxu0 %v2082
        %2168 = vmatprep.subr.bf16.mxu0 0
        %2169 = vmatpush1.bf16.msra.mxu0 %v2083
        %2170 = vmatprep.subr.bf16.mxu0 0
        %2171 = vmatpush1.bf16.msra.mxu0 %v2084
        %2172 = vmatprep.subr.bf16.mxu0 0
        %2173 = vmatpush1.bf16.msra.mxu0 %v2085
        %2174 = vmatprep.subr.bf16.mxu0 0
        %2175 = vmatpush1.bf16.msra.mxu0 %v2086
        %2176 = vmatprep.subr.bf16.mxu0 0
        %2177 = vmatpush1.bf16.msra.mxu0 0
        %2178 = vmatprep.subr.bf16.mxu0 0
        %2179 = vmatpush1.bf16.msra.mxu0 0
        %2180 = vmatprep.subr.bf16.mxu0 0
        %2181 = vmatpush1.bf16.msra.mxu0 0
        %2182 = vmatprep.subr.bf16.mxu0 0
        %2183 = vmatpush1.bf16.msra.mxu0 0
        %2184 = vmatprep.subr.bf16.mxu0 0
        %2185 = vmatpush1.bf16.msra.mxu0 0
        %2186 = vmatprep.subr.bf16.mxu0 0
        %2187 = vmatpush1.bf16.msra.mxu0 0
        %2188 = vmatprep.subr.bf16.mxu0 0
        %2189 = vmatpush1.bf16.msra.mxu0 0
        %2190 = vmatprep.subr.bf16.mxu0 0
        %2191 = vmatpush1.bf16.msra.mxu0 0
        %2192 = vmatprep.mubr.bf16.mxu0 0
        %2193 = vmatmul.mubr.bf16.gmra.mrb[0].mxu0 %v2152
        %v2194 = vpop.f32.mrb[0].mxu0
        %v2195 = vadd.f32 %v2099, %v2194
        %v2196 = vpop.f32.mrb[0].mxu0
        %v2197 = vpop.f32.mrb[0].mxu0
        %v2198 = vadd.f32 %v2104, %v2197
        %v2199 = vpop.f32.mrb[0].mxu0
        %2200 = vmatprep.mubr.bf16.mxu0 0
        %2201 = vmatmul.mubr.bf16.gmra.mrb[0].mxu0 %v2153
        %v2202 = vpop.f32.mrb[0].mxu0
        %v2203 = vadd.f32 %v2109, %v2202
        %v2204 = vpop.f32.mrb[0].mxu0
        %v2205 = vpop.f32.mrb[0].mxu0
        %v2206 = vadd.f32 %v2114, %v2205
        %v2207 = vpop.f32.mrb[0].mxu0
        %2208 = vmatprep.mubr.bf16.mxu0 0
        %2209 = vmatmul.mubr.bf16.gmra.mrb[0].mxu0 %v2154
        %v2210 = vpop.f32.mrb[0].mxu0
        %v2211 = vadd.f32 %v2119, %v2210
        %v2212 = vpop.f32.mrb[0].mxu0
        %v2213 = vpop.f32.mrb[0].mxu0
        %v2214 = vadd.f32 %v2124, %v2213
        %v2215 = vpop.f32.mrb[0].mxu0
        %2216 = vmatprep.mubr.bf16.mxu0 0
        %2217 = vmatmul.mubr.bf16.gmra.mrb[0].mxu0 %v2155
        %v2218 = vpop.f32.mrb[0].mxu0
        %v2219 = vadd.f32 %v2129, %v2218
        %v2220 = vpop.f32.mrb[0].mxu0
        %v2221 = vpop.f32.mrb[0].mxu0
        %v2222 = vadd.f32 %v2134, %v2221
        %v2223 = vpop.f32.mrb[0].mxu0
        %2224 = vdwg.mxu0
        %vm2225 = vcmp.gt.f32.partialorder %v2195, 0.0
        %vm2226 = vcmp.gt.f32.partialorder %v2198, 0.0
        %vm2227 = vcmp.gt.f32.partialorder %v2203, 0.0
        %vm2228 = vcmp.gt.f32.partialorder %v2206, 0.0
        %vm2229 = vcmp.gt.f32.partialorder %v2211, 0.0
        %vm2230 = vcmp.gt.f32.partialorder %v2214, 0.0
        %vm2231 = vcmp.gt.f32.partialorder %v2219, 0.0
        %vm2232 = vcmp.gt.f32.partialorder %v2222, 0.0
        %v2233 = vstv %s2042
        %v2234 = vmul.f32 %v2233, %v2195
        %v2235 = vmul.f32 %v2233, %v2198
        %v2236 = vmul.f32 %v2233, %v2203
        %v2237 = vmul.f32 %v2233, %v2206
        %v2238 = vmul.f32 %v2233, %v2211
        %v2239 = vmul.f32 %v2233, %v2214
        %v2240 = vmul.f32 %v2233, %v2219
        %v2241 = vmul.f32 %v2233, %v2222
        %v2242 = vsel %vm2225, %v2195, %v2234
        %v2243 = vsel %vm2226, %v2198, %v2235
        %v2244 = vsel %vm2227, %v2203, %v2236
        %v2245 = vsel %vm2228, %v2206, %v2237
        %v2246 = vsel %vm2229, %v2211, %v2238
        %v2247 = vsel %vm2230, %v2214, %v2239
        %v2248 = vsel %vm2231, %v2219, %v2240
        %v2249 = vsel %vm2232, %v2222, %v2241
        %s2250 = scalar_lea.vmem %s7, 160
        %v2251 = vld [vmem:[%s2250] sm:$0xf]
        %v2252 = vld [vmem:[%s2250 + $0x4] sm:$0xf]
        %v2253 = vld [vmem:[%s2250 + $0x8] sm:$0xf]
        %v2254 = vld [vmem:[%s2250 + $0xc] sm:$0xf]
        %v2255 = vld [vmem:[%s2250 + $0x10] sm:$0xf]
        %v2256 = vld [vmem:[%s2250 + $0x14] sm:$0xf]
        %v2257 = vld [vmem:[%s2250 + $0x18] sm:$0xf]
        %v2258 = vld [vmem:[%s2250 + $0x1c] sm:$0xf]
        %2259 = vrot.lane.b32.xlu0 %v2242, 4
        %v2260 = vpop.permute.xlu0 %2259
        %2261 = vrot.lane.b32.xlu0 %v2243, 4
        %v2262 = vpop.permute.xlu0 %2261
        %2263 = vrot.lane.b32.xlu0 %v2244, 4
        %v2264 = vpop.permute.xlu0 %2263
        %2265 = vrot.lane.b32.xlu0 %v2245, 4
        %v2266 = vpop.permute.xlu0 %2265
        %2267 = vrot.lane.b32.xlu0 %v2246, 4
        %v2268 = vpop.permute.xlu0 %2267
        %2269 = vrot.lane.b32.xlu0 %v2247, 4
        %v2270 = vpop.permute.xlu0 %2269
        %2271 = vrot.lane.b32.xlu0 %v2248, 4
        %v2272 = vpop.permute.xlu0 %2271
        %2273 = vrot.lane.b32.xlu0 %v2249, 4
        %v2274 = vpop.permute.xlu0 %2273
        %v2275 = vsel %vm2070, %v2260, 0.0
        %v2276 = vsel %vm2070, %v2262, 0.0
        %v2277 = vsel %vm2070, %v2264, 0.0
        %v2278 = vsel %vm2070, %v2266, 0.0
        %v2279 = vsel %vm2070, %v2268, 0.0
        %v2280 = vsel %vm2070, %v2270, 0.0
        %v2281 = vsel %vm2070, %v2272, 0.0
        %v2282 = vsel %vm2070, %v2274, 0.0
        %v2283 = vpack.c.bf16 %v2276, %v2275
        %v2284 = vpack.c.bf16 %v2278, %v2277
        %v2285 = vpack.c.bf16 %v2280, %v2279
        %v2286 = vpack.c.bf16 %v2282, %v2281
        %v2287 = vpack.c.bf16 %v2243, %v2242
        %v2288 = vpack.c.bf16 %v2245, %v2244
        %v2289 = vpack.c.bf16 %v2247, %v2246
        %v2290 = vpack.c.bf16 %v2249, %v2248
        %s2291 = scalar_lea.vmem %s8, 320
        %v2292 = vld [vmem:[%s2291] sm:$0xff]
        %v2293 = vld [vmem:[%s2291 + $0x8] sm:$0xff]
        %v2294 = vld [vmem:[%s2291 + $0x10] sm:$0xff]
        %v2295 = vld [vmem:[%s2291 + $0x18] sm:$0xff]
        %v2296 = vld [vmem:[%s2291 + $0x20] sm:$0xff]
        %v2297 = vld [vmem:[%s2291 + $0x28] sm:$0xff]
        %v2298 = vld [vmem:[%s2291 + $0x30] sm:$0xff]
        %v2299 = vld [vmem:[%s2291 + $0x38] sm:$0xff]
        %2301 = vset.pattern.permute.xlu0 0
        %2302 = vperm.xlu0 %2301, %v2292
        %v2303 = vpop.permute.xlu0 %2302
        %2306 = vset.pattern.permute.xlu0 0
        %2307 = vperm.xlu0 %2306, %v2293
        %v2308 = vpop.permute.xlu0 %2307
        %2311 = vset.pattern.permute.xlu0 0
        %2312 = vperm.xlu0 %2311, %v2294
        %v2313 = vpop.permute.xlu0 %2312
        %2316 = vset.pattern.permute.xlu0 0
        %2317 = vperm.xlu0 %2316, %v2295
        %v2318 = vpop.permute.xlu0 %2317
        %2321 = vset.pattern.permute.xlu0 0
        %2322 = vperm.xlu0 %2321, %v2296
        %v2323 = vpop.permute.xlu0 %2322
        %2326 = vset.pattern.permute.xlu0 0
        %2327 = vperm.xlu0 %2326, %v2297
        %v2328 = vpop.permute.xlu0 %2327
        %2331 = vset.pattern.permute.xlu0 0
        %2332 = vperm.xlu0 %2331, %v2298
        %v2333 = vpop.permute.xlu0 %2332
        %2336 = vset.pattern.permute.xlu0 0
        %2337 = vperm.xlu0 %2336, %v2299
        %v2338 = vpop.permute.xlu0 %2337
        %v2348 = vunpack.c.l.b16 %v2251
        %v2349 = vunpack.c.l.b16 %v2252
        %v2350 = vunpack.c.l.b16 %v2253
        %v2351 = vunpack.c.l.b16 %v2254
        %v2352 = vunpack.c.l.b16 %v2255
        %v2353 = vunpack.c.l.b16 %v2256
        %v2354 = vunpack.c.l.b16 %v2257
        %v2355 = vunpack.c.l.b16 %v2258
        %v2356 = vpack.c.b16 %v2349, %v2348
        %v2357 = vpack.c.b16 %v2351, %v2350
        %v2358 = vpack.c.b16 %v2353, %v2352
        %v2359 = vpack.c.b16 %v2355, %v2354
        %2364 = vmatprep.subr.bf16.mxu0 0
        %2365 = vmatpush1.bf16.msra.mxu0 %v2283
        %2366 = vmatprep.subr.bf16.mxu0 0
        %2367 = vmatpush1.bf16.msra.mxu0 %v2284
        %2368 = vmatprep.subr.bf16.mxu0 0
        %2369 = vmatpush1.bf16.msra.mxu0 %v2285
        %2370 = vmatprep.subr.bf16.mxu0 0
        %2371 = vmatpush1.bf16.msra.mxu0 %v2286
        %2372 = vmatprep.subr.bf16.mxu0 0
        %2373 = vmatpush1.bf16.msra.mxu0 %v2287
        %2374 = vmatprep.subr.bf16.mxu0 0
        %2375 = vmatpush1.bf16.msra.mxu0 %v2288
        %2376 = vmatprep.subr.bf16.mxu0 0
        %2377 = vmatpush1.bf16.msra.mxu0 %v2289
        %2378 = vmatprep.subr.bf16.mxu0 0
        %2379 = vmatpush1.bf16.msra.mxu0 %v2290
        %2380 = vmatprep.subr.bf16.mxu0 0
        %2381 = vmatpush1.bf16.msra.mxu0 0
        %2382 = vmatprep.subr.bf16.mxu0 0
        %2383 = vmatpush1.bf16.msra.mxu0 0
        %2384 = vmatprep.subr.bf16.mxu0 0
        %2385 = vmatpush1.bf16.msra.mxu0 0
        %2386 = vmatprep.subr.bf16.mxu0 0
        %2387 = vmatpush1.bf16.msra.mxu0 0
        %2388 = vmatprep.subr.bf16.mxu0 0
        %2389 = vmatpush1.bf16.msra.mxu0 0
        %2390 = vmatprep.subr.bf16.mxu0 0
        %2391 = vmatpush1.bf16.msra.mxu0 0
        %2392 = vmatprep.subr.bf16.mxu0 0
        %2393 = vmatpush1.bf16.msra.mxu0 0
        %2394 = vmatprep.subr.bf16.mxu0 0
        %2395 = vmatpush1.bf16.msra.mxu0 0
        %2396 = vmatprep.mubr.bf16.mxu0 0
        %2397 = vmatmul.mubr.bf16.gmra.mrb[0].mxu0 %v2356
        %v2398 = vpop.f32.mrb[0].mxu0
        %v2399 = vadd.f32 %v2303, %v2398
        %v2400 = vpop.f32.mrb[0].mxu0
        %v2401 = vpop.f32.mrb[0].mxu0
        %v2402 = vadd.f32 %v2308, %v2401
        %v2403 = vpop.f32.mrb[0].mxu0
        %2404 = vmatprep.mubr.bf16.mxu0 0
        %2405 = vmatmul.mubr.bf16.gmra.mrb[0].mxu0 %v2357
        %v2406 = vpop.f32.mrb[0].mxu0
        %v2407 = vadd.f32 %v2313, %v2406
        %v2408 = vpop.f32.mrb[0].mxu0
        %v2409 = vpop.f32.mrb[0].mxu0
        %v2410 = vadd.f32 %v2318, %v2409
        %v2411 = vpop.f32.mrb[0].mxu0
        %2412 = vmatprep.mubr.bf16.mxu0 0
        %2413 = vmatmul.mubr.bf16.gmra.mrb[0].mxu0 %v2358
        %v2414 = vpop.f32.mrb[0].mxu0
        %v2415 = vadd.f32 %v2323, %v2414
        %v2416 = vpop.f32.mrb[0].mxu0
        %v2417 = vpop.f32.mrb[0].mxu0
        %v2418 = vadd.f32 %v2328, %v2417
        %v2419 = vpop.f32.mrb[0].mxu0
        %2420 = vmatprep.mubr.bf16.mxu0 0
        %2421 = vmatmul.mubr.bf16.gmra.mrb[0].mxu0 %v2359
        %v2422 = vpop.f32.mrb[0].mxu0
        %v2423 = vadd.f32 %v2333, %v2422
        %v2424 = vpop.f32.mrb[0].mxu0
        %v2425 = vpop.f32.mrb[0].mxu0
        %v2426 = vadd.f32 %v2338, %v2425
        %v2427 = vpop.f32.mrb[0].mxu0
        %2428 = vdwg.mxu0
        %vm2429 = vcmp.gt.f32.partialorder %v2399, 0.0
        %vm2430 = vcmp.gt.f32.partialorder %v2402, 0.0
        %vm2431 = vcmp.gt.f32.partialorder %v2407, 0.0
        %vm2432 = vcmp.gt.f32.partialorder %v2410, 0.0
        %vm2433 = vcmp.gt.f32.partialorder %v2415, 0.0
        %vm2434 = vcmp.gt.f32.partialorder %v2418, 0.0
        %vm2435 = vcmp.gt.f32.partialorder %v2423, 0.0
        %vm2436 = vcmp.gt.f32.partialorder %v2426, 0.0
        %v2437 = vstv %s2043
        %v2438 = vmul.f32 %v2437, %v2399
        %v2439 = vmul.f32 %v2437, %v2402
        %v2440 = vmul.f32 %v2437, %v2407
        %v2441 = vmul.f32 %v2437, %v2410
        %v2442 = vmul.f32 %v2437, %v2415
        %v2443 = vmul.f32 %v2437, %v2418
        %v2444 = vmul.f32 %v2437, %v2423
        %v2445 = vmul.f32 %v2437, %v2426
        %v2446 = vsel %vm2429, %v2399, %v2438
        %v2447 = vsel %vm2430, %v2402, %v2439
        %v2448 = vsel %vm2431, %v2407, %v2440
        %v2449 = vsel %vm2432, %v2410, %v2441
        %v2450 = vsel %vm2433, %v2415, %v2442
        %v2451 = vsel %vm2434, %v2418, %v2443
        %v2452 = vsel %vm2435, %v2423, %v2444
        %v2453 = vsel %vm2436, %v2426, %v2445
        %v2454 = vadd.f32 %v2446, %v2034
        %v2455 = vadd.f32 %v2447, %v2035
        %v2456 = vadd.f32 %v2448, %v2036
        %v2457 = vadd.f32 %v2449, %v2037
        %v2458 = vadd.f32 %v2450, %v2038
        %v2459 = vadd.f32 %v2451, %v2039
        %v2460 = vadd.f32 %v2452, %v2040
        %v2461 = vadd.f32 %v2453, %v2041
        %vm2462 = vcmp.gt.f32.partialorder %v2454, 0.0
        %vm2463 = vcmp.gt.f32.partialorder %v2455, 0.0
        %vm2464 = vcmp.gt.f32.partialorder %v2456, 0.0
        %vm2465 = vcmp.gt.f32.partialorder %v2457, 0.0
        %vm2466 = vcmp.gt.f32.partialorder %v2458, 0.0
        %vm2467 = vcmp.gt.f32.partialorder %v2459, 0.0
        %vm2468 = vcmp.gt.f32.partialorder %v2460, 0.0
        %vm2469 = vcmp.gt.f32.partialorder %v2461, 0.0
        %v2470 = vstv %s2044
        %v2471 = vmul.f32 %v2470, %v2454
        %v2472 = vmul.f32 %v2470, %v2455
        %v2473 = vmul.f32 %v2470, %v2456
        %v2474 = vmul.f32 %v2470, %v2457
        %v2475 = vmul.f32 %v2470, %v2458
        %v2476 = vmul.f32 %v2470, %v2459
        %v2477 = vmul.f32 %v2470, %v2460
        %v2478 = vmul.f32 %v2470, %v2461
        %v2479 = vsel %vm2462, %v2454, %v2471
        %v2480 = vsel %vm2463, %v2455, %v2472
        %v2481 = vsel %vm2464, %v2456, %v2473
        %v2482 = vsel %vm2465, %v2457, %v2474
        %v2483 = vsel %vm2466, %v2458, %v2475
        %v2484 = vsel %vm2467, %v2459, %v2476
        %v2485 = vsel %vm2468, %v2460, %v2477
        %v2486 = vsel %vm2469, %v2461, %v2478
        %s2487 = sld [smem:[#allocation2 + $0xc]]
        %s2488 = sld [smem:[#allocation2 + $0xd]]
        %s2489 = sld [smem:[#allocation2 + $0xe]]
        %s2490 = scalar_lea.vmem %s7, 192
        %v2491 = vld [vmem:[%s2490] sm:$0xf]
        %v2492 = vld [vmem:[%s2490 + $0x4] sm:$0xf]
        %v2493 = vld [vmem:[%s2490 + $0x8] sm:$0xf]
        %v2494 = vld [vmem:[%s2490 + $0xc] sm:$0xf]
        %v2495 = vld [vmem:[%s2490 + $0x10] sm:$0xf]
        %v2496 = vld [vmem:[%s2490 + $0x14] sm:$0xf]
        %v2497 = vld [vmem:[%s2490 + $0x18] sm:$0xf]
        %v2498 = vld [vmem:[%s2490 + $0x1c] sm:$0xf]
        %2499 = vrot.lane.b32.xlu0 %v2479, 8
        %v2500 = vpop.permute.xlu0 %2499
        %2501 = vrot.lane.b32.xlu0 %v2480, 8
        %v2502 = vpop.permute.xlu0 %2501
        %2503 = vrot.lane.b32.xlu0 %v2481, 8
        %v2504 = vpop.permute.xlu0 %2503
        %2505 = vrot.lane.b32.xlu0 %v2482, 8
        %v2506 = vpop.permute.xlu0 %2505
        %2507 = vrot.lane.b32.xlu0 %v2483, 8
        %v2508 = vpop.permute.xlu0 %2507
        %2509 = vrot.lane.b32.xlu0 %v2484, 8
        %v2510 = vpop.permute.xlu0 %2509
        %2511 = vrot.lane.b32.xlu0 %v2485, 8
        %v2512 = vpop.permute.xlu0 %2511
        %2513 = vrot.lane.b32.xlu0 %v2486, 8
        %v2514 = vpop.permute.xlu0 %2513
        %vm2515 = vcmp.ge.s32.totalorder %v1153, 8
        %v2516 = vsel %vm2515, %v2500, 0.0
        %v2517 = vsel %vm2515, %v2502, 0.0
        %v2518 = vsel %vm2515, %v2504, 0.0
        %v2519 = vsel %vm2515, %v2506, 0.0
        %v2520 = vsel %vm2515, %v2508, 0.0
        %v2521 = vsel %vm2515, %v2510, 0.0
        %v2522 = vsel %vm2515, %v2512, 0.0
        %v2523 = vsel %vm2515, %v2514, 0.0
        %v2524 = vpack.c.bf16 %v2517, %v2516
        %v2525 = vpack.c.bf16 %v2519, %v2518
        %v2526 = vpack.c.bf16 %v2521, %v2520
        %v2527 = vpack.c.bf16 %v2523, %v2522
        %v2528 = vpack.c.bf16 %v2480, %v2479
        %v2529 = vpack.c.bf16 %v2482, %v2481
        %v2530 = vpack.c.bf16 %v2484, %v2483
        %v2531 = vpack.c.bf16 %v2486, %v2485
        %s2532 = scalar_lea.vmem %s8, 384
        %v2533 = vld [vmem:[%s2532] sm:$0xff]
        %v2534 = vld [vmem:[%s2532 + $0x8] sm:$0xff]
        %v2535 = vld [vmem:[%s2532 + $0x10] sm:$0xff]
        %v2536 = vld [vmem:[%s2532 + $0x18] sm:$0xff]
        %v2537 = vld [vmem:[%s2532 + $0x20] sm:$0xff]
        %v2538 = vld [vmem:[%s2532 + $0x28] sm:$0xff]
        %v2539 = vld [vmem:[%s2532 + $0x30] sm:$0xff]
        %v2540 = vld [vmem:[%s2532 + $0x38] sm:$0xff]
        %2542 = vset.pattern.permute.xlu0 0
        %2543 = vperm.xlu0 %2542, %v2533
        %v2544 = vpop.permute.xlu0 %2543
        %2547 = vset.pattern.permute.xlu0 0
        %2548 = vperm.xlu0 %2547, %v2534
        %v2549 = vpop.permute.xlu0 %2548
        %2552 = vset.pattern.permute.xlu0 0
        %2553 = vperm.xlu0 %2552, %v2535
        %v2554 = vpop.permute.xlu0 %2553
        %2557 = vset.pattern.permute.xlu0 0
        %2558 = vperm.xlu0 %2557, %v2536
        %v2559 = vpop.permute.xlu0 %2558
        %2562 = vset.pattern.permute.xlu0 0
        %2563 = vperm.xlu0 %2562, %v2537
        %v2564 = vpop.permute.xlu0 %2563
        %2567 = vset.pattern.permute.xlu0 0
        %2568 = vperm.xlu0 %2567, %v2538
        %v2569 = vpop.permute.xlu0 %2568
        %2572 = vset.pattern.permute.xlu0 0
        %2573 = vperm.xlu0 %2572, %v2539
        %v2574 = vpop.permute.xlu0 %2573
        %2577 = vset.pattern.permute.xlu0 0
        %2578 = vperm.xlu0 %2577, %v2540
        %v2579 = vpop.permute.xlu0 %2578
        %v2589 = vunpack.c.l.b16 %v2491
        %v2590 = vunpack.c.l.b16 %v2492
        %v2591 = vunpack.c.l.b16 %v2493
        %v2592 = vunpack.c.l.b16 %v2494
        %v2593 = vunpack.c.l.b16 %v2495
        %v2594 = vunpack.c.l.b16 %v2496
        %v2595 = vunpack.c.l.b16 %v2497
        %v2596 = vunpack.c.l.b16 %v2498
        %v2597 = vpack.c.b16 %v2590, %v2589
        %v2598 = vpack.c.b16 %v2592, %v2591
        %v2599 = vpack.c.b16 %v2594, %v2593
        %v2600 = vpack.c.b16 %v2596, %v2595
        %2605 = vmatprep.subr.bf16.mxu0 0
        %2606 = vmatpush1.bf16.msra.mxu0 %v2524
        %2607 = vmatprep.subr.bf16.mxu0 0
        %2608 = vmatpush1.bf16.msra.mxu0 %v2525
        %2609 = vmatprep.subr.bf16.mxu0 0
        %2610 = vmatpush1.bf16.msra.mxu0 %v2526
        %2611 = vmatprep.subr.bf16.mxu0 0
        %2612 = vmatpush1.bf16.msra.mxu0 %v2527
        %2613 = vmatprep.subr.bf16.mxu0 0
        %2614 = vmatpush1.bf16.msra.mxu0 %v2528
        %2615 = vmatprep.subr.bf16.mxu0 0
        %2616 = vmatpush1.bf16.msra.mxu0 %v2529
        %2617 = vmatprep.subr.bf16.mxu0 0
        %2618 = vmatpush1.bf16.msra.mxu0 %v2530
        %2619 = vmatprep.subr.bf16.mxu0 0
        %2620 = vmatpush1.bf16.msra.mxu0 %v2531
        %2621 = vmatprep.subr.bf16.mxu0 0
        %2622 = vmatpush1.bf16.msra.mxu0 0
        %2623 = vmatprep.subr.bf16.mxu0 0
        %2624 = vmatpush1.bf16.msra.mxu0 0
        %2625 = vmatprep.subr.bf16.mxu0 0
        %2626 = vmatpush1.bf16.msra.mxu0 0
        %2627 = vmatprep.subr.bf16.mxu0 0
        %2628 = vmatpush1.bf16.msra.mxu0 0
        %2629 = vmatprep.subr.bf16.mxu0 0
        %2630 = vmatpush1.bf16.msra.mxu0 0
        %2631 = vmatprep.subr.bf16.mxu0 0
        %2632 = vmatpush1.bf16.msra.mxu0 0
        %2633 = vmatprep.subr.bf16.mxu0 0
        %2634 = vmatpush1.bf16.msra.mxu0 0
        %2635 = vmatprep.subr.bf16.mxu0 0
        %2636 = vmatpush1.bf16.msra.mxu0 0
        %2637 = vmatprep.mubr.bf16.mxu0 0
        %2638 = vmatmul.mubr.bf16.gmra.mrb[0].mxu0 %v2597
        %v2639 = vpop.f32.mrb[0].mxu0
        %v2640 = vadd.f32 %v2544, %v2639
        %v2641 = vpop.f32.mrb[0].mxu0
        %v2642 = vpop.f32.mrb[0].mxu0
        %v2643 = vadd.f32 %v2549, %v2642
        %v2644 = vpop.f32.mrb[0].mxu0
        %2645 = vmatprep.mubr.bf16.mxu0 0
        %2646 = vmatmul.mubr.bf16.gmra.mrb[0].mxu0 %v2598
        %v2647 = vpop.f32.mrb[0].mxu0
        %v2648 = vadd.f32 %v2554, %v2647
        %v2649 = vpop.f32.mrb[0].mxu0
        %v2650 = vpop.f32.mrb[0].mxu0
        %v2651 = vadd.f32 %v2559, %v2650
        %v2652 = vpop.f32.mrb[0].mxu0
        %2653 = vmatprep.mubr.bf16.mxu0 0
        %2654 = vmatmul.mubr.bf16.gmra.mrb[0].mxu0 %v2599
        %v2655 = vpop.f32.mrb[0].mxu0
        %v2656 = vadd.f32 %v2564, %v2655
        %v2657 = vpop.f32.mrb[0].mxu0
        %v2658 = vpop.f32.mrb[0].mxu0
        %v2659 = vadd.f32 %v2569, %v2658
        %v2660 = vpop.f32.mrb[0].mxu0
        %2661 = vmatprep.mubr.bf16.mxu0 0
        %2662 = vmatmul.mubr.bf16.gmra.mrb[0].mxu0 %v2600
        %v2663 = vpop.f32.mrb[0].mxu0
        %v2664 = vadd.f32 %v2574, %v2663
        %v2665 = vpop.f32.mrb[0].mxu0
        %v2666 = vpop.f32.mrb[0].mxu0
        %v2667 = vadd.f32 %v2579, %v2666
        %v2668 = vpop.f32.mrb[0].mxu0
        %2669 = vdwg.mxu0
        %vm2670 = vcmp.gt.f32.partialorder %v2640, 0.0
        %vm2671 = vcmp.gt.f32.partialorder %v2643, 0.0
        %vm2672 = vcmp.gt.f32.partialorder %v2648, 0.0
        %vm2673 = vcmp.gt.f32.partialorder %v2651, 0.0
        %vm2674 = vcmp.gt.f32.partialorder %v2656, 0.0
        %vm2675 = vcmp.gt.f32.partialorder %v2659, 0.0
        %vm2676 = vcmp.gt.f32.partialorder %v2664, 0.0
        %vm2677 = vcmp.gt.f32.partialorder %v2667, 0.0
        %v2678 = vstv %s2487
        %v2679 = vmul.f32 %v2678, %v2640
        %v2680 = vmul.f32 %v2678, %v2643
        %v2681 = vmul.f32 %v2678, %v2648
        %v2682 = vmul.f32 %v2678, %v2651
        %v2683 = vmul.f32 %v2678, %v2656
        %v2684 = vmul.f32 %v2678, %v2659
        %v2685 = vmul.f32 %v2678, %v2664
        %v2686 = vmul.f32 %v2678, %v2667
        %v2687 = vsel %vm2670, %v2640, %v2679
        %v2688 = vsel %vm2671, %v2643, %v2680
        %v2689 = vsel %vm2672, %v2648, %v2681
        %v2690 = vsel %vm2673, %v2651, %v2682
        %v2691 = vsel %vm2674, %v2656, %v2683
        %v2692 = vsel %vm2675, %v2659, %v2684
        %v2693 = vsel %vm2676, %v2664, %v2685
        %v2694 = vsel %vm2677, %v2667, %v2686
        %s2695 = scalar_lea.vmem %s7, 224
        %v2696 = vld [vmem:[%s2695] sm:$0xf]
        %v2697 = vld [vmem:[%s2695 + $0x4] sm:$0xf]
        %v2698 = vld [vmem:[%s2695 + $0x8] sm:$0xf]
        %v2699 = vld [vmem:[%s2695 + $0xc] sm:$0xf]
        %v2700 = vld [vmem:[%s2695 + $0x10] sm:$0xf]
        %v2701 = vld [vmem:[%s2695 + $0x14] sm:$0xf]
        %v2702 = vld [vmem:[%s2695 + $0x18] sm:$0xf]
        %v2703 = vld [vmem:[%s2695 + $0x1c] sm:$0xf]
        %2704 = vrot.lane.b32.xlu0 %v2687, 8
        %v2705 = vpop.permute.xlu0 %2704
        %2706 = vrot.lane.b32.xlu0 %v2688, 8
        %v2707 = vpop.permute.xlu0 %2706
        %2708 = vrot.lane.b32.xlu0 %v2689, 8
        %v2709 = vpop.permute.xlu0 %2708
        %2710 = vrot.lane.b32.xlu0 %v2690, 8
        %v2711 = vpop.permute.xlu0 %2710
        %2712 = vrot.lane.b32.xlu0 %v2691, 8
        %v2713 = vpop.permute.xlu0 %2712
        %2714 = vrot.lane.b32.xlu0 %v2692, 8
        %v2715 = vpop.permute.xlu0 %2714
        %2716 = vrot.lane.b32.xlu0 %v2693, 8
        %v2717 = vpop.permute.xlu0 %2716
        %2718 = vrot.lane.b32.xlu0 %v2694, 8
        %v2719 = vpop.permute.xlu0 %2718
        %v2720 = vsel %vm2515, %v2705, 0.0
        %v2721 = vsel %vm2515, %v2707, 0.0
        %v2722 = vsel %vm2515, %v2709, 0.0
        %v2723 = vsel %vm2515, %v2711, 0.0
        %v2724 = vsel %vm2515, %v2713, 0.0
        %v2725 = vsel %vm2515, %v2715, 0.0
        %v2726 = vsel %vm2515, %v2717, 0.0
        %v2727 = vsel %vm2515, %v2719, 0.0
        %v2728 = vpack.c.bf16 %v2721, %v2720
        %v2729 = vpack.c.bf16 %v2723, %v2722
        %v2730 = vpack.c.bf16 %v2725, %v2724
        %v2731 = vpack.c.bf16 %v2727, %v2726
        %v2732 = vpack.c.bf16 %v2688, %v2687
        %v2733 = vpack.c.bf16 %v2690, %v2689
        %v2734 = vpack.c.bf16 %v2692, %v2691
        %v2735 = vpack.c.bf16 %v2694, %v2693
        %s2736 = scalar_lea.vmem %s8, 448
        %v2737 = vld [vmem:[%s2736] sm:$0xff]
        %v2738 = vld [vmem:[%s2736 + $0x8] sm:$0xff]
        %v2739 = vld [vmem:[%s2736 + $0x10] sm:$0xff]
        %v2740 = vld [vmem:[%s2736 + $0x18] sm:$0xff]
        %v2741 = vld [vmem:[%s2736 + $0x20] sm:$0xff]
        %v2742 = vld [vmem:[%s2736 + $0x28] sm:$0xff]
        %v2743 = vld [vmem:[%s2736 + $0x30] sm:$0xff]
        %v2744 = vld [vmem:[%s2736 + $0x38] sm:$0xff]
        %2746 = vset.pattern.permute.xlu0 0
        %2747 = vperm.xlu0 %2746, %v2737
        %v2748 = vpop.permute.xlu0 %2747
        %2751 = vset.pattern.permute.xlu0 0
        %2752 = vperm.xlu0 %2751, %v2738
        %v2753 = vpop.permute.xlu0 %2752
        %2756 = vset.pattern.permute.xlu0 0
        %2757 = vperm.xlu0 %2756, %v2739
        %v2758 = vpop.permute.xlu0 %2757
        %2761 = vset.pattern.permute.xlu0 0
        %2762 = vperm.xlu0 %2761, %v2740
        %v2763 = vpop.permute.xlu0 %2762
        %2766 = vset.pattern.permute.xlu0 0
        %2767 = vperm.xlu0 %2766, %v2741
        %v2768 = vpop.permute.xlu0 %2767
        %2771 = vset.pattern.permute.xlu0 0
        %2772 = vperm.xlu0 %2771, %v2742
        %v2773 = vpop.permute.xlu0 %2772
        %2776 = vset.pattern.permute.xlu0 0
        %2777 = vperm.xlu0 %2776, %v2743
        %v2778 = vpop.permute.xlu0 %2777
        %2781 = vset.pattern.permute.xlu0 0
        %2782 = vperm.xlu0 %2781, %v2744
        %v2783 = vpop.permute.xlu0 %2782
        %v2793 = vunpack.c.l.b16 %v2696
        %v2794 = vunpack.c.l.b16 %v2697
        %v2795 = vunpack.c.l.b16 %v2698
        %v2796 = vunpack.c.l.b16 %v2699
        %v2797 = vunpack.c.l.b16 %v2700
        %v2798 = vunpack.c.l.b16 %v2701
        %v2799 = vunpack.c.l.b16 %v2702
        %v2800 = vunpack.c.l.b16 %v2703
        %v2801 = vpack.c.b16 %v2794, %v2793
        %v2802 = vpack.c.b16 %v2796, %v2795
        %v2803 = vpack.c.b16 %v2798, %v2797
        %v2804 = vpack.c.b16 %v2800, %v2799
        %2809 = vmatprep.subr.bf16.mxu0 0
        %2810 = vmatpush1.bf16.msra.mxu0 %v2728
        %2811 = vmatprep.subr.bf16.mxu0 0
        %2812 = vmatpush1.bf16.msra.mxu0 %v2729
        %2813 = vmatprep.subr.bf16.mxu0 0
        %2814 = vmatpush1.bf16.msra.mxu0 %v2730
        %2815 = vmatprep.subr.bf16.mxu0 0
        %2816 = vmatpush1.bf16.msra.mxu0 %v2731
        %2817 = vmatprep.subr.bf16.mxu0 0
        %2818 = vmatpush1.bf16.msra.mxu0 %v2732
        %2819 = vmatprep.subr.bf16.mxu0 0
        %2820 = vmatpush1.bf16.msra.mxu0 %v2733
        %2821 = vmatprep.subr.bf16.mxu0 0
        %2822 = vmatpush1.bf16.msra.mxu0 %v2734
        %2823 = vmatprep.subr.bf16.mxu0 0
        %2824 = vmatpush1.bf16.msra.mxu0 %v2735
        %2825 = vmatprep.subr.bf16.mxu0 0
        %2826 = vmatpush1.bf16.msra.mxu0 0
        %2827 = vmatprep.subr.bf16.mxu0 0
        %2828 = vmatpush1.bf16.msra.mxu0 0
        %2829 = vmatprep.subr.bf16.mxu0 0
        %2830 = vmatpush1.bf16.msra.mxu0 0
        %2831 = vmatprep.subr.bf16.mxu0 0
        %2832 = vmatpush1.bf16.msra.mxu0 0
        %2833 = vmatprep.subr.bf16.mxu0 0
        %2834 = vmatpush1.bf16.msra.mxu0 0
        %2835 = vmatprep.subr.bf16.mxu0 0
        %2836 = vmatpush1.bf16.msra.mxu0 0
        %2837 = vmatprep.subr.bf16.mxu0 0
        %2838 = vmatpush1.bf16.msra.mxu0 0
        %2839 = vmatprep.subr.bf16.mxu0 0
        %2840 = vmatpush1.bf16.msra.mxu0 0
        %2841 = vmatprep.mubr.bf16.mxu0 0
        %2842 = vmatmul.mubr.bf16.gmra.mrb[0].mxu0 %v2801
        %v2843 = vpop.f32.mrb[0].mxu0
        %v2844 = vadd.f32 %v2748, %v2843
        %v2845 = vpop.f32.mrb[0].mxu0
        %v2846 = vpop.f32.mrb[0].mxu0
        %v2847 = vadd.f32 %v2753, %v2846
        %v2848 = vpop.f32.mrb[0].mxu0
        %2849 = vmatprep.mubr.bf16.mxu0 0
        %2850 = vmatmul.mubr.bf16.gmra.mrb[0].mxu0 %v2802
        %v2851 = vpop.f32.mrb[0].mxu0
        %v2852 = vadd.f32 %v2758, %v2851
        %v2853 = vpop.f32.mrb[0].mxu0
        %v2854 = vpop.f32.mrb[0].mxu0
        %v2855 = vadd.f32 %v2763, %v2854
        %v2856 = vpop.f32.mrb[0].mxu0
        %2857 = vmatprep.mubr.bf16.mxu0 0
        %2858 = vmatmul.mubr.bf16.gmra.mrb[0].mxu0 %v2803
        %v2859 = vpop.f32.mrb[0].mxu0
        %v2860 = vadd.f32 %v2768, %v2859
        %v2861 = vpop.f32.mrb[0].mxu0
        %v2862 = vpop.f32.mrb[0].mxu0
        %v2863 = vadd.f32 %v2773, %v2862
        %v2864 = vpop.f32.mrb[0].mxu0
        %2865 = vmatprep.mubr.bf16.mxu0 0
        %2866 = vmatmul.mubr.bf16.gmra.mrb[0].mxu0 %v2804
        %v2867 = vpop.f32.mrb[0].mxu0
        %v2868 = vadd.f32 %v2778, %v2867
        %v2869 = vpop.f32.mrb[0].mxu0
        %v2870 = vpop.f32.mrb[0].mxu0
        %v2871 = vadd.f32 %v2783, %v2870
        %v2872 = vpop.f32.mrb[0].mxu0
        %2873 = vdwg.mxu0
        %vm2874 = vcmp.gt.f32.partialorder %v2844, 0.0
        %vm2875 = vcmp.gt.f32.partialorder %v2847, 0.0
        %vm2876 = vcmp.gt.f32.partialorder %v2852, 0.0
        %vm2877 = vcmp.gt.f32.partialorder %v2855, 0.0
        %vm2878 = vcmp.gt.f32.partialorder %v2860, 0.0
        %vm2879 = vcmp.gt.f32.partialorder %v2863, 0.0
        %vm2880 = vcmp.gt.f32.partialorder %v2868, 0.0
        %vm2881 = vcmp.gt.f32.partialorder %v2871, 0.0
        %v2882 = vstv %s2488
        %v2883 = vmul.f32 %v2882, %v2844
        %v2884 = vmul.f32 %v2882, %v2847
        %v2885 = vmul.f32 %v2882, %v2852
        %v2886 = vmul.f32 %v2882, %v2855
        %v2887 = vmul.f32 %v2882, %v2860
        %v2888 = vmul.f32 %v2882, %v2863
        %v2889 = vmul.f32 %v2882, %v2868
        %v2890 = vmul.f32 %v2882, %v2871
        %v2891 = vsel %vm2874, %v2844, %v2883
        %v2892 = vsel %vm2875, %v2847, %v2884
        %v2893 = vsel %vm2876, %v2852, %v2885
        %v2894 = vsel %vm2877, %v2855, %v2886
        %v2895 = vsel %vm2878, %v2860, %v2887
        %v2896 = vsel %vm2879, %v2863, %v2888
        %v2897 = vsel %vm2880, %v2868, %v2889
        %v2898 = vsel %vm2881, %v2871, %v2890
        %v2899 = vadd.f32 %v2891, %v2479
        %v2900 = vadd.f32 %v2892, %v2480
        %v2901 = vadd.f32 %v2893, %v2481
        %v2902 = vadd.f32 %v2894, %v2482
        %v2903 = vadd.f32 %v2895, %v2483
        %v2904 = vadd.f32 %v2896, %v2484
        %v2905 = vadd.f32 %v2897, %v2485
        %v2906 = vadd.f32 %v2898, %v2486
        %vm2907 = vcmp.gt.f32.partialorder %v2899, 0.0
        %vm2908 = vcmp.gt.f32.partialorder %v2900, 0.0
        %vm2909 = vcmp.gt.f32.partialorder %v2901, 0.0
        %vm2910 = vcmp.gt.f32.partialorder %v2902, 0.0
        %vm2911 = vcmp.gt.f32.partialorder %v2903, 0.0
        %vm2912 = vcmp.gt.f32.partialorder %v2904, 0.0
        %vm2913 = vcmp.gt.f32.partialorder %v2905, 0.0
        %vm2914 = vcmp.gt.f32.partialorder %v2906, 0.0
        %v2915 = vstv %s2489
        %v2916 = vmul.f32 %v2915, %v2899
        %v2917 = vmul.f32 %v2915, %v2900
        %v2918 = vmul.f32 %v2915, %v2901
        %v2919 = vmul.f32 %v2915, %v2902
        %v2920 = vmul.f32 %v2915, %v2903
        %v2921 = vmul.f32 %v2915, %v2904
        %v2922 = vmul.f32 %v2915, %v2905
        %v2923 = vmul.f32 %v2915, %v2906
        %v2924 = vsel %vm2907, %v2899, %v2916
        %v2925 = vsel %vm2908, %v2900, %v2917
        %v2926 = vsel %vm2909, %v2901, %v2918
        %v2927 = vsel %vm2910, %v2902, %v2919
        %v2928 = vsel %vm2911, %v2903, %v2920
        %v2929 = vsel %vm2912, %v2904, %v2921
        %v2930 = vsel %vm2913, %v2905, %v2922
        %v2931 = vsel %vm2914, %v2906, %v2923
        %s2932 = sld [smem:[#allocation2 + $0xf]]
        %s2933 = sld [smem:[#allocation2 + $0x10]]
        %s2934 = sld [smem:[#allocation2 + $0x11]]
        %s2935 = scalar_lea.vmem %s7, 256
        %v2936 = vld [vmem:[%s2935] sm:$0xf]
        %v2937 = vld [vmem:[%s2935 + $0x4] sm:$0xf]
        %v2938 = vld [vmem:[%s2935 + $0x8] sm:$0xf]
        %v2939 = vld [vmem:[%s2935 + $0xc] sm:$0xf]
        %v2940 = vld [vmem:[%s2935 + $0x10] sm:$0xf]
        %v2941 = vld [vmem:[%s2935 + $0x14] sm:$0xf]
        %v2942 = vld [vmem:[%s2935 + $0x18] sm:$0xf]
        %v2943 = vld [vmem:[%s2935 + $0x1c] sm:$0xf]
        %2944 = vrot.lane.b32.xlu0 %v2924, 16
        %v2945 = vpop.permute.xlu0 %2944
        %2946 = vrot.lane.b32.xlu0 %v2925, 16
        %v2947 = vpop.permute.xlu0 %2946
        %2948 = vrot.lane.b32.xlu0 %v2926, 16
        %v2949 = vpop.permute.xlu0 %2948
        %2950 = vrot.lane.b32.xlu0 %v2927, 16
        %v2951 = vpop.permute.xlu0 %2950
        %2952 = vrot.lane.b32.xlu0 %v2928, 16
        %v2953 = vpop.permute.xlu0 %2952
        %2954 = vrot.lane.b32.xlu0 %v2929, 16
        %v2955 = vpop.permute.xlu0 %2954
        %2956 = vrot.lane.b32.xlu0 %v2930, 16
        %v2957 = vpop.permute.xlu0 %2956
        %2958 = vrot.lane.b32.xlu0 %v2931, 16
        %v2959 = vpop.permute.xlu0 %2958
        %vm2960 = vcmp.ge.s32.totalorder %v1153, 16
        %v2961 = vsel %vm2960, %v2945, 0.0
        %v2962 = vsel %vm2960, %v2947, 0.0
        %v2963 = vsel %vm2960, %v2949, 0.0
        %v2964 = vsel %vm2960, %v2951, 0.0
        %v2965 = vsel %vm2960, %v2953, 0.0
        %v2966 = vsel %vm2960, %v2955, 0.0
        %v2967 = vsel %vm2960, %v2957, 0.0
        %v2968 = vsel %vm2960, %v2959, 0.0
        %v2969 = vpack.c.bf16 %v2962, %v2961
        %v2970 = vpack.c.bf16 %v2964, %v2963
        %v2971 = vpack.c.bf16 %v2966, %v2965
        %v2972 = vpack.c.bf16 %v2968, %v2967
        %v2973 = vpack.c.bf16 %v2925, %v2924
        %v2974 = vpack.c.bf16 %v2927, %v2926
        %v2975 = vpack.c.bf16 %v2929, %v2928
        %v2976 = vpack.c.bf16 %v2931, %v2930
        %s2977 = scalar_lea.vmem %s8, 512
        %v2978 = vld [vmem:[%s2977] sm:$0xff]
        %v2979 = vld [vmem:[%s2977 + $0x8] sm:$0xff]
        %v2980 = vld [vmem:[%s2977 + $0x10] sm:$0xff]
        %v2981 = vld [vmem:[%s2977 + $0x18] sm:$0xff]
        %v2982 = vld [vmem:[%s2977 + $0x20] sm:$0xff]
        %v2983 = vld [vmem:[%s2977 + $0x28] sm:$0xff]
        %v2984 = vld [vmem:[%s2977 + $0x30] sm:$0xff]
        %v2985 = vld [vmem:[%s2977 + $0x38] sm:$0xff]
        %2987 = vset.pattern.permute.xlu0 0
        %2988 = vperm.xlu0 %2987, %v2978
        %v2989 = vpop.permute.xlu0 %2988
        %2992 = vset.pattern.permute.xlu0 0
        %2993 = vperm.xlu0 %2992, %v2979
        %v2994 = vpop.permute.xlu0 %2993
        %2997 = vset.pattern.permute.xlu0 0
        %2998 = vperm.xlu0 %2997, %v2980
        %v2999 = vpop.permute.xlu0 %2998
        %3002 = vset.pattern.permute.xlu0 0
        %3003 = vperm.xlu0 %3002, %v2981
        %v3004 = vpop.permute.xlu0 %3003
        %3007 = vset.pattern.permute.xlu0 0
        %3008 = vperm.xlu0 %3007, %v2982
        %v3009 = vpop.permute.xlu0 %3008
        %3012 = vset.pattern.permute.xlu0 0
        %3013 = vperm.xlu0 %3012, %v2983
        %v3014 = vpop.permute.xlu0 %3013
        %3017 = vset.pattern.permute.xlu0 0
        %3018 = vperm.xlu0 %3017, %v2984
        %v3019 = vpop.permute.xlu0 %3018
        %3022 = vset.pattern.permute.xlu0 0
        %3023 = vperm.xlu0 %3022, %v2985
        %v3024 = vpop.permute.xlu0 %3023
        %v3034 = vunpack.c.l.b16 %v2936
        %v3035 = vunpack.c.l.b16 %v2937
        %v3036 = vunpack.c.l.b16 %v2938
        %v3037 = vunpack.c.l.b16 %v2939
        %v3038 = vunpack.c.l.b16 %v2940
        %v3039 = vunpack.c.l.b16 %v2941
        %v3040 = vunpack.c.l.b16 %v2942
        %v3041 = vunpack.c.l.b16 %v2943
        %v3042 = vpack.c.b16 %v3035, %v3034
        %v3043 = vpack.c.b16 %v3037, %v3036
        %v3044 = vpack.c.b16 %v3039, %v3038
        %v3045 = vpack.c.b16 %v3041, %v3040
        %3050 = vmatprep.subr.bf16.mxu0 0
        %3051 = vmatpush1.bf16.msra.mxu0 %v2969
        %3052 = vmatprep.subr.bf16.mxu0 0
        %3053 = vmatpush1.bf16.msra.mxu0 %v2970
        %3054 = vmatprep.subr.bf16.mxu0 0
        %3055 = vmatpush1.bf16.msra.mxu0 %v2971
        %3056 = vmatprep.subr.bf16.mxu0 0
        %3057 = vmatpush1.bf16.msra.mxu0 %v2972
        %3058 = vmatprep.subr.bf16.mxu0 0
        %3059 = vmatpush1.bf16.msra.mxu0 %v2973
        %3060 = vmatprep.subr.bf16.mxu0 0
        %3061 = vmatpush1.bf16.msra.mxu0 %v2974
        %3062 = vmatprep.subr.bf16.mxu0 0
        %3063 = vmatpush1.bf16.msra.mxu0 %v2975
        %3064 = vmatprep.subr.bf16.mxu0 0
        %3065 = vmatpush1.bf16.msra.mxu0 %v2976
        %3066 = vmatprep.subr.bf16.mxu0 0
        %3067 = vmatpush1.bf16.msra.mxu0 0
        %3068 = vmatprep.subr.bf16.mxu0 0
        %3069 = vmatpush1.bf16.msra.mxu0 0
        %3070 = vmatprep.subr.bf16.mxu0 0
        %3071 = vmatpush1.bf16.msra.mxu0 0
        %3072 = vmatprep.subr.bf16.mxu0 0
        %3073 = vmatpush1.bf16.msra.mxu0 0
        %3074 = vmatprep.subr.bf16.mxu0 0
        %3075 = vmatpush1.bf16.msra.mxu0 0
        %3076 = vmatprep.subr.bf16.mxu0 0
        %3077 = vmatpush1.bf16.msra.mxu0 0
        %3078 = vmatprep.subr.bf16.mxu0 0
        %3079 = vmatpush1.bf16.msra.mxu0 0
        %3080 = vmatprep.subr.bf16.mxu0 0
        %3081 = vmatpush1.bf16.msra.mxu0 0
        %3082 = vmatprep.mubr.bf16.mxu0 0
        %3083 = vmatmul.mubr.bf16.gmra.mrb[0].mxu0 %v3042
        %v3084 = vpop.f32.mrb[0].mxu0
        %v3085 = vadd.f32 %v2989, %v3084
        %v3086 = vpop.f32.mrb[0].mxu0
        %v3087 = vpop.f32.mrb[0].mxu0
        %v3088 = vadd.f32 %v2994, %v3087
        %v3089 = vpop.f32.mrb[0].mxu0
        %3090 = vmatprep.mubr.bf16.mxu0 0
        %3091 = vmatmul.mubr.bf16.gmra.mrb[0].mxu0 %v3043
        %v3092 = vpop.f32.mrb[0].mxu0
        %v3093 = vadd.f32 %v2999, %v3092
        %v3094 = vpop.f32.mrb[0].mxu0
        %v3095 = vpop.f32.mrb[0].mxu0
        %v3096 = vadd.f32 %v3004, %v3095
        %v3097 = vpop.f32.mrb[0].mxu0
        %3098 = vmatprep.mubr.bf16.mxu0 0
        %3099 = vmatmul.mubr.bf16.gmra.mrb[0].mxu0 %v3044
        %v3100 = vpop.f32.mrb[0].mxu0
        %v3101 = vadd.f32 %v3009, %v3100
        %v3102 = vpop.f32.mrb[0].mxu0
        %v3103 = vpop.f32.mrb[0].mxu0
        %v3104 = vadd.f32 %v3014, %v3103
        %v3105 = vpop.f32.mrb[0].mxu0
        %3106 = vmatprep.mubr.bf16.mxu0 0
        %3107 = vmatmul.mubr.bf16.gmra.mrb[0].mxu0 %v3045
        %v3108 = vpop.f32.mrb[0].mxu0
        %v3109 = vadd.f32 %v3019, %v3108
        %v3110 = vpop.f32.mrb[0].mxu0
        %v3111 = vpop.f32.mrb[0].mxu0
        %v3112 = vadd.f32 %v3024, %v3111
        %v3113 = vpop.f32.mrb[0].mxu0
        %3114 = vdwg.mxu0
        %vm3115 = vcmp.gt.f32.partialorder %v3085, 0.0
        %vm3116 = vcmp.gt.f32.partialorder %v3088, 0.0
        %vm3117 = vcmp.gt.f32.partialorder %v3093, 0.0
        %vm3118 = vcmp.gt.f32.partialorder %v3096, 0.0
        %vm3119 = vcmp.gt.f32.partialorder %v3101, 0.0
        %vm3120 = vcmp.gt.f32.partialorder %v3104, 0.0
        %vm3121 = vcmp.gt.f32.partialorder %v3109, 0.0
        %vm3122 = vcmp.gt.f32.partialorder %v3112, 0.0
        %v3123 = vstv %s2932
        %v3124 = vmul.f32 %v3123, %v3085
        %v3125 = vmul.f32 %v3123, %v3088
        %v3126 = vmul.f32 %v3123, %v3093
        %v3127 = vmul.f32 %v3123, %v3096
        %v3128 = vmul.f32 %v3123, %v3101
        %v3129 = vmul.f32 %v3123, %v3104
        %v3130 = vmul.f32 %v3123, %v3109
        %v3131 = vmul.f32 %v3123, %v3112
        %v3132 = vsel %vm3115, %v3085, %v3124
        %v3133 = vsel %vm3116, %v3088, %v3125
        %v3134 = vsel %vm3117, %v3093, %v3126
        %v3135 = vsel %vm3118, %v3096, %v3127
        %v3136 = vsel %vm3119, %v3101, %v3128
        %v3137 = vsel %vm3120, %v3104, %v3129
        %v3138 = vsel %vm3121, %v3109, %v3130
        %v3139 = vsel %vm3122, %v3112, %v3131
        %s3140 = scalar_lea.vmem %s7, 288
        %v3141 = vld [vmem:[%s3140] sm:$0xf]
        %v3142 = vld [vmem:[%s3140 + $0x4] sm:$0xf]
        %v3143 = vld [vmem:[%s3140 + $0x8] sm:$0xf]
        %v3144 = vld [vmem:[%s3140 + $0xc] sm:$0xf]
        %v3145 = vld [vmem:[%s3140 + $0x10] sm:$0xf]
        %v3146 = vld [vmem:[%s3140 + $0x14] sm:$0xf]
        %v3147 = vld [vmem:[%s3140 + $0x18] sm:$0xf]
        %v3148 = vld [vmem:[%s3140 + $0x1c] sm:$0xf]
        %3149 = vrot.lane.b32.xlu0 %v3132, 16
        %v3150 = vpop.permute.xlu0 %3149
        %3151 = vrot.lane.b32.xlu0 %v3133, 16
        %v3152 = vpop.permute.xlu0 %3151
        %3153 = vrot.lane.b32.xlu0 %v3134, 16
        %v3154 = vpop.permute.xlu0 %3153
        %3155 = vrot.lane.b32.xlu0 %v3135, 16
        %v3156 = vpop.permute.xlu0 %3155
        %3157 = vrot.lane.b32.xlu0 %v3136, 16
        %v3158 = vpop.permute.xlu0 %3157
        %3159 = vrot.lane.b32.xlu0 %v3137, 16
        %v3160 = vpop.permute.xlu0 %3159
        %3161 = vrot.lane.b32.xlu0 %v3138, 16
        %v3162 = vpop.permute.xlu0 %3161
        %3163 = vrot.lane.b32.xlu0 %v3139, 16
        %v3164 = vpop.permute.xlu0 %3163
        %v3165 = vsel %vm2960, %v3150, 0.0
        %v3166 = vsel %vm2960, %v3152, 0.0
        %v3167 = vsel %vm2960, %v3154, 0.0
        %v3168 = vsel %vm2960, %v3156, 0.0
        %v3169 = vsel %vm2960, %v3158, 0.0
        %v3170 = vsel %vm2960, %v3160, 0.0
        %v3171 = vsel %vm2960, %v3162, 0.0
        %v3172 = vsel %vm2960, %v3164, 0.0
        %v3173 = vpack.c.bf16 %v3166, %v3165
        %v3174 = vpack.c.bf16 %v3168, %v3167
        %v3175 = vpack.c.bf16 %v3170, %v3169
        %v3176 = vpack.c.bf16 %v3172, %v3171
        %v3177 = vpack.c.bf16 %v3133, %v3132
        %v3178 = vpack.c.bf16 %v3135, %v3134
        %v3179 = vpack.c.bf16 %v3137, %v3136
        %v3180 = vpack.c.bf16 %v3139, %v3138
        %s3181 = scalar_lea.vmem %s8, 576
        %v3182 = vld [vmem:[%s3181] sm:$0xff]
        %v3183 = vld [vmem:[%s3181 + $0x8] sm:$0xff]
        %v3184 = vld [vmem:[%s3181 + $0x10] sm:$0xff]
        %v3185 = vld [vmem:[%s3181 + $0x18] sm:$0xff]
        %v3186 = vld [vmem:[%s3181 + $0x20] sm:$0xff]
        %v3187 = vld [vmem:[%s3181 + $0x28] sm:$0xff]
        %v3188 = vld [vmem:[%s3181 + $0x30] sm:$0xff]
        %v3189 = vld [vmem:[%s3181 + $0x38] sm:$0xff]
        %3191 = vset.pattern.permute.xlu0 0
        %3192 = vperm.xlu0 %3191, %v3182
        %v3193 = vpop.permute.xlu0 %3192
        %3196 = vset.pattern.permute.xlu0 0
        %3197 = vperm.xlu0 %3196, %v3183
        %v3198 = vpop.permute.xlu0 %3197
        %3201 = vset.pattern.permute.xlu0 0
        %3202 = vperm.xlu0 %3201, %v3184
        %v3203 = vpop.permute.xlu0 %3202
        %3206 = vset.pattern.permute.xlu0 0
        %3207 = vperm.xlu0 %3206, %v3185
        %v3208 = vpop.permute.xlu0 %3207
        %3211 = vset.pattern.permute.xlu0 0
        %3212 = vperm.xlu0 %3211, %v3186
        %v3213 = vpop.permute.xlu0 %3212
        %3216 = vset.pattern.permute.xlu0 0
        %3217 = vperm.xlu0 %3216, %v3187
        %v3218 = vpop.permute.xlu0 %3217
        %3221 = vset.pattern.permute.xlu0 0
        %3222 = vperm.xlu0 %3221, %v3188
        %v3223 = vpop.permute.xlu0 %3222
        %3226 = vset.pattern.permute.xlu0 0
        %3227 = vperm.xlu0 %3226, %v3189
        %v3228 = vpop.permute.xlu0 %3227
        %v3238 = vunpack.c.l.b16 %v3141
        %v3239 = vunpack.c.l.b16 %v3142
        %v3240 = vunpack.c.l.b16 %v3143
        %v3241 = vunpack.c.l.b16 %v3144
        %v3242 = vunpack.c.l.b16 %v3145
        %v3243 = vunpack.c.l.b16 %v3146
        %v3244 = vunpack.c.l.b16 %v3147
        %v3245 = vunpack.c.l.b16 %v3148
        %v3246 = vpack.c.b16 %v3239, %v3238
        %v3247 = vpack.c.b16 %v3241, %v3240
        %v3248 = vpack.c.b16 %v3243, %v3242
        %v3249 = vpack.c.b16 %v3245, %v3244
        %3254 = vmatprep.subr.bf16.mxu0 0
        %3255 = vmatpush1.bf16.msra.mxu0 %v3173
        %3256 = vmatprep.subr.bf16.mxu0 0
        %3257 = vmatpush1.bf16.msra.mxu0 %v3174
        %3258 = vmatprep.subr.bf16.mxu0 0
        %3259 = vmatpush1.bf16.msra.mxu0 %v3175
        %3260 = vmatprep.subr.bf16.mxu0 0
        %3261 = vmatpush1.bf16.msra.mxu0 %v3176
        %3262 = vmatprep.subr.bf16.mxu0 0
        %3263 = vmatpush1.bf16.msra.mxu0 %v3177
        %3264 = vmatprep.subr.bf16.mxu0 0
        %3265 = vmatpush1.bf16.msra.mxu0 %v3178
        %3266 = vmatprep.subr.bf16.mxu0 0
        %3267 = vmatpush1.bf16.msra.mxu0 %v3179
        %3268 = vmatprep.subr.bf16.mxu0 0
        %3269 = vmatpush1.bf16.msra.mxu0 %v3180
        %3270 = vmatprep.subr.bf16.mxu0 0
        %3271 = vmatpush1.bf16.msra.mxu0 0
        %3272 = vmatprep.subr.bf16.mxu0 0
        %3273 = vmatpush1.bf16.msra.mxu0 0
        %3274 = vmatprep.subr.bf16.mxu0 0
        %3275 = vmatpush1.bf16.msra.mxu0 0
        %3276 = vmatprep.subr.bf16.mxu0 0
        %3277 = vmatpush1.bf16.msra.mxu0 0
        %3278 = vmatprep.subr.bf16.mxu0 0
        %3279 = vmatpush1.bf16.msra.mxu0 0
        %3280 = vmatprep.subr.bf16.mxu0 0
        %3281 = vmatpush1.bf16.msra.mxu0 0
        %3282 = vmatprep.subr.bf16.mxu0 0
        %3283 = vmatpush1.bf16.msra.mxu0 0
        %3284 = vmatprep.subr.bf16.mxu0 0
        %3285 = vmatpush1.bf16.msra.mxu0 0
        %3286 = vmatprep.mubr.bf16.mxu0 0
        %3287 = vmatmul.mubr.bf16.gmra.mrb[0].mxu0 %v3246
        %v3288 = vpop.f32.mrb[0].mxu0
        %v3289 = vadd.f32 %v3193, %v3288
        %v3290 = vpop.f32.mrb[0].mxu0
        %v3291 = vpop.f32.mrb[0].mxu0
        %v3292 = vadd.f32 %v3198, %v3291
        %v3293 = vpop.f32.mrb[0].mxu0
        %3294 = vmatprep.mubr.bf16.mxu0 0
        %3295 = vmatmul.mubr.bf16.gmra.mrb[0].mxu0 %v3247
        %v3296 = vpop.f32.mrb[0].mxu0
        %v3297 = vadd.f32 %v3203, %v3296
        %v3298 = vpop.f32.mrb[0].mxu0
        %v3299 = vpop.f32.mrb[0].mxu0
        %v3300 = vadd.f32 %v3208, %v3299
        %v3301 = vpop.f32.mrb[0].mxu0
        %3302 = vmatprep.mubr.bf16.mxu0 0
        %3303 = vmatmul.mubr.bf16.gmra.mrb[0].mxu0 %v3248
        %v3304 = vpop.f32.mrb[0].mxu0
        %v3305 = vadd.f32 %v3213, %v3304
        %v3306 = vpop.f32.mrb[0].mxu0
        %v3307 = vpop.f32.mrb[0].mxu0
        %v3308 = vadd.f32 %v3218, %v3307
        %v3309 = vpop.f32.mrb[0].mxu0
        %3310 = vmatprep.mubr.bf16.mxu0 0
        %3311 = vmatmul.mubr.bf16.gmra.mrb[0].mxu0 %v3249
        %v3312 = vpop.f32.mrb[0].mxu0
        %v3313 = vadd.f32 %v3223, %v3312
        %v3314 = vpop.f32.mrb[0].mxu0
        %v3315 = vpop.f32.mrb[0].mxu0
        %v3316 = vadd.f32 %v3228, %v3315
        %v3317 = vpop.f32.mrb[0].mxu0
        %3318 = vdwg.mxu0
        %vm3319 = vcmp.gt.f32.partialorder %v3289, 0.0
        %vm3320 = vcmp.gt.f32.partialorder %v3292, 0.0
        %vm3321 = vcmp.gt.f32.partialorder %v3297, 0.0
        %vm3322 = vcmp.gt.f32.partialorder %v3300, 0.0
        %vm3323 = vcmp.gt.f32.partialorder %v3305, 0.0
        %vm3324 = vcmp.gt.f32.partialorder %v3308, 0.0
        %vm3325 = vcmp.gt.f32.partialorder %v3313, 0.0
        %vm3326 = vcmp.gt.f32.partialorder %v3316, 0.0
        %v3327 = vstv %s2933
        %v3328 = vmul.f32 %v3327, %v3289
        %v3329 = vmul.f32 %v3327, %v3292
        %v3330 = vmul.f32 %v3327, %v3297
        %v3331 = vmul.f32 %v3327, %v3300
        %v3332 = vmul.f32 %v3327, %v3305
        %v3333 = vmul.f32 %v3327, %v3308
        %v3334 = vmul.f32 %v3327, %v3313
        %v3335 = vmul.f32 %v3327, %v3316
        %v3336 = vsel %vm3319, %v3289, %v3328
        %v3337 = vsel %vm3320, %v3292, %v3329
        %v3338 = vsel %vm3321, %v3297, %v3330
        %v3339 = vsel %vm3322, %v3300, %v3331
        %v3340 = vsel %vm3323, %v3305, %v3332
        %v3341 = vsel %vm3324, %v3308, %v3333
        %v3342 = vsel %vm3325, %v3313, %v3334
        %v3343 = vsel %vm3326, %v3316, %v3335
        %v3344 = vadd.f32 %v3336, %v2924
        %v3345 = vadd.f32 %v3337, %v2925
        %v3346 = vadd.f32 %v3338, %v2926
        %v3347 = vadd.f32 %v3339, %v2927
        %v3348 = vadd.f32 %v3340, %v2928
        %v3349 = vadd.f32 %v3341, %v2929
        %v3350 = vadd.f32 %v3342, %v2930
        %v3351 = vadd.f32 %v3343, %v2931
        %vm3352 = vcmp.gt.f32.partialorder %v3344, 0.0
        %vm3353 = vcmp.gt.f32.partialorder %v3345, 0.0
        %vm3354 = vcmp.gt.f32.partialorder %v3346, 0.0
        %vm3355 = vcmp.gt.f32.partialorder %v3347, 0.0
        %vm3356 = vcmp.gt.f32.partialorder %v3348, 0.0
        %vm3357 = vcmp.gt.f32.partialorder %v3349, 0.0
        %vm3358 = vcmp.gt.f32.partialorder %v3350, 0.0
        %vm3359 = vcmp.gt.f32.partialorder %v3351, 0.0
        %v3360 = vstv %s2934
        %v3361 = vmul.f32 %v3360, %v3344
        %v3362 = vmul.f32 %v3360, %v3345
        %v3363 = vmul.f32 %v3360, %v3346
        %v3364 = vmul.f32 %v3360, %v3347
        %v3365 = vmul.f32 %v3360, %v3348
        %v3366 = vmul.f32 %v3360, %v3349
        %v3367 = vmul.f32 %v3360, %v3350
        %v3368 = vmul.f32 %v3360, %v3351
        %v3369 = vsel %vm3352, %v3344, %v3361
        %v3370 = vsel %vm3353, %v3345, %v3362
        %v3371 = vsel %vm3354, %v3346, %v3363
        %v3372 = vsel %vm3355, %v3347, %v3364
        %v3373 = vsel %vm3356, %v3348, %v3365
        %v3374 = vsel %vm3357, %v3349, %v3366
        %v3375 = vsel %vm3358, %v3350, %v3367
        %v3376 = vsel %vm3359, %v3351, %v3368
        %s3377 = sld [smem:[#allocation2 + $0x12]]
        %s3378 = sld [smem:[#allocation2 + $0x13]]
        %s3379 = sld [smem:[#allocation2 + $0x14]]
        %s3380 = scalar_lea.vmem %s7, 320
        %v3381 = vld [vmem:[%s3380] sm:$0xf]
        %v3382 = vld [vmem:[%s3380 + $0x4] sm:$0xf]
        %v3383 = vld [vmem:[%s3380 + $0x8] sm:$0xf]
        %v3384 = vld [vmem:[%s3380 + $0xc] sm:$0xf]
        %v3385 = vld [vmem:[%s3380 + $0x10] sm:$0xf]
        %v3386 = vld [vmem:[%s3380 + $0x14] sm:$0xf]
        %v3387 = vld [vmem:[%s3380 + $0x18] sm:$0xf]
        %v3388 = vld [vmem:[%s3380 + $0x1c] sm:$0xf]
        %3389 = vrot.lane.b32.xlu0 %v3369, 32
        %v3390 = vpop.permute.xlu0 %3389
        %3391 = vrot.lane.b32.xlu0 %v3370, 32
        %v3392 = vpop.permute.xlu0 %3391
        %3393 = vrot.lane.b32.xlu0 %v3371, 32
        %v3394 = vpop.permute.xlu0 %3393
        %3395 = vrot.lane.b32.xlu0 %v3372, 32
        %v3396 = vpop.permute.xlu0 %3395
        %3397 = vrot.lane.b32.xlu0 %v3373, 32
        %v3398 = vpop.permute.xlu0 %3397
        %3399 = vrot.lane.b32.xlu0 %v3374, 32
        %v3400 = vpop.permute.xlu0 %3399
        %3401 = vrot.lane.b32.xlu0 %v3375, 32
        %v3402 = vpop.permute.xlu0 %3401
        %3403 = vrot.lane.b32.xlu0 %v3376, 32
        %v3404 = vpop.permute.xlu0 %3403
        %vm3405 = vcmp.ge.s32.totalorder %v1153, 32
        %v3406 = vsel %vm3405, %v3390, 0.0
        %v3407 = vsel %vm3405, %v3392, 0.0
        %v3408 = vsel %vm3405, %v3394, 0.0
        %v3409 = vsel %vm3405, %v3396, 0.0
        %v3410 = vsel %vm3405, %v3398, 0.0
        %v3411 = vsel %vm3405, %v3400, 0.0
        %v3412 = vsel %vm3405, %v3402, 0.0
        %v3413 = vsel %vm3405, %v3404, 0.0
        %v3414 = vpack.c.bf16 %v3407, %v3406
        %v3415 = vpack.c.bf16 %v3409, %v3408
        %v3416 = vpack.c.bf16 %v3411, %v3410
        %v3417 = vpack.c.bf16 %v3413, %v3412
        %v3418 = vpack.c.bf16 %v3370, %v3369
        %v3419 = vpack.c.bf16 %v3372, %v3371
        %v3420 = vpack.c.bf16 %v3374, %v3373
        %v3421 = vpack.c.bf16 %v3376, %v3375
        %s3422 = scalar_lea.vmem %s8, 640
        %v3423 = vld [vmem:[%s3422] sm:$0xff]
        %v3424 = vld [vmem:[%s3422 + $0x8] sm:$0xff]
        %v3425 = vld [vmem:[%s3422 + $0x10] sm:$0xff]
        %v3426 = vld [vmem:[%s3422 + $0x18] sm:$0xff]
        %v3427 = vld [vmem:[%s3422 + $0x20] sm:$0xff]
        %v3428 = vld [vmem:[%s3422 + $0x28] sm:$0xff]
        %v3429 = vld [vmem:[%s3422 + $0x30] sm:$0xff]
        %v3430 = vld [vmem:[%s3422 + $0x38] sm:$0xff]
        %3432 = vset.pattern.permute.xlu0 0
        %3433 = vperm.xlu0 %3432, %v3423
        %v3434 = vpop.permute.xlu0 %3433
        %3437 = vset.pattern.permute.xlu0 0
        %3438 = vperm.xlu0 %3437, %v3424
        %v3439 = vpop.permute.xlu0 %3438
        %3442 = vset.pattern.permute.xlu0 0
        %3443 = vperm.xlu0 %3442, %v3425
        %v3444 = vpop.permute.xlu0 %3443
        %3447 = vset.pattern.permute.xlu0 0
        %3448 = vperm.xlu0 %3447, %v3426
        %v3449 = vpop.permute.xlu0 %3448
        %3452 = vset.pattern.permute.xlu0 0
        %3453 = vperm.xlu0 %3452, %v3427
        %v3454 = vpop.permute.xlu0 %3453
        %3457 = vset.pattern.permute.xlu0 0
        %3458 = vperm.xlu0 %3457, %v3428
        %v3459 = vpop.permute.xlu0 %3458
        %3462 = vset.pattern.permute.xlu0 0
        %3463 = vperm.xlu0 %3462, %v3429
        %v3464 = vpop.permute.xlu0 %3463
        %3467 = vset.pattern.permute.xlu0 0
        %3468 = vperm.xlu0 %3467, %v3430
        %v3469 = vpop.permute.xlu0 %3468
        %v3479 = vunpack.c.l.b16 %v3381
        %v3480 = vunpack.c.l.b16 %v3382
        %v3481 = vunpack.c.l.b16 %v3383
        %v3482 = vunpack.c.l.b16 %v3384
        %v3483 = vunpack.c.l.b16 %v3385
        %v3484 = vunpack.c.l.b16 %v3386
        %v3485 = vunpack.c.l.b16 %v3387
        %v3486 = vunpack.c.l.b16 %v3388
        %v3487 = vpack.c.b16 %v3480, %v3479
        %v3488 = vpack.c.b16 %v3482, %v3481
        %v3489 = vpack.c.b16 %v3484, %v3483
        %v3490 = vpack.c.b16 %v3486, %v3485
        %3495 = vmatprep.subr.bf16.mxu0 0
        %3496 = vmatpush1.bf16.msra.mxu0 %v3414
        %3497 = vmatprep.subr.bf16.mxu0 0
        %3498 = vmatpush1.bf16.msra.mxu0 %v3415
        %3499 = vmatprep.subr.bf16.mxu0 0
        %3500 = vmatpush1.bf16.msra.mxu0 %v3416
        %3501 = vmatprep.subr.bf16.mxu0 0
        %3502 = vmatpush1.bf16.msra.mxu0 %v3417
        %3503 = vmatprep.subr.bf16.mxu0 0
        %3504 = vmatpush1.bf16.msra.mxu0 %v3418
        %3505 = vmatprep.subr.bf16.mxu0 0
        %3506 = vmatpush1.bf16.msra.mxu0 %v3419
        %3507 = vmatprep.subr.bf16.mxu0 0
        %3508 = vmatpush1.bf16.msra.mxu0 %v3420
        %3509 = vmatprep.subr.bf16.mxu0 0
        %3510 = vmatpush1.bf16.msra.mxu0 %v3421
        %3511 = vmatprep.subr.bf16.mxu0 0
        %3512 = vmatpush1.bf16.msra.mxu0 0
        %3513 = vmatprep.subr.bf16.mxu0 0
        %3514 = vmatpush1.bf16.msra.mxu0 0
        %3515 = vmatprep.subr.bf16.mxu0 0
        %3516 = vmatpush1.bf16.msra.mxu0 0
        %3517 = vmatprep.subr.bf16.mxu0 0
        %3518 = vmatpush1.bf16.msra.mxu0 0
        %3519 = vmatprep.subr.bf16.mxu0 0
        %3520 = vmatpush1.bf16.msra.mxu0 0
        %3521 = vmatprep.subr.bf16.mxu0 0
        %3522 = vmatpush1.bf16.msra.mxu0 0
        %3523 = vmatprep.subr.bf16.mxu0 0
        %3524 = vmatpush1.bf16.msra.mxu0 0
        %3525 = vmatprep.subr.bf16.mxu0 0
        %3526 = vmatpush1.bf16.msra.mxu0 0
        %3527 = vmatprep.mubr.bf16.mxu0 0
        %3528 = vmatmul.mubr.bf16.gmra.mrb[0].mxu0 %v3487
        %v3529 = vpop.f32.mrb[0].mxu0
        %v3530 = vadd.f32 %v3434, %v3529
        %v3531 = vpop.f32.mrb[0].mxu0
        %v3532 = vpop.f32.mrb[0].mxu0
        %v3533 = vadd.f32 %v3439, %v3532
        %v3534 = vpop.f32.mrb[0].mxu0
        %3535 = vmatprep.mubr.bf16.mxu0 0
        %3536 = vmatmul.mubr.bf16.gmra.mrb[0].mxu0 %v3488
        %v3537 = vpop.f32.mrb[0].mxu0
        %v3538 = vadd.f32 %v3444, %v3537
        %v3539 = vpop.f32.mrb[0].mxu0
        %v3540 = vpop.f32.mrb[0].mxu0
        %v3541 = vadd.f32 %v3449, %v3540
        %v3542 = vpop.f32.mrb[0].mxu0
        %3543 = vmatprep.mubr.bf16.mxu0 0
        %3544 = vmatmul.mubr.bf16.gmra.mrb[0].mxu0 %v3489
        %v3545 = vpop.f32.mrb[0].mxu0
        %v3546 = vadd.f32 %v3454, %v3545
        %v3547 = vpop.f32.mrb[0].mxu0
        %v3548 = vpop.f32.mrb[0].mxu0
        %v3549 = vadd.f32 %v3459, %v3548
        %v3550 = vpop.f32.mrb[0].mxu0
        %3551 = vmatprep.mubr.bf16.mxu0 0
        %3552 = vmatmul.mubr.bf16.gmra.mrb[0].mxu0 %v3490
        %v3553 = vpop.f32.mrb[0].mxu0
        %v3554 = vadd.f32 %v3464, %v3553
        %v3555 = vpop.f32.mrb[0].mxu0
        %v3556 = vpop.f32.mrb[0].mxu0
        %v3557 = vadd.f32 %v3469, %v3556
        %v3558 = vpop.f32.mrb[0].mxu0
        %3559 = vdwg.mxu0
        %vm3560 = vcmp.gt.f32.partialorder %v3530, 0.0
        %vm3561 = vcmp.gt.f32.partialorder %v3533, 0.0
        %vm3562 = vcmp.gt.f32.partialorder %v3538, 0.0
        %vm3563 = vcmp.gt.f32.partialorder %v3541, 0.0
        %vm3564 = vcmp.gt.f32.partialorder %v3546, 0.0
        %vm3565 = vcmp.gt.f32.partialorder %v3549, 0.0
        %vm3566 = vcmp.gt.f32.partialorder %v3554, 0.0
        %vm3567 = vcmp.gt.f32.partialorder %v3557, 0.0
        %v3568 = vstv %s3377
        %v3569 = vmul.f32 %v3568, %v3530
        %v3570 = vmul.f32 %v3568, %v3533
        %v3571 = vmul.f32 %v3568, %v3538
        %v3572 = vmul.f32 %v3568, %v3541
        %v3573 = vmul.f32 %v3568, %v3546
        %v3574 = vmul.f32 %v3568, %v3549
        %v3575 = vmul.f32 %v3568, %v3554
        %v3576 = vmul.f32 %v3568, %v3557
        %v3577 = vsel %vm3560, %v3530, %v3569
        %v3578 = vsel %vm3561, %v3533, %v3570
        %v3579 = vsel %vm3562, %v3538, %v3571
        %v3580 = vsel %vm3563, %v3541, %v3572
        %v3581 = vsel %vm3564, %v3546, %v3573
        %v3582 = vsel %vm3565, %v3549, %v3574
        %v3583 = vsel %vm3566, %v3554, %v3575
        %v3584 = vsel %vm3567, %v3557, %v3576
        %s3585 = scalar_lea.vmem %s7, 352
        %v3586 = vld [vmem:[%s3585] sm:$0xf]
        %v3587 = vld [vmem:[%s3585 + $0x4] sm:$0xf]
        %v3588 = vld [vmem:[%s3585 + $0x8] sm:$0xf]
        %v3589 = vld [vmem:[%s3585 + $0xc] sm:$0xf]
        %v3590 = vld [vmem:[%s3585 + $0x10] sm:$0xf]
        %v3591 = vld [vmem:[%s3585 + $0x14] sm:$0xf]
        %v3592 = vld [vmem:[%s3585 + $0x18] sm:$0xf]
        %v3593 = vld [vmem:[%s3585 + $0x1c] sm:$0xf]
        %3594 = vrot.lane.b32.xlu0 %v3577, 32
        %v3595 = vpop.permute.xlu0 %3594
        %3596 = vrot.lane.b32.xlu0 %v3578, 32
        %v3597 = vpop.permute.xlu0 %3596
        %3598 = vrot.lane.b32.xlu0 %v3579, 32
        %v3599 = vpop.permute.xlu0 %3598
        %3600 = vrot.lane.b32.xlu0 %v3580, 32
        %v3601 = vpop.permute.xlu0 %3600
        %3602 = vrot.lane.b32.xlu0 %v3581, 32
        %v3603 = vpop.permute.xlu0 %3602
        %3604 = vrot.lane.b32.xlu0 %v3582, 32
        %v3605 = vpop.permute.xlu0 %3604
        %3606 = vrot.lane.b32.xlu0 %v3583, 32
        %v3607 = vpop.permute.xlu0 %3606
        %3608 = vrot.lane.b32.xlu0 %v3584, 32
        %v3609 = vpop.permute.xlu0 %3608
        %v3610 = vsel %vm3405, %v3595, 0.0
        %v3611 = vsel %vm3405, %v3597, 0.0
        %v3612 = vsel %vm3405, %v3599, 0.0
        %v3613 = vsel %vm3405, %v3601, 0.0
        %v3614 = vsel %vm3405, %v3603, 0.0
        %v3615 = vsel %vm3405, %v3605, 0.0
        %v3616 = vsel %vm3405, %v3607, 0.0
        %v3617 = vsel %vm3405, %v3609, 0.0
        %v3618 = vpack.c.bf16 %v3611, %v3610
        %v3619 = vpack.c.bf16 %v3613, %v3612
        %v3620 = vpack.c.bf16 %v3615, %v3614
        %v3621 = vpack.c.bf16 %v3617, %v3616
        %v3622 = vpack.c.bf16 %v3578, %v3577
        %v3623 = vpack.c.bf16 %v3580, %v3579
        %v3624 = vpack.c.bf16 %v3582, %v3581
        %v3625 = vpack.c.bf16 %v3584, %v3583
        %s3626 = scalar_lea.vmem %s8, 704
        %v3627 = vld [vmem:[%s3626] sm:$0xff]
        %v3628 = vld [vmem:[%s3626 + $0x8] sm:$0xff]
        %v3629 = vld [vmem:[%s3626 + $0x10] sm:$0xff]
        %v3630 = vld [vmem:[%s3626 + $0x18] sm:$0xff]
        %v3631 = vld [vmem:[%s3626 + $0x20] sm:$0xff]
        %v3632 = vld [vmem:[%s3626 + $0x28] sm:$0xff]
        %v3633 = vld [vmem:[%s3626 + $0x30] sm:$0xff]
        %v3634 = vld [vmem:[%s3626 + $0x38] sm:$0xff]
        %3636 = vset.pattern.permute.xlu0 0
        %3637 = vperm.xlu0 %3636, %v3627
        %v3638 = vpop.permute.xlu0 %3637
        %3641 = vset.pattern.permute.xlu0 0
        %3642 = vperm.xlu0 %3641, %v3628
        %v3643 = vpop.permute.xlu0 %3642
        %3646 = vset.pattern.permute.xlu0 0
        %3647 = vperm.xlu0 %3646, %v3629
        %v3648 = vpop.permute.xlu0 %3647
        %3651 = vset.pattern.permute.xlu0 0
        %3652 = vperm.xlu0 %3651, %v3630
        %v3653 = vpop.permute.xlu0 %3652
        %3656 = vset.pattern.permute.xlu0 0
        %3657 = vperm.xlu0 %3656, %v3631
        %v3658 = vpop.permute.xlu0 %3657
        %3661 = vset.pattern.permute.xlu0 0
        %3662 = vperm.xlu0 %3661, %v3632
        %v3663 = vpop.permute.xlu0 %3662
        %3666 = vset.pattern.permute.xlu0 0
        %3667 = vperm.xlu0 %3666, %v3633
        %v3668 = vpop.permute.xlu0 %3667
        %3671 = vset.pattern.permute.xlu0 0
        %3672 = vperm.xlu0 %3671, %v3634
        %v3673 = vpop.permute.xlu0 %3672
        %v3683 = vunpack.c.l.b16 %v3586
        %v3684 = vunpack.c.l.b16 %v3587
        %v3685 = vunpack.c.l.b16 %v3588
        %v3686 = vunpack.c.l.b16 %v3589
        %v3687 = vunpack.c.l.b16 %v3590
        %v3688 = vunpack.c.l.b16 %v3591
        %v3689 = vunpack.c.l.b16 %v3592
        %v3690 = vunpack.c.l.b16 %v3593
        %v3691 = vpack.c.b16 %v3684, %v3683
        %v3692 = vpack.c.b16 %v3686, %v3685
        %v3693 = vpack.c.b16 %v3688, %v3687
        %v3694 = vpack.c.b16 %v3690, %v3689
        %3699 = vmatprep.subr.bf16.mxu0 0
        %3700 = vmatpush1.bf16.msra.mxu0 %v3618
        %3701 = vmatprep.subr.bf16.mxu0 0
        %3702 = vmatpush1.bf16.msra.mxu0 %v3619
        %3703 = vmatprep.subr.bf16.mxu0 0
        %3704 = vmatpush1.bf16.msra.mxu0 %v3620
        %3705 = vmatprep.subr.bf16.mxu0 0
        %3706 = vmatpush1.bf16.msra.mxu0 %v3621
        %3707 = vmatprep.subr.bf16.mxu0 0
        %3708 = vmatpush1.bf16.msra.mxu0 %v3622
        %3709 = vmatprep.subr.bf16.mxu0 0
        %3710 = vmatpush1.bf16.msra.mxu0 %v3623
        %3711 = vmatprep.subr.bf16.mxu0 0
        %3712 = vmatpush1.bf16.msra.mxu0 %v3624
        %3713 = vmatprep.subr.bf16.mxu0 0
        %3714 = vmatpush1.bf16.msra.mxu0 %v3625
        %3715 = vmatprep.subr.bf16.mxu0 0
        %3716 = vmatpush1.bf16.msra.mxu0 0
        %3717 = vmatprep.subr.bf16.mxu0 0
        %3718 = vmatpush1.bf16.msra.mxu0 0
        %3719 = vmatprep.subr.bf16.mxu0 0
        %3720 = vmatpush1.bf16.msra.mxu0 0
        %3721 = vmatprep.subr.bf16.mxu0 0
        %3722 = vmatpush1.bf16.msra.mxu0 0
        %3723 = vmatprep.subr.bf16.mxu0 0
        %3724 = vmatpush1.bf16.msra.mxu0 0
        %3725 = vmatprep.subr.bf16.mxu0 0
        %3726 = vmatpush1.bf16.msra.mxu0 0
        %3727 = vmatprep.subr.bf16.mxu0 0
        %3728 = vmatpush1.bf16.msra.mxu0 0
        %3729 = vmatprep.subr.bf16.mxu0 0
        %3730 = vmatpush1.bf16.msra.mxu0 0
        %3731 = vmatprep.mubr.bf16.mxu0 0
        %3732 = vmatmul.mubr.bf16.gmra.mrb[0].mxu0 %v3691
        %v3733 = vpop.f32.mrb[0].mxu0
        %v3734 = vadd.f32 %v3638, %v3733
        %v3735 = vpop.f32.mrb[0].mxu0
        %v3736 = vpop.f32.mrb[0].mxu0
        %v3737 = vadd.f32 %v3643, %v3736
        %v3738 = vpop.f32.mrb[0].mxu0
        %3739 = vmatprep.mubr.bf16.mxu0 0
        %3740 = vmatmul.mubr.bf16.gmra.mrb[0].mxu0 %v3692
        %v3741 = vpop.f32.mrb[0].mxu0
        %v3742 = vadd.f32 %v3648, %v3741
        %v3743 = vpop.f32.mrb[0].mxu0
        %v3744 = vpop.f32.mrb[0].mxu0
        %v3745 = vadd.f32 %v3653, %v3744
        %v3746 = vpop.f32.mrb[0].mxu0
        %3747 = vmatprep.mubr.bf16.mxu0 0
        %3748 = vmatmul.mubr.bf16.gmra.mrb[0].mxu0 %v3693
        %v3749 = vpop.f32.mrb[0].mxu0
        %v3750 = vadd.f32 %v3658, %v3749
        %v3751 = vpop.f32.mrb[0].mxu0
        %v3752 = vpop.f32.mrb[0].mxu0
        %v3753 = vadd.f32 %v3663, %v3752
        %v3754 = vpop.f32.mrb[0].mxu0
        %3755 = vmatprep.mubr.bf16.mxu0 0
        %3756 = vmatmul.mubr.bf16.gmra.mrb[0].mxu0 %v3694
        %v3757 = vpop.f32.mrb[0].mxu0
        %v3758 = vadd.f32 %v3668, %v3757
        %v3759 = vpop.f32.mrb[0].mxu0
        %v3760 = vpop.f32.mrb[0].mxu0
        %v3761 = vadd.f32 %v3673, %v3760
        %v3762 = vpop.f32.mrb[0].mxu0
        %3763 = vdwg.mxu0
        %vm3764 = vcmp.gt.f32.partialorder %v3734, 0.0
        %vm3765 = vcmp.gt.f32.partialorder %v3737, 0.0
        %vm3766 = vcmp.gt.f32.partialorder %v3742, 0.0
        %vm3767 = vcmp.gt.f32.partialorder %v3745, 0.0
        %vm3768 = vcmp.gt.f32.partialorder %v3750, 0.0
        %vm3769 = vcmp.gt.f32.partialorder %v3753, 0.0
        %vm3770 = vcmp.gt.f32.partialorder %v3758, 0.0
        %vm3771 = vcmp.gt.f32.partialorder %v3761, 0.0
        %v3772 = vstv %s3378
        %v3773 = vmul.f32 %v3772, %v3734
        %v3774 = vmul.f32 %v3772, %v3737
        %v3775 = vmul.f32 %v3772, %v3742
        %v3776 = vmul.f32 %v3772, %v3745
        %v3777 = vmul.f32 %v3772, %v3750
        %v3778 = vmul.f32 %v3772, %v3753
        %v3779 = vmul.f32 %v3772, %v3758
        %v3780 = vmul.f32 %v3772, %v3761
        %v3781 = vsel %vm3764, %v3734, %v3773
        %v3782 = vsel %vm3765, %v3737, %v3774
        %v3783 = vsel %vm3766, %v3742, %v3775
        %v3784 = vsel %vm3767, %v3745, %v3776
        %v3785 = vsel %vm3768, %v3750, %v3777
        %v3786 = vsel %vm3769, %v3753, %v3778
        %v3787 = vsel %vm3770, %v3758, %v3779
        %v3788 = vsel %vm3771, %v3761, %v3780
        %v3789 = vadd.f32 %v3781, %v3369
        %v3790 = vadd.f32 %v3782, %v3370
        %v3791 = vadd.f32 %v3783, %v3371
        %v3792 = vadd.f32 %v3784, %v3372
        %v3793 = vadd.f32 %v3785, %v3373
        %v3794 = vadd.f32 %v3786, %v3374
        %v3795 = vadd.f32 %v3787, %v3375
        %v3796 = vadd.f32 %v3788, %v3376
        %vm3797 = vcmp.gt.f32.partialorder %v3789, 0.0
        %vm3798 = vcmp.gt.f32.partialorder %v3790, 0.0
        %vm3799 = vcmp.gt.f32.partialorder %v3791, 0.0
        %vm3800 = vcmp.gt.f32.partialorder %v3792, 0.0
        %vm3801 = vcmp.gt.f32.partialorder %v3793, 0.0
        %vm3802 = vcmp.gt.f32.partialorder %v3794, 0.0
        %vm3803 = vcmp.gt.f32.partialorder %v3795, 0.0
        %vm3804 = vcmp.gt.f32.partialorder %v3796, 0.0
        %v3805 = vstv %s3379
        %v3806 = vmul.f32 %v3805, %v3789
        %v3807 = vmul.f32 %v3805, %v3790
        %v3808 = vmul.f32 %v3805, %v3791
        %v3809 = vmul.f32 %v3805, %v3792
        %v3810 = vmul.f32 %v3805, %v3793
        %v3811 = vmul.f32 %v3805, %v3794
        %v3812 = vmul.f32 %v3805, %v3795
        %v3813 = vmul.f32 %v3805, %v3796
        %v3814 = vsel %vm3797, %v3789, %v3806
        %v3815 = vsel %vm3798, %v3790, %v3807
        %v3816 = vsel %vm3799, %v3791, %v3808
        %v3817 = vsel %vm3800, %v3792, %v3809
        %v3818 = vsel %vm3801, %v3793, %v3810
        %v3819 = vsel %vm3802, %v3794, %v3811
        %v3820 = vsel %vm3803, %v3795, %v3812
        %v3821 = vsel %vm3804, %v3796, %v3813
        %v3822 = vld [vmem:[%s9] sm:$0xf]
        %v3823 = vpack.c.bf16 %v3815, %v3814
        %v3824 = vpack.c.bf16 %v3817, %v3816
        %v3825 = vpack.c.bf16 %v3819, %v3818
        %v3826 = vpack.c.bf16 %v3821, %v3820
        %v3827 = vld [vmem:[%s10] sm:$0xff]
        %3829 = vset.pattern.permute.xlu0 0
        %3830 = vperm.xlu0 %3829, %v3827
        %v3831 = vpop.permute.xlu0 %3830
        %v3834 = vsel %vm829, %v3822, 0
        %3836 = vmatprep.subr.bf16.mxu0 0
        %3837 = vmatpush1.bf16.msra.mxu0 %v3823
        %3838 = vmatprep.subr.bf16.mxu0 0
        %3839 = vmatpush1.bf16.msra.mxu0 %v3824
        %3840 = vmatprep.subr.bf16.mxu0 0
        %3841 = vmatpush1.bf16.msra.mxu0 %v3825
        %3842 = vmatprep.subr.bf16.mxu0 0
        %3843 = vmatpush1.bf16.msra.mxu0 %v3826
        %3844 = vmatprep.subr.bf16.mxu0 0
        %3845 = vmatpush1.bf16.msra.mxu0 0
        %3846 = vmatprep.subr.bf16.mxu0 0
        %3847 = vmatpush1.bf16.msra.mxu0 0
        %3848 = vmatprep.subr.bf16.mxu0 0
        %3849 = vmatpush1.bf16.msra.mxu0 0
        %3850 = vmatprep.subr.bf16.mxu0 0
        %3851 = vmatpush1.bf16.msra.mxu0 0
        %3852 = vmatprep.subr.bf16.mxu0 0
        %3853 = vmatpush1.bf16.msra.mxu0 0
        %3854 = vmatprep.subr.bf16.mxu0 0
        %3855 = vmatpush1.bf16.msra.mxu0 0
        %3856 = vmatprep.subr.bf16.mxu0 0
        %3857 = vmatpush1.bf16.msra.mxu0 0
        %3858 = vmatprep.subr.bf16.mxu0 0
        %3859 = vmatpush1.bf16.msra.mxu0 0
        %3860 = vmatprep.subr.bf16.mxu0 0
        %3861 = vmatpush1.bf16.msra.mxu0 0
        %3862 = vmatprep.subr.bf16.mxu0 0
        %3863 = vmatpush1.bf16.msra.mxu0 0
        %3864 = vmatprep.subr.bf16.mxu0 0
        %3865 = vmatpush1.bf16.msra.mxu0 0
        %3866 = vmatprep.subr.bf16.mxu0 0
        %3867 = vmatpush1.bf16.msra.mxu0 0
        %3868 = vmatprep.mubr.bf16.mxu0 0
        %3869 = vmatmul.mubr.bf16.gmra.mrb[0].mxu0 %v3834
        %v3870 = vpop.f32.mrb[0].mxu0
        %v3871 = vadd.f32 %v3831, %v3870
        %v3872 = vpop.f32.mrb[0].mxu0
        %v3873 = vpop.f32.mrb[0].mxu0
        %v3874 = vpop.f32.mrb[0].mxu0
        %3875 = vdwg.mxu0
        %v3876 = vld [vmem:[%s11] sm:$0xff]
        %v3877 = vld [vmem:[%s11 + $0x8] sm:$0xff]
        %v3878 = vld [vmem:[%s11 + $0x10] sm:$0xff]
        %v3879 = vld [vmem:[%s11 + $0x18] sm:$0xff]
        %v3880 = vld [vmem:[%s12] sm:$0xff]
        %v3881 = vld [vmem:[%s12 + $0x8] sm:$0xff]
        %v3882 = vld [vmem:[%s12 + $0x10] sm:$0xff]
        %v3883 = vld [vmem:[%s12 + $0x18] sm:$0xff]
        %3885 = vset.pattern.permute.xlu0 0
        %3886 = vperm.xlu0 %3885, %v3880
        %v3887 = vpop.permute.xlu0 %3886
        %3890 = vset.pattern.permute.xlu0 0
        %3891 = vperm.xlu0 %3890, %v3881
        %v3892 = vpop.permute.xlu0 %3891
        %3895 = vset.pattern.permute.xlu0 0
        %3896 = vperm.xlu0 %3895, %v3882
        %v3897 = vpop.permute.xlu0 %3896
        %3900 = vset.pattern.permute.xlu0 0
        %3901 = vperm.xlu0 %3900, %v3883
        %v3902 = vpop.permute.xlu0 %3901
        %v3905 = vsel %vm589, %v3876, 0
        %v3908 = vsel %vm589, %v3877, 0
        %v3911 = vsel %vm589, %v3878, 0
        %v3914 = vsel %vm589, %v3879, 0
        %3916 = vmatprep.subr.mxu0 0.0
        %3917 = vmatpush1.msra.mxu0 %v616
        %3918 = vmatprep.subr.mxu0 0.0
        %3919 = vmatpush1.msra.mxu0 0.0
        %3920 = vmatprep.subr.mxu0 0.0
        %3921 = vmatpush1.msra.mxu0 0.0
        %3922 = vmatprep.subr.mxu0 0.0
        %3923 = vmatpush1.msra.mxu0 0.0
        %3924 = vmatprep.subr.mxu0 0.0
        %3925 = vmatpush1.msra.mxu0 0.0
        %3926 = vmatprep.subr.mxu0 0.0
        %3927 = vmatpush1.msra.mxu0 0.0
        %3928 = vmatprep.subr.mxu0 0.0
        %3929 = vmatpush1.msra.mxu0 0.0
        %3930 = vmatprep.subr.mxu0 0.0
        %3931 = vmatpush1.msra.mxu0 0.0
        %3932 = vmatprep.subr.mxu0 0.0
        %3933 = vmatpush1.msra.mxu0 0.0
        %3934 = vmatprep.subr.mxu0 0.0
        %3935 = vmatpush1.msra.mxu0 0.0
        %3936 = vmatprep.subr.mxu0 0.0
        %3937 = vmatpush1.msra.mxu0 0.0
        %3938 = vmatprep.subr.mxu0 0.0
        %3939 = vmatpush1.msra.mxu0 0.0
        %3940 = vmatprep.subr.mxu0 0.0
        %3941 = vmatpush1.msra.mxu0 0.0
        %3942 = vmatprep.subr.mxu0 0.0
        %3943 = vmatpush1.msra.mxu0 0.0
        %3944 = vmatprep.subr.mxu0 0.0
        %3945 = vmatpush1.msra.mxu0 0.0
        %3946 = vmatprep.subr.mxu0 0.0
        %3947 = vmatpush1.msra.mxu0 0.0
        %3948 = vmatprep.subr.mxu0 0.0
        %3949 = vmatpush1.msra.mxu0 0.0
        %3950 = vmatprep.subr.mxu0 0.0
        %3951 = vmatpush1.msra.mxu0 0.0
        %3952 = vmatprep.subr.mxu0 0.0
        %3953 = vmatpush1.msra.mxu0 0.0
        %3954 = vmatprep.subr.mxu0 0.0
        %3955 = vmatpush1.msra.mxu0 0.0
        %3956 = vmatprep.subr.mxu0 0.0
        %3957 = vmatpush1.msra.mxu0 0.0
        %3958 = vmatprep.subr.mxu0 0.0
        %3959 = vmatpush1.msra.mxu0 0.0
        %3960 = vmatprep.subr.mxu0 0.0
        %3961 = vmatpush1.msra.mxu0 0.0
        %3962 = vmatprep.subr.mxu0 0.0
        %3963 = vmatpush1.msra.mxu0 0.0
        %3964 = vmatprep.subr.mxu0 0.0
        %3965 = vmatpush1.msra.mxu0 0.0
        %3966 = vmatprep.subr.mxu0 0.0
        %3967 = vmatpush1.msra.mxu0 0.0
        %3968 = vmatprep.subr.mxu0 0.0
        %3969 = vmatpush1.msra.mxu0 0.0
        %3970 = vmatprep.subr.mxu0 0.0
        %3971 = vmatpush1.msra.mxu0 0.0
        %3972 = vmatprep.subr.mxu0 0.0
        %3973 = vmatpush1.msra.mxu0 0.0
        %3974 = vmatprep.subr.mxu0 0.0
        %3975 = vmatpush1.msra.mxu0 0.0
        %3976 = vmatprep.subr.mxu0 0.0
        %3977 = vmatpush1.msra.mxu0 0.0
        %3978 = vmatprep.subr.mxu0 0.0
        %3979 = vmatpush1.msra.mxu0 0.0
        %3980 = vmatprep.mubr.f32.mxu0 0.0
        %3981 = vmatmul.mubr.f32.gmra.mrb[0].mxu0 %v3905
        %v3982 = vpop.f32.mrb[0].mxu0
        %v3983 = vadd.f32 %v3887, %v3982
        %v3984 = vpop.f32.mrb[0].mxu0
        %3985 = vmatprep.mubr.f32.mxu0 0.0
        %3986 = vmatmul.mubr.f32.gmra.mrb[0].mxu0 %v3908
        %v3987 = vpop.f32.mrb[0].mxu0
        %v3988 = vadd.f32 %v3892, %v3987
        %v3989 = vpop.f32.mrb[0].mxu0
        %3990 = vmatprep.mubr.f32.mxu0 0.0
        %3991 = vmatmul.mubr.f32.gmra.mrb[0].mxu0 %v3911
        %v3992 = vpop.f32.mrb[0].mxu0
        %v3993 = vadd.f32 %v3897, %v3992
        %v3994 = vpop.f32.mrb[0].mxu0
        %3995 = vmatprep.mubr.f32.mxu0 0.0
        %3996 = vmatmul.mubr.f32.gmra.mrb[0].mxu0 %v3914
        %v3997 = vpop.f32.mrb[0].mxu0
        %v3998 = vadd.f32 %v3902, %v3997
        %v3999 = vpop.f32.mrb[0].mxu0
        %4000 = vdwg.mxu0
        %v4001 = vmax.f32 %v3983, 0.0
        %v4002 = vmax.f32 %v3988, 0.0
        %v4003 = vmax.f32 %v3993, 0.0
        %v4004 = vmax.f32 %v3998, 0.0
        %v4005 = vld [vmem:[%s13] sm:$0xf]
        %v4006 = vpack.c.bf16 %v4002, %v4001
        %v4007 = vpack.c.bf16 %v4004, %v4003
        %v4008 = vld [vmem:[%s14] sm:$0xff]
        %4010 = vset.pattern.permute.xlu0 0
        %4011 = vperm.xlu0 %4010, %v4008
        %v4012 = vpop.permute.xlu0 %4011
        %vm4014 = vcmask 261120
        %v4016 = vsel %vm4014, %v4005, 0
        %4018 = vmatprep.subr.bf16.mxu0 0
        %4019 = vmatpush1.bf16.msra.mxu0 %v4006
        %4020 = vmatprep.subr.bf16.mxu0 0
        %4021 = vmatpush1.bf16.msra.mxu0 %v4007
        %4022 = vmatprep.subr.bf16.mxu0 0
        %4023 = vmatpush1.bf16.msra.mxu0 0
        %4024 = vmatprep.subr.bf16.mxu0 0
        %4025 = vmatpush1.bf16.msra.mxu0 0
        %4026 = vmatprep.subr.bf16.mxu0 0
        %4027 = vmatpush1.bf16.msra.mxu0 0
        %4028 = vmatprep.subr.bf16.mxu0 0
        %4029 = vmatpush1.bf16.msra.mxu0 0
        %4030 = vmatprep.subr.bf16.mxu0 0
        %4031 = vmatpush1.bf16.msra.mxu0 0
        %4032 = vmatprep.subr.bf16.mxu0 0
        %4033 = vmatpush1.bf16.msra.mxu0 0
        %4034 = vmatprep.subr.bf16.mxu0 0
        %4035 = vmatpush1.bf16.msra.mxu0 0
        %4036 = vmatprep.subr.bf16.mxu0 0
        %4037 = vmatpush1.bf16.msra.mxu0 0
        %4038 = vmatprep.subr.bf16.mxu0 0
        %4039 = vmatpush1.bf16.msra.mxu0 0
        %4040 = vmatprep.subr.bf16.mxu0 0
        %4041 = vmatpush1.bf16.msra.mxu0 0
        %4042 = vmatprep.subr.bf16.mxu0 0
        %4043 = vmatpush1.bf16.msra.mxu0 0
        %4044 = vmatprep.subr.bf16.mxu0 0
        %4045 = vmatpush1.bf16.msra.mxu0 0
        %4046 = vmatprep.subr.bf16.mxu0 0
        %4047 = vmatpush1.bf16.msra.mxu0 0
        %4048 = vmatprep.subr.bf16.mxu0 0
        %4049 = vmatpush1.bf16.msra.mxu0 0
        %4050 = vmatprep.mubr.bf16.mxu0 0
        %4051 = vmatmul.mubr.bf16.gmra.mrb[0].mxu0 %v4016
        %v4052 = vpop.f32.mrb[0].mxu0
        %v4053 = vadd.f32 %v4012, %v4052
        %v4054 = vpop.f32.mrb[0].mxu0
        %v4055 = vpop.f32.mrb[0].mxu0
        %v4056 = vpop.f32.mrb[0].mxu0
        %4057 = vdwg.mxu0
        %v4058 = vadd.f32 %v3871, %v4053
        %4059 = vst [vmem:[%s530] sm:$0xff] %v4058
        %p4060 = scmp.lt.s32.totalorder %s28, 1
        %s4061 = scalar_select %p4060, %s28, 1
        %s4062 = smul.addr %s4061, 8
        %s4063 = scalar_lea.vmem %s16, %s4062
        // Predicated region
        $region89: #{csvnn_generator_forward.1} parent=83 // pred_check
          %p4064 = pneg %p387
        $region90: #{csvnn_generator_forward.1} parent=83 // pred_check_branch
          %4066 = sbr.rel (%p4064) target = $region92
        $region91: #{csvnn_generator_forward.1} parent=83 // pred_region
          _
        $region92: #{csvnn_generator_forward.1} parent=83 // pred_fallthru
          _
      $region84: #{csvnn_generator_forward.1} parent=5 // pred_fallthru
        _
      %p4067 = scmp.le.s32.totalorder 2, %s23
      // Predicated region
      $region93: #{csvnn_generator_forward.1} parent=5 // pred_check
        %p4068 = pneg %p4067
      $region94: #{csvnn_generator_forward.1} parent=5 // pred_check_branch
        %4070 = sbr.rel (%p4068) target = $region96
      $region95: #{csvnn_generator_forward.1} parent=5 // pred_region
        %s4071 = ssub.s32 %s23, 2
        // Predicated region
        $region97: #{csvnn_generator_forward.1} parent=95 // pred_check
          %p4072 = pneg %p393
        $region98: #{csvnn_generator_forward.1} parent=95 // pred_check_branch
          %4074 = sbr.rel (%p4072) target = $region100
        $region99: #{csvnn_generator_forward.1} parent=95 // pred_region
          %p4075 = scmp.lt.s32.totalorder %s29, 1
          %s4076 = scalar_select %p4075, %s29, 1
          %s4077 = smul.addr %s4076, 8
          %s4078 = scalar_lea.vmem %s16, %s4077
        $region100: #{csvnn_generator_forward.1} parent=95 // pred_fallthru
          _
      $region96: #{csvnn_generator_forward.1} parent=5 // pred_fallthru
        _
    $region6: #{csvnn_generator_forward.1} parent=1 // loop_footer
      %s27 = sadd.s32 1, %s23
    $region7: #{csvnn_generator_forward.1} parent=1 // loop_footer_branch
      %22 = sbr.rel target = $region3
    $region8: #{csvnn_generator_forward.1} parent=1 // loop_exit
      _
    %4079 = vsyncpa [#allocation3], 1
    %s4080 = scalar_lea.sflag [#allocation3], 1
    %4081 = vsyncpa %s4080, 1

</llo_original>
